<compile_context>
chip_gen: v7x
topology: tpu7x:2x2x1
jax: 0.10.0
libtpu: 0.0.40
codegen_flags: <defaults>
</compile_context>

<pallas_src>
import jax
import jax.numpy as jnp
import numpy as np
from jax.experimental import pallas as pl
from jax.experimental.pallas import tpu as pltpu

_LANE = 128


def _round_up(n, m):
    return -(-n // m) * m


# -----------------------------------------------------------------------------
# Pallas kernel: whole recurrent forward (encoder loop, fc's, decoder loop)
# -----------------------------------------------------------------------------
def _lstm_ae_kernel(x_ref,        # [T*B, D]      time-major input, flattened
                    wih_e_ref,    # [D, 4*Pe]     encoder W_ih^T, gates (i,f,o,g), lane-padded
                    whh_e_ref,    # [Pe, 4*Pe]    encoder W_hh^T, zero rows past H
                    b_e_ref,      # [1, 4*Pe]     encoder bias_ih + bias_hh, packed
                    wfc_e_ref,    # [Pe, E]       enc_fc W^T, zero rows past H
                    bfc_e_ref,    # [1, E]
                    wfc_d_ref,    # [E, H]        dec_fc W^T
                    bfc_d_ref,    # [1, H]
                    wih_dh_ref,   # [H, 4*Pd]     decoder W_ih^T (dec_first_hidden columns)
                    w_dec_ref,    # [2*Pd, 4*Pd]  fused [W_ih(feedback); W_hh], zero-padded rows
                    b_d_ref,      # [1, 4*Pd]     decoder bias_ih + bias_hh, packed
                    out_ref,      # [T, B, Pd]    reconstruction (time-major, lane-padded)
                    embd_ref):    # [B, E]        embedding
    T, B, Pd = out_ref.shape
    Pe = whh_e_ref.shape[0]
    f32 = jnp.float32

    def lstm_step(pre, c, P):
        # gate columns packed as [i | f | o | g], each P (=128k) lanes wide:
        # one sigmoid over 3P lanes + one tanh over P lanes, all slices lane-aligned.
        sig = jax.nn.sigmoid(pre[:, :3 * P])
        i_g = sig[:, 0 * P:1 * P]
        f_g = sig[:, 1 * P:2 * P]
        o_g = sig[:, 2 * P:3 * P]
        g_g = jnp.tanh(pre[:, 3 * P:4 * P])
        c_new = f_g * c + i_g * g_g
        h_new = o_g * jnp.tanh(c_new)
        return h_new, c_new

    # ---------------- encoder ----------------
    # Hoisted input projection: one big matmul fills MXU rows with M = T*B and leaves a
    # single MXU op (h @ W_hh) on the serial per-step critical path.
    pre_x = (jnp.dot(x_ref[...], wih_e_ref[...], preferred_element_type=f32)
             + b_e_ref[...])                                          # [T*B, 4*Pe]
    whh_e = whh_e_ref[...]
    h = jnp.zeros((B, Pe), f32)
    c = jnp.zeros((B, Pe), f32)
    for t in range(T):                                                # fully unrolled (static T)
        pre = pre_x[t * B:(t + 1) * B, :] + jnp.dot(
            h, whh_e, preferred_element_type=f32)
        h, c = lstm_step(pre, c, Pe)

    # module's (h, c) naming swap: enc_fc consumes the final *cell* state
    embd = jnp.maximum(
        jnp.dot(c, wfc_e_ref[...], preferred_element_type=f32) + bfc_e_ref[...], 0.0)
    embd_ref[...] = embd

    # ---------------- decoder ----------------
    dec_fh = jnp.maximum(
        jnp.dot(embd, wfc_d_ref[...], preferred_element_type=f32) + bfc_d_ref[...], 0.0)
    # dec_first_hidden is constant across decoder steps -> its matmul + bias hoisted.
    gbase = jnp.dot(dec_fh, wih_dh_ref[...], preferred_element_type=f32) + b_d_ref[...]

    w_dec = w_dec_ref[...]
    fb = jnp.zeros((B, Pd), f32)   # feedback half of dec_input (= previous cell state)
    hd = jnp.zeros((B, Pd), f32)   # LSTMCell hidden  ("o_t_dec" in the module)
    cd = jnp.zeros((B, Pd), f32)   # LSTMCell cell    ("h_t_dec" in the module)
    for i in range(T):                                                # fully unrolled
        xin = jnp.concatenate([fb, hd], axis=1)                       # [B, 2*Pd], lane-aligned
        pre = gbase + jnp.dot(xin, w_dec, preferred_element_type=f32)  # single fused matmul
        hd, cd = lstm_step(pre, cd, Pd)
        out_ref[T - 1 - i] = cd      # outputs.reverse(); outputs are the cell states
        fb = cd


# -----------------------------------------------------------------------------
# Wrapper: gate repacking / lane padding + pallas_call
# -----------------------------------------------------------------------------
def _pack_gate_cols(w, n, P):
    """w: [4n, K] PyTorch layout (row blocks i,f,g,o) -> [K, 4P], column blocks (i,f,o,g),
    each gate block zero-padded to P lanes."""
    K = w.shape[1]
    i, f, g, o = w[0 * n:1 * n], w[1 * n:2 * n], w[2 * n:3 * n], w[3 * n:4 * n]
    out = jnp.zeros((K, 4 * P), jnp.float32)
    for idx, blk in enumerate((i, f, o, g)):
        out = out.at[:, idx * P: idx * P + n].set(blk.T.astype(jnp.float32))
    return out


def _pack_gate_bias(b, n, P):
    i, f, g, o = b[0 * n:1 * n], b[1 * n:2 * n], b[2 * n:3 * n], b[3 * n:4 * n]
    out = jnp.zeros((4 * P,), jnp.float32)
    for idx, blk in enumerate((i, f, o, g)):
        out = out.at[idx * P: idx * P + n].set(blk.astype(jnp.float32))
    return out.reshape(1, 4 * P)


def _pad_rows(w, rows):
    return jnp.zeros((rows, w.shape[1]), jnp.float32).at[:w.shape[0]].set(
        w.astype(jnp.float32))


def lstm_autoencoder_forward(x, params):
    B, T, D = x.shape
    H = params["whh_enc"].shape[1]      # encoder weight_hh: [4H, H]
    E = params["w_enc_fc"].shape[0]     # enc_fc weight:     [E, H]
    Pe = _round_up(H, _LANE)            # lane-padded encoder gate width
    Pd = _round_up(D, _LANE)            # lane-padded decoder gate width

    # time-major + flattened for the single hoisted input-projection matmul
    x2d = jnp.transpose(x, (1, 0, 2)).reshape(T * B, D).astype(jnp.float32)

    # ---- encoder LSTMCell ----
    wih_e = _pack_gate_cols(params["wih_enc"], H, Pe)                       # [D, 4Pe]
    whh_e = _pad_rows(_pack_gate_cols(params["whh_enc"], H, Pe), Pe)        # [Pe, 4Pe]
    b_e = _pack_gate_bias(params["bih_enc"] + params["bhh_enc"], H, Pe)     # [1, 4Pe]

    # ---- enc_fc (consumes lane-padded cell state) ----
    wfc_e = _pad_rows(params["w_enc_fc"].T, Pe)                             # [Pe, E]
    bfc_e = params["b_enc_fc"].reshape(1, -1).astype(jnp.float32)           # [1, E]

    # ---- dec_fc ----
    wfc_d = params["w_dec_fc"].T.astype(jnp.float32)                        # [E, H]
    bfc_d = params["b_dec_fc"].reshape(1, -1).astype(jnp.float32)           # [1, H]

    # ---- decoder LSTMCell: split weight_ih into dec_first_hidden / feedback parts ----
    wih_dec = params["wih_dec"]                                             # [4D, H+D]
    wih_dh = _pack_gate_cols(wih_dec[:, :H], D, Pd)                         # [H, 4Pd]
    wih_dx = _pad_rows(_pack_gate_cols(wih_dec[:, H:], D, Pd), Pd)          # [Pd, 4Pd]
    whh_d = _pad_rows(_pack_gate_cols(params["whh_dec"], D, Pd), Pd)        # [Pd, 4Pd]
    w_dec = jnp.concatenate([wih_dx, whh_d], axis=0)                        # [2Pd, 4Pd]
    b_d = _pack_gate_bias(params["bih_dec"] + params["bhh_dec"], D, Pd)     # [1, 4Pd]

    vmem = pl.BlockSpec(memory_space=pltpu.MemorySpace.VMEM)
    out_tm, embd = pl.pallas_call(
        _lstm_ae_kernel,
        out_shape=(jax.ShapeDtypeStruct((T, B, Pd), jnp.float32),
                   jax.ShapeDtypeStruct((B, E), jnp.float32)),
        in_specs=[vmem] * 11,
        out_specs=(vmem, vmem),
    )(x2d, wih_e, whh_e, b_e, wfc_e, bfc_e, wfc_d, bfc_d, wih_dh, w_dec, b_d)

    outputs = jnp.transpose(out_tm, (1, 0, 2))[:, :, :D]                    # [B, T, D]
    return outputs, embd


# -----------------------------------------------------------------------------
# Pure-JAX reference (mirrors the PyTorch forward literally) for verification
# -----------------------------------------------------------------------------
def ref_forward(x, params):
    B, T, D = x.shape
    H = params["whh_enc"].shape[1]

    def cell(x_t, h, c, wih, whh, bih, bhh):
        n = whh.shape[1]
        pre = x_t @ wih.T + bih + h @ whh.T + bhh
        i = jax.nn.sigmoid(pre[:, 0 * n:1 * n])
        f = jax.nn.sigmoid(pre[:, 1 * n:2 * n])
        g = jnp.tanh(pre[:, 2 * n:3 * n])
        o = jax.nn.sigmoid(pre[:, 3 * n:4 * n])
        c_new = f * c + i * g
        return o * jnp.tanh(c_new), c_new

    o_e = jnp.zeros((B, H)); h_e = jnp.zeros((B, H))
    for t in range(T):
        o_e, h_e = cell(x[:, t, :], o_e, h_e, params["wih_enc"],
                        params["whh_enc"], params["bih_enc"], params["bhh_enc"])
    embd = jnp.maximum(h_e @ params["w_enc_fc"].T + params["b_enc_fc"], 0.0)
    dec_fh = jnp.maximum(embd @ params["w_dec_fc"].T + params["b_dec_fc"], 0.0)

    o_d = jnp.zeros((B, D)); h_d = jnp.zeros((B, D))
    dec_in = jnp.concatenate([dec_fh, jnp.zeros((B, D))], axis=1)
    outs = []
    for _ in range(T):
        o_d, h_d = cell(dec_in, o_d, h_d, params["wih_dec"],
                        params["whh_dec"], params["bih_dec"], params["bhh_dec"])
        dec_in = jnp.concatenate([dec_fh, h_d], axis=1)
        outs.append(h_d)
    outs.reverse()
    return jnp.stack(outs, axis=1), embd


# -----------------------------------------------------------------------------
def init_params(key, input_size, hidden_size, embedding_size):
    ks = jax.random.split(key, 12)

    def u(k, shape, fan):
        b = 1.0 / np.sqrt(fan)
        return jax.random.uniform(k, shape, jnp.float32, -b, b)

    H, D, E = hidden_size, input_size, embedding_size
    return {
        "wih_enc": u(ks[0], (4 * H, D), H), "whh_enc": u(ks[1], (4 * H, H), H),
        "bih_enc": u(ks[2], (4 * H,), H),   "bhh_enc": u(ks[3], (4 * H,), H),
        "w_enc_fc": u(ks[4], (E, H), H),    "b_enc_fc": u(ks[5], (E,), H),
        "wih_dec": u(ks[6], (4 * D, H + D), D), "whh_dec": u(ks[7], (4 * D, D), D),
        "bih_dec": u(ks[8], (4 * D,), D),   "bhh_dec": u(ks[9], (4 * D,), D),
        "w_dec_fc": u(ks[10], (H, E), E),   "b_dec_fc": u(ks[11], (H,), E),
    }


if __name__ == "__main__":
    B, T, D, H, E = 2, 8, 16, 32, 8
    key = jax.random.PRNGKey(0)
    kx, kp = jax.random.split(key)
    x = jax.random.normal(kx, (B, T, D), jnp.float32)
    params = init_params(kp, D, H, E)

    outputs, embd = jax.jit(lstm_autoencoder_forward)(x, params)
    outputs = jax.block_until_ready(outputs)
    embd = jax.block_until_ready(embd)

    ref_out, ref_embd = ref_forward(x, params)
    assert outputs.shape == (B, T, D) and embd.shape == (B, E)
    np.testing.assert_allclose(np.asarray(outputs), np.asarray(ref_out),
                               rtol=1e-4, atol=1e-5)
    np.testing.assert_allclose(np.asarray(embd), np.asarray(ref_embd),
                               rtol=1e-4, atol=1e-5)
    print("KERNEL_OK")
</pallas_src>

<mosaic_0001>
module attributes {stable_mosaic.version = 11 : i64} {
  func.func @_lstm_ae_kernel(%arg0: memref<16x16xf32, #tpu.memory_space<vmem>>, %arg1: memref<16x512xf32, #tpu.memory_space<vmem>>, %arg2: memref<128x512xf32, #tpu.memory_space<vmem>>, %arg3: memref<1x512xf32, #tpu.memory_space<vmem>>, %arg4: memref<128x8xf32, #tpu.memory_space<vmem>>, %arg5: memref<1x8xf32, #tpu.memory_space<vmem>>, %arg6: memref<8x32xf32, #tpu.memory_space<vmem>>, %arg7: memref<1x32xf32, #tpu.memory_space<vmem>>, %arg8: memref<32x512xf32, #tpu.memory_space<vmem>>, %arg9: memref<256x512xf32, #tpu.memory_space<vmem>>, %arg10: memref<1x512xf32, #tpu.memory_space<vmem>>, %arg11: memref<8x2x128xf32, #tpu.memory_space<vmem>>, %arg12: memref<2x8xf32, #tpu.memory_space<vmem>>) attributes {dimension_semantics = [], scalar_prefetch = 0 : i64, scratch_operands = 0 : i64, tpu.core_type = #tpu.core_type<tc>} {
    %c0 = arith.constant 0 : index
    %c0_0 = arith.constant 0 : index
    %0 = vector.load %arg0[%c0, %c0_0] : memref<16x16xf32, #tpu.memory_space<vmem>>, vector<16x16xf32>
    %c0_1 = arith.constant 0 : index
    %c0_2 = arith.constant 0 : index
    %1 = vector.load %arg1[%c0_1, %c0_2] : memref<16x512xf32, #tpu.memory_space<vmem>>, vector<16x512xf32>
    %cst = arith.constant dense<0.000000e+00> : vector<16x512xf32>
    %2 = tpu.matmul %0, %1, %cst {dimension_numbers = #tpu.dot_dimension_numbers<[1], [0], [0], [1], [0, 0, 1, 1], [], []>} : vector<16x16xf32>, vector<16x512xf32>, vector<16x512xf32> -> vector<16x512xf32>
    %c0_3 = arith.constant 0 : index
    %c0_4 = arith.constant 0 : index
    %3 = vector.load %arg3[%c0_3, %c0_4] : memref<1x512xf32, #tpu.memory_space<vmem>>, vector<1x512xf32>
    %4 = vector.broadcast %3 : vector<1x512xf32> to vector<16x512xf32>
    %5 = arith.addf %2, %4 : vector<16x512xf32>
    %c0_5 = arith.constant 0 : index
    %c0_6 = arith.constant 0 : index
    %6 = vector.load %arg2[%c0_5, %c0_6] : memref<128x512xf32, #tpu.memory_space<vmem>>, vector<128x512xf32>
    %cst_7 = arith.constant 0.000000e+00 : f32
    %7 = vector.broadcast %cst_7 : f32 to vector<2x128xf32>
    %cst_8 = arith.constant 0.000000e+00 : f32
    %8 = vector.broadcast %cst_8 : f32 to vector<2x128xf32>
    %9 = vector.extract_strided_slice %5 {offsets = [0, 0], sizes = [2, 512], strides = [1, 1]} : vector<16x512xf32> to vector<2x512xf32>
    %cst_9 = arith.constant dense<0.000000e+00> : vector<2x512xf32>
    %10 = tpu.matmul %7, %6, %cst_9 {dimension_numbers = #tpu.dot_dimension_numbers<[1], [0], [0], [1], [0, 0, 1, 1], [], []>} : vector<2x128xf32>, vector<128x512xf32>, vector<2x512xf32> -> vector<2x512xf32>
    %11 = arith.addf %9, %10 : vector<2x512xf32>
    %12 = vector.extract_strided_slice %11 {offsets = [0, 0], sizes = [2, 384], strides = [1, 1]} : vector<2x512xf32> to vector<2x384xf32>
    %13 = arith.negf %12 : vector<2x384xf32>
    %14 = math.exp %13 : vector<2x384xf32>
    %cst_10 = arith.constant 1.000000e+00 : f32
    %15 = vector.broadcast %cst_10 : f32 to vector<2x384xf32>
    %16 = arith.addf %15, %14 : vector<2x384xf32>
    %17 = arith.divf %15, %16 : vector<2x384xf32>
    %18 = vector.extract_strided_slice %17 {offsets = [0, 0], sizes = [2, 128], strides = [1, 1]} : vector<2x384xf32> to vector<2x128xf32>
    %19 = vector.extract_strided_slice %17 {offsets = [0, 128], sizes = [2, 128], strides = [1, 1]} : vector<2x384xf32> to vector<2x128xf32>
    %20 = vector.extract_strided_slice %17 {offsets = [0, 256], sizes = [2, 128], strides = [1, 1]} : vector<2x384xf32> to vector<2x128xf32>
    %21 = vector.extract_strided_slice %11 {offsets = [0, 384], sizes = [2, 128], strides = [1, 1]} : vector<2x512xf32> to vector<2x128xf32>
    %22 = math.tanh %21 : vector<2x128xf32>
    %23 = arith.mulf %19, %8 : vector<2x128xf32>
    %24 = arith.mulf %18, %22 : vector<2x128xf32>
    %25 = arith.addf %23, %24 : vector<2x128xf32>
    %26 = math.tanh %25 : vector<2x128xf32>
    %27 = arith.mulf %20, %26 : vector<2x128xf32>
    %28 = vector.extract_strided_slice %5 {offsets = [2, 0], sizes = [2, 512], strides = [1, 1]} : vector<16x512xf32> to vector<2x512xf32>
    %cst_11 = arith.constant dense<0.000000e+00> : vector<2x512xf32>
    %29 = tpu.matmul %27, %6, %cst_11 {dimension_numbers = #tpu.dot_dimension_numbers<[1], [0], [0], [1], [0, 0, 1, 1], [], []>} : vector<2x128xf32>, vector<128x512xf32>, vector<2x512xf32> -> vector<2x512xf32>
    %30 = arith.addf %28, %29 : vector<2x512xf32>
    %31 = vector.extract_strided_slice %30 {offsets = [0, 0], sizes = [2, 384], strides = [1, 1]} : vector<2x512xf32> to vector<2x384xf32>
    %32 = arith.negf %31 : vector<2x384xf32>
    %33 = math.exp %32 : vector<2x384xf32>
    %cst_12 = arith.constant 1.000000e+00 : f32
    %34 = vector.broadcast %cst_12 : f32 to vector<2x384xf32>
    %35 = arith.addf %34, %33 : vector<2x384xf32>
    %36 = arith.divf %34, %35 : vector<2x384xf32>
    %37 = vector.extract_strided_slice %36 {offsets = [0, 0], sizes = [2, 128], strides = [1, 1]} : vector<2x384xf32> to vector<2x128xf32>
    %38 = vector.extract_strided_slice %36 {offsets = [0, 128], sizes = [2, 128], strides = [1, 1]} : vector<2x384xf32> to vector<2x128xf32>
    %39 = vector.extract_strided_slice %36 {offsets = [0, 256], sizes = [2, 128], strides = [1, 1]} : vector<2x384xf32> to vector<2x128xf32>
    %40 = vector.extract_strided_slice %30 {offsets = [0, 384], sizes = [2, 128], strides = [1, 1]} : vector<2x512xf32> to vector<2x128xf32>
    %41 = math.tanh %40 : vector<2x128xf32>
    %42 = arith.mulf %38, %25 : vector<2x128xf32>
    %43 = arith.mulf %37, %41 : vector<2x128xf32>
    %44 = arith.addf %42, %43 : vector<2x128xf32>
    %45 = math.tanh %44 : vector<2x128xf32>
    %46 = arith.mulf %39, %45 : vector<2x128xf32>
    %47 = vector.extract_strided_slice %5 {offsets = [4, 0], sizes = [2, 512], strides = [1, 1]} : vector<16x512xf32> to vector<2x512xf32>
    %cst_13 = arith.constant dense<0.000000e+00> : vector<2x512xf32>
    %48 = tpu.matmul %46, %6, %cst_13 {dimension_numbers = #tpu.dot_dimension_numbers<[1], [0], [0], [1], [0, 0, 1, 1], [], []>} : vector<2x128xf32>, vector<128x512xf32>, vector<2x512xf32> -> vector<2x512xf32>
    %49 = arith.addf %47, %48 : vector<2x512xf32>
    %50 = vector.extract_strided_slice %49 {offsets = [0, 0], sizes = [2, 384], strides = [1, 1]} : vector<2x512xf32> to vector<2x384xf32>
    %51 = arith.negf %50 : vector<2x384xf32>
    %52 = math.exp %51 : vector<2x384xf32>
    %cst_14 = arith.constant 1.000000e+00 : f32
    %53 = vector.broadcast %cst_14 : f32 to vector<2x384xf32>
    %54 = arith.addf %53, %52 : vector<2x384xf32>
    %55 = arith.divf %53, %54 : vector<2x384xf32>
    %56 = vector.extract_strided_slice %55 {offsets = [0, 0], sizes = [2, 128], strides = [1, 1]} : vector<2x384xf32> to vector<2x128xf32>
    %57 = vector.extract_strided_slice %55 {offsets = [0, 128], sizes = [2, 128], strides = [1, 1]} : vector<2x384xf32> to vector<2x128xf32>
    %58 = vector.extract_strided_slice %55 {offsets = [0, 256], sizes = [2, 128], strides = [1, 1]} : vector<2x384xf32> to vector<2x128xf32>
    %59 = vector.extract_strided_slice %49 {offsets = [0, 384], sizes = [2, 128], strides = [1, 1]} : vector<2x512xf32> to vector<2x128xf32>
    %60 = math.tanh %59 : vector<2x128xf32>
    %61 = arith.mulf %57, %44 : vector<2x128xf32>
    %62 = arith.mulf %56, %60 : vector<2x128xf32>
    %63 = arith.addf %61, %62 : vector<2x128xf32>
    %64 = math.tanh %63 : vector<2x128xf32>
    %65 = arith.mulf %58, %64 : vector<2x128xf32>
    %66 = vector.extract_strided_slice %5 {offsets = [6, 0], sizes = [2, 512], strides = [1, 1]} : vector<16x512xf32> to vector<2x512xf32>
    %cst_15 = arith.constant dense<0.000000e+00> : vector<2x512xf32>
    %67 = tpu.matmul %65, %6, %cst_15 {dimension_numbers = #tpu.dot_dimension_numbers<[1], [0], [0], [1], [0, 0, 1, 1], [], []>} : vector<2x128xf32>, vector<128x512xf32>, vector<2x512xf32> -> vector<2x512xf32>
    %68 = arith.addf %66, %67 : vector<2x512xf32>
    %69 = vector.extract_strided_slice %68 {offsets = [0, 0], sizes = [2, 384], strides = [1, 1]} : vector<2x512xf32> to vector<2x384xf32>
    %70 = arith.negf %69 : vector<2x384xf32>
    %71 = math.exp %70 : vector<2x384xf32>
    %cst_16 = arith.constant 1.000000e+00 : f32
    %72 = vector.broadcast %cst_16 : f32 to vector<2x384xf32>
    %73 = arith.addf %72, %71 : vector<2x384xf32>
    %74 = arith.divf %72, %73 : vector<2x384xf32>
    %75 = vector.extract_strided_slice %74 {offsets = [0, 0], sizes = [2, 128], strides = [1, 1]} : vector<2x384xf32> to vector<2x128xf32>
    %76 = vector.extract_strided_slice %74 {offsets = [0, 128], sizes = [2, 128], strides = [1, 1]} : vector<2x384xf32> to vector<2x128xf32>
    %77 = vector.extract_strided_slice %74 {offsets = [0, 256], sizes = [2, 128], strides = [1, 1]} : vector<2x384xf32> to vector<2x128xf32>
    %78 = vector.extract_strided_slice %68 {offsets = [0, 384], sizes = [2, 128], strides = [1, 1]} : vector<2x512xf32> to vector<2x128xf32>
    %79 = math.tanh %78 : vector<2x128xf32>
    %80 = arith.mulf %76, %63 : vector<2x128xf32>
    %81 = arith.mulf %75, %79 : vector<2x128xf32>
    %82 = arith.addf %80, %81 : vector<2x128xf32>
    %83 = math.tanh %82 : vector<2x128xf32>
    %84 = arith.mulf %77, %83 : vector<2x128xf32>
    %85 = vector.extract_strided_slice %5 {offsets = [8, 0], sizes = [2, 512], strides = [1, 1]} : vector<16x512xf32> to vector<2x512xf32>
    %cst_17 = arith.constant dense<0.000000e+00> : vector<2x512xf32>
    %86 = tpu.matmul %84, %6, %cst_17 {dimension_numbers = #tpu.dot_dimension_numbers<[1], [0], [0], [1], [0, 0, 1, 1], [], []>} : vector<2x128xf32>, vector<128x512xf32>, vector<2x512xf32> -> vector<2x512xf32>
    %87 = arith.addf %85, %86 : vector<2x512xf32>
    %88 = vector.extract_strided_slice %87 {offsets = [0, 0], sizes = [2, 384], strides = [1, 1]} : vector<2x512xf32> to vector<2x384xf32>
    %89 = arith.negf %88 : vector<2x384xf32>
    %90 = math.exp %89 : vector<2x384xf32>
    %cst_18 = arith.constant 1.000000e+00 : f32
    %91 = vector.broadcast %cst_18 : f32 to vector<2x384xf32>
    %92 = arith.addf %91, %90 : vector<2x384xf32>
    %93 = arith.divf %91, %92 : vector<2x384xf32>
    %94 = vector.extract_strided_slice %93 {offsets = [0, 0], sizes = [2, 128], strides = [1, 1]} : vector<2x384xf32> to vector<2x128xf32>
    %95 = vector.extract_strided_slice %93 {offsets = [0, 128], sizes = [2, 128], strides = [1, 1]} : vector<2x384xf32> to vector<2x128xf32>
    %96 = vector.extract_strided_slice %93 {offsets = [0, 256], sizes = [2, 128], strides = [1, 1]} : vector<2x384xf32> to vector<2x128xf32>
    %97 = vector.extract_strided_slice %87 {offsets = [0, 384], sizes = [2, 128], strides = [1, 1]} : vector<2x512xf32> to vector<2x128xf32>
    %98 = math.tanh %97 : vector<2x128xf32>
    %99 = arith.mulf %95, %82 : vector<2x128xf32>
    %100 = arith.mulf %94, %98 : vector<2x128xf32>
    %101 = arith.addf %99, %100 : vector<2x128xf32>
    %102 = math.tanh %101 : vector<2x128xf32>
    %103 = arith.mulf %96, %102 : vector<2x128xf32>
    %104 = vector.extract_strided_slice %5 {offsets = [10, 0], sizes = [2, 512], strides = [1, 1]} : vector<16x512xf32> to vector<2x512xf32>
    %cst_19 = arith.constant dense<0.000000e+00> : vector<2x512xf32>
    %105 = tpu.matmul %103, %6, %cst_19 {dimension_numbers = #tpu.dot_dimension_numbers<[1], [0], [0], [1], [0, 0, 1, 1], [], []>} : vector<2x128xf32>, vector<128x512xf32>, vector<2x512xf32> -> vector<2x512xf32>
    %106 = arith.addf %104, %105 : vector<2x512xf32>
    %107 = vector.extract_strided_slice %106 {offsets = [0, 0], sizes = [2, 384], strides = [1, 1]} : vector<2x512xf32> to vector<2x384xf32>
    %108 = arith.negf %107 : vector<2x384xf32>
    %109 = math.exp %108 : vector<2x384xf32>
    %cst_20 = arith.constant 1.000000e+00 : f32
    %110 = vector.broadcast %cst_20 : f32 to vector<2x384xf32>
    %111 = arith.addf %110, %109 : vector<2x384xf32>
    %112 = arith.divf %110, %111 : vector<2x384xf32>
    %113 = vector.extract_strided_slice %112 {offsets = [0, 0], sizes = [2, 128], strides = [1, 1]} : vector<2x384xf32> to vector<2x128xf32>
    %114 = vector.extract_strided_slice %112 {offsets = [0, 128], sizes = [2, 128], strides = [1, 1]} : vector<2x384xf32> to vector<2x128xf32>
    %115 = vector.extract_strided_slice %112 {offsets = [0, 256], sizes = [2, 128], strides = [1, 1]} : vector<2x384xf32> to vector<2x128xf32>
    %116 = vector.extract_strided_slice %106 {offsets = [0, 384], sizes = [2, 128], strides = [1, 1]} : vector<2x512xf32> to vector<2x128xf32>
    %117 = math.tanh %116 : vector<2x128xf32>
    %118 = arith.mulf %114, %101 : vector<2x128xf32>
    %119 = arith.mulf %113, %117 : vector<2x128xf32>
    %120 = arith.addf %118, %119 : vector<2x128xf32>
    %121 = math.tanh %120 : vector<2x128xf32>
    %122 = arith.mulf %115, %121 : vector<2x128xf32>
    %123 = vector.extract_strided_slice %5 {offsets = [12, 0], sizes = [2, 512], strides = [1, 1]} : vector<16x512xf32> to vector<2x512xf32>
    %cst_21 = arith.constant dense<0.000000e+00> : vector<2x512xf32>
    %124 = tpu.matmul %122, %6, %cst_21 {dimension_numbers = #tpu.dot_dimension_numbers<[1], [0], [0], [1], [0, 0, 1, 1], [], []>} : vector<2x128xf32>, vector<128x512xf32>, vector<2x512xf32> -> vector<2x512xf32>
    %125 = arith.addf %123, %124 : vector<2x512xf32>
    %126 = vector.extract_strided_slice %125 {offsets = [0, 0], sizes = [2, 384], strides = [1, 1]} : vector<2x512xf32> to vector<2x384xf32>
    %127 = arith.negf %126 : vector<2x384xf32>
    %128 = math.exp %127 : vector<2x384xf32>
    %cst_22 = arith.constant 1.000000e+00 : f32
    %129 = vector.broadcast %cst_22 : f32 to vector<2x384xf32>
    %130 = arith.addf %129, %128 : vector<2x384xf32>
    %131 = arith.divf %129, %130 : vector<2x384xf32>
    %132 = vector.extract_strided_slice %131 {offsets = [0, 0], sizes = [2, 128], strides = [1, 1]} : vector<2x384xf32> to vector<2x128xf32>
    %133 = vector.extract_strided_slice %131 {offsets = [0, 128], sizes = [2, 128], strides = [1, 1]} : vector<2x384xf32> to vector<2x128xf32>
    %134 = vector.extract_strided_slice %131 {offsets = [0, 256], sizes = [2, 128], strides = [1, 1]} : vector<2x384xf32> to vector<2x128xf32>
    %135 = vector.extract_strided_slice %125 {offsets = [0, 384], sizes = [2, 128], strides = [1, 1]} : vector<2x512xf32> to vector<2x128xf32>
    %136 = math.tanh %135 : vector<2x128xf32>
    %137 = arith.mulf %133, %120 : vector<2x128xf32>
    %138 = arith.mulf %132, %136 : vector<2x128xf32>
    %139 = arith.addf %137, %138 : vector<2x128xf32>
    %140 = math.tanh %139 : vector<2x128xf32>
    %141 = arith.mulf %134, %140 : vector<2x128xf32>
    %142 = vector.extract_strided_slice %5 {offsets = [14, 0], sizes = [2, 512], strides = [1, 1]} : vector<16x512xf32> to vector<2x512xf32>
    %cst_23 = arith.constant dense<0.000000e+00> : vector<2x512xf32>
    %143 = tpu.matmul %141, %6, %cst_23 {dimension_numbers = #tpu.dot_dimension_numbers<[1], [0], [0], [1], [0, 0, 1, 1], [], []>} : vector<2x128xf32>, vector<128x512xf32>, vector<2x512xf32> -> vector<2x512xf32>
    %144 = arith.addf %142, %143 : vector<2x512xf32>
    %145 = vector.extract_strided_slice %144 {offsets = [0, 0], sizes = [2, 384], strides = [1, 1]} : vector<2x512xf32> to vector<2x384xf32>
    %146 = arith.negf %145 : vector<2x384xf32>
    %147 = math.exp %146 : vector<2x384xf32>
    %cst_24 = arith.constant 1.000000e+00 : f32
    %148 = vector.broadcast %cst_24 : f32 to vector<2x384xf32>
    %149 = arith.addf %148, %147 : vector<2x384xf32>
    %150 = arith.divf %148, %149 : vector<2x384xf32>
    %151 = vector.extract_strided_slice %150 {offsets = [0, 0], sizes = [2, 128], strides = [1, 1]} : vector<2x384xf32> to vector<2x128xf32>
    %152 = vector.extract_strided_slice %150 {offsets = [0, 128], sizes = [2, 128], strides = [1, 1]} : vector<2x384xf32> to vector<2x128xf32>
    %153 = vector.extract_strided_slice %144 {offsets = [0, 384], sizes = [2, 128], strides = [1, 1]} : vector<2x512xf32> to vector<2x128xf32>
    %154 = math.tanh %153 : vector<2x128xf32>
    %155 = arith.mulf %152, %139 : vector<2x128xf32>
    %156 = arith.mulf %151, %154 : vector<2x128xf32>
    %157 = arith.addf %155, %156 : vector<2x128xf32>
    %c0_25 = arith.constant 0 : index
    %c0_26 = arith.constant 0 : index
    %158 = vector.load %arg4[%c0_25, %c0_26] : memref<128x8xf32, #tpu.memory_space<vmem>>, vector<128x8xf32>
    %cst_27 = arith.constant dense<0.000000e+00> : vector<2x8xf32>
    %159 = tpu.matmul %157, %158, %cst_27 {dimension_numbers = #tpu.dot_dimension_numbers<[1], [0], [0], [1], [0, 0, 1, 1], [], []>} : vector<2x128xf32>, vector<128x8xf32>, vector<2x8xf32> -> vector<2x8xf32>
    %c0_28 = arith.constant 0 : index
    %c0_29 = arith.constant 0 : index
    %160 = vector.load %arg5[%c0_28, %c0_29] : memref<1x8xf32, #tpu.memory_space<vmem>>, vector<1x8xf32>
    %161 = vector.broadcast %160 : vector<1x8xf32> to vector<2x8xf32>
    %162 = arith.addf %159, %161 : vector<2x8xf32>
    %cst_30 = arith.constant 0.000000e+00 : f32
    %163 = vector.broadcast %cst_30 : f32 to vector<2x8xf32>
    %164 = arith.maximumf %162, %163 : vector<2x8xf32>
    %c0_31 = arith.constant 0 : index
    %c0_32 = arith.constant 0 : index
    %165 = vector.load %arg12[%c0_31, %c0_32] : memref<2x8xf32, #tpu.memory_space<vmem>>, vector<2x8xf32>
    tpu.vector_store %arg12[%c0_31, %c0_32], %164 {strides = array<i32>} : memref<2x8xf32, #tpu.memory_space<vmem>>, vector<2x8xf32>,
    %c0_33 = arith.constant 0 : index
    %c0_34 = arith.constant 0 : index
    %166 = vector.load %arg6[%c0_33, %c0_34] : memref<8x32xf32, #tpu.memory_space<vmem>>, vector<8x32xf32>
    %cst_35 = arith.constant dense<0.000000e+00> : vector<2x32xf32>
    %167 = tpu.matmul %164, %166, %cst_35 {dimension_numbers = #tpu.dot_dimension_numbers<[1], [0], [0], [1], [0, 0, 1, 1], [], []>} : vector<2x8xf32>, vector<8x32xf32>, vector<2x32xf32> -> vector<2x32xf32>
    %c0_36 = arith.constant 0 : index
    %c0_37 = arith.constant 0 : index
    %168 = vector.load %arg7[%c0_36, %c0_37] : memref<1x32xf32, #tpu.memory_space<vmem>>, vector<1x32xf32>
    %169 = vector.broadcast %168 : vector<1x32xf32> to vector<2x32xf32>
    %170 = arith.addf %167, %169 : vector<2x32xf32>
    %cst_38 = arith.constant 0.000000e+00 : f32
    %171 = vector.broadcast %cst_38 : f32 to vector<2x32xf32>
    %172 = arith.maximumf %170, %171 : vector<2x32xf32>
    %c0_39 = arith.constant 0 : index
    %c0_40 = arith.constant 0 : index
    %173 = vector.load %arg8[%c0_39, %c0_40] : memref<32x512xf32, #tpu.memory_space<vmem>>, vector<32x512xf32>
    %cst_41 = arith.constant dense<0.000000e+00> : vector<2x512xf32>
    %174 = tpu.matmul %172, %173, %cst_41 {dimension_numbers = #tpu.dot_dimension_numbers<[1], [0], [0], [1], [0, 0, 1, 1], [], []>} : vector<2x32xf32>, vector<32x512xf32>, vector<2x512xf32> -> vector<2x512xf32>
    %c0_42 = arith.constant 0 : index
    %c0_43 = arith.constant 0 : index
    %175 = vector.load %arg10[%c0_42, %c0_43] : memref<1x512xf32, #tpu.memory_space<vmem>>, vector<1x512xf32>
    %176 = vector.broadcast %175 : vector<1x512xf32> to vector<2x512xf32>
    %177 = arith.addf %174, %176 : vector<2x512xf32>
    %c0_44 = arith.constant 0 : index
    %c0_45 = arith.constant 0 : index
    %178 = vector.load %arg9[%c0_44, %c0_45] : memref<256x512xf32, #tpu.memory_space<vmem>>, vector<256x512xf32>
    %cst_46 = arith.constant 0.000000e+00 : f32
    %179 = vector.broadcast %cst_46 : f32 to vector<2x128xf32>
    %cst_47 = arith.constant 0.000000e+00 : f32
    %180 = vector.broadcast %cst_47 : f32 to vector<2x128xf32>
    %cst_48 = arith.constant 0.000000e+00 : f32
    %181 = vector.broadcast %cst_48 : f32 to vector<2x128xf32>
    %182 = tpu.concatenate %179, %180 in 1 : vector<2x128xf32>, vector<2x128xf32> -> vector<2x256xf32>
    %cst_49 = arith.constant dense<0.000000e+00> : vector<2x512xf32>
    %183 = tpu.matmul %182, %178, %cst_49 {dimension_numbers = #tpu.dot_dimension_numbers<[1], [0], [0], [1], [0, 0, 1, 1], [], []>} : vector<2x256xf32>, vector<256x512xf32>, vector<2x512xf32> -> vector<2x512xf32>
    %184 = arith.addf %177, %183 : vector<2x512xf32>
    %185 = vector.extract_strided_slice %184 {offsets = [0, 0], sizes = [2, 384], strides = [1, 1]} : vector<2x512xf32> to vector<2x384xf32>
    %186 = arith.negf %185 : vector<2x384xf32>
    %187 = math.exp %186 : vector<2x384xf32>
    %cst_50 = arith.constant 1.000000e+00 : f32
    %188 = vector.broadcast %cst_50 : f32 to vector<2x384xf32>
    %189 = arith.addf %188, %187 : vector<2x384xf32>
    %190 = arith.divf %188, %189 : vector<2x384xf32>
    %191 = vector.extract_strided_slice %190 {offsets = [0, 0], sizes = [2, 128], strides = [1, 1]} : vector<2x384xf32> to vector<2x128xf32>
    %192 = vector.extract_strided_slice %190 {offsets = [0, 128], sizes = [2, 128], strides = [1, 1]} : vector<2x384xf32> to vector<2x128xf32>
    %193 = vector.extract_strided_slice %190 {offsets = [0, 256], sizes = [2, 128], strides = [1, 1]} : vector<2x384xf32> to vector<2x128xf32>
    %194 = vector.extract_strided_slice %184 {offsets = [0, 384], sizes = [2, 128], strides = [1, 1]} : vector<2x512xf32> to vector<2x128xf32>
    %195 = math.tanh %194 : vector<2x128xf32>
    %196 = arith.mulf %192, %181 : vector<2x128xf32>
    %197 = arith.mulf %191, %195 : vector<2x128xf32>
    %198 = arith.addf %196, %197 : vector<2x128xf32>
    %199 = math.tanh %198 : vector<2x128xf32>
    %200 = arith.mulf %193, %199 : vector<2x128xf32>
    %c7 = arith.constant 7 : index
    %c0_51 = arith.constant 0 : index
    %c0_52 = arith.constant 0 : index
    %201 = vector.load %arg11[%c7, %c0_51, %c0_52] : memref<8x2x128xf32, #tpu.memory_space<vmem>>, vector<1x2x128xf32>
    %202 = vector.shape_cast %201 : vector<1x2x128xf32> to vector<2x128xf32>
    %203 = vector.shape_cast %198 : vector<2x128xf32> to vector<1x2x128xf32>
    tpu.vector_store %arg11[%c7, %c0_51, %c0_52], %203 {strides = array<i32>} : memref<8x2x128xf32, #tpu.memory_space<vmem>>, vector<1x2x128xf32>,
    %204 = tpu.concatenate %198, %200 in 1 : vector<2x128xf32>, vector<2x128xf32> -> vector<2x256xf32>
    %cst_53 = arith.constant dense<0.000000e+00> : vector<2x512xf32>
    %205 = tpu.matmul %204, %178, %cst_53 {dimension_numbers = #tpu.dot_dimension_numbers<[1], [0], [0], [1], [0, 0, 1, 1], [], []>} : vector<2x256xf32>, vector<256x512xf32>, vector<2x512xf32> -> vector<2x512xf32>
    %206 = arith.addf %177, %205 : vector<2x512xf32>
    %207 = vector.extract_strided_slice %206 {offsets = [0, 0], sizes = [2, 384], strides = [1, 1]} : vector<2x512xf32> to vector<2x384xf32>
    %208 = arith.negf %207 : vector<2x384xf32>
    %209 = math.exp %208 : vector<2x384xf32>
    %cst_54 = arith.constant 1.000000e+00 : f32
    %210 = vector.broadcast %cst_54 : f32 to vector<2x384xf32>
    %211 = arith.addf %210, %209 : vector<2x384xf32>
    %212 = arith.divf %210, %211 : vector<2x384xf32>
    %213 = vector.extract_strided_slice %212 {offsets = [0, 0], sizes = [2, 128], strides = [1, 1]} : vector<2x384xf32> to vector<2x128xf32>
    %214 = vector.extract_strided_slice %212 {offsets = [0, 128], sizes = [2, 128], strides = [1, 1]} : vector<2x384xf32> to vector<2x128xf32>
    %215 = vector.extract_strided_slice %212 {offsets = [0, 256], sizes = [2, 128], strides = [1, 1]} : vector<2x384xf32> to vector<2x128xf32>
    %216 = vector.extract_strided_slice %206 {offsets = [0, 384], sizes = [2, 128], strides = [1, 1]} : vector<2x512xf32> to vector<2x128xf32>
    %217 = math.tanh %216 : vector<2x128xf32>
    %218 = arith.mulf %214, %198 : vector<2x128xf32>
    %219 = arith.mulf %213, %217 : vector<2x128xf32>
    %220 = arith.addf %218, %219 : vector<2x128xf32>
    %221 = math.tanh %220 : vector<2x128xf32>
    %222 = arith.mulf %215, %221 : vector<2x128xf32>
    %c6 = arith.constant 6 : index
    %c0_55 = arith.constant 0 : index
    %c0_56 = arith.constant 0 : index
    %223 = vector.load %arg11[%c6, %c0_55, %c0_56] : memref<8x2x128xf32, #tpu.memory_space<vmem>>, vector<1x2x128xf32>
    %224 = vector.shape_cast %223 : vector<1x2x128xf32> to vector<2x128xf32>
    %225 = vector.shape_cast %220 : vector<2x128xf32> to vector<1x2x128xf32>
    tpu.vector_store %arg11[%c6, %c0_55, %c0_56], %225 {strides = array<i32>} : memref<8x2x128xf32, #tpu.memory_space<vmem>>, vector<1x2x128xf32>,
    %226 = tpu.concatenate %220, %222 in 1 : vector<2x128xf32>, vector<2x128xf32> -> vector<2x256xf32>
    %cst_57 = arith.constant dense<0.000000e+00> : vector<2x512xf32>
    %227 = tpu.matmul %226, %178, %cst_57 {dimension_numbers = #tpu.dot_dimension_numbers<[1], [0], [0], [1], [0, 0, 1, 1], [], []>} : vector<2x256xf32>, vector<256x512xf32>, vector<2x512xf32> -> vector<2x512xf32>
    %228 = arith.addf %177, %227 : vector<2x512xf32>
    %229 = vector.extract_strided_slice %228 {offsets = [0, 0], sizes = [2, 384], strides = [1, 1]} : vector<2x512xf32> to vector<2x384xf32>
    %230 = arith.negf %229 : vector<2x384xf32>
    %231 = math.exp %230 : vector<2x384xf32>
    %cst_58 = arith.constant 1.000000e+00 : f32
    %232 = vector.broadcast %cst_58 : f32 to vector<2x384xf32>
    %233 = arith.addf %232, %231 : vector<2x384xf32>
    %234 = arith.divf %232, %233 : vector<2x384xf32>
    %235 = vector.extract_strided_slice %234 {offsets = [0, 0], sizes = [2, 128], strides = [1, 1]} : vector<2x384xf32> to vector<2x128xf32>
    %236 = vector.extract_strided_slice %234 {offsets = [0, 128], sizes = [2, 128], strides = [1, 1]} : vector<2x384xf32> to vector<2x128xf32>
    %237 = vector.extract_strided_slice %234 {offsets = [0, 256], sizes = [2, 128], strides = [1, 1]} : vector<2x384xf32> to vector<2x128xf32>
    %238 = vector.extract_strided_slice %228 {offsets = [0, 384], sizes = [2, 128], strides = [1, 1]} : vector<2x512xf32> to vector<2x128xf32>
    %239 = math.tanh %238 : vector<2x128xf32>
    %240 = arith.mulf %236, %220 : vector<2x128xf32>
    %241 = arith.mulf %235, %239 : vector<2x128xf32>
    %242 = arith.addf %240, %241 : vector<2x128xf32>
    %243 = math.tanh %242 : vector<2x128xf32>
    %244 = arith.mulf %237, %243 : vector<2x128xf32>
    %c5 = arith.constant 5 : index
    %c0_59 = arith.constant 0 : index
    %c0_60 = arith.constant 0 : index
    %245 = vector.load %arg11[%c5, %c0_59, %c0_60] : memref<8x2x128xf32, #tpu.memory_space<vmem>>, vector<1x2x128xf32>
    %246 = vector.shape_cast %245 : vector<1x2x128xf32> to vector<2x128xf32>
    %247 = vector.shape_cast %242 : vector<2x128xf32> to vector<1x2x128xf32>
    tpu.vector_store %arg11[%c5, %c0_59, %c0_60], %247 {strides = array<i32>} : memref<8x2x128xf32, #tpu.memory_space<vmem>>, vector<1x2x128xf32>,
    %248 = tpu.concatenate %242, %244 in 1 : vector<2x128xf32>, vector<2x128xf32> -> vector<2x256xf32>
    %cst_61 = arith.constant dense<0.000000e+00> : vector<2x512xf32>
    %249 = tpu.matmul %248, %178, %cst_61 {dimension_numbers = #tpu.dot_dimension_numbers<[1], [0], [0], [1], [0, 0, 1, 1], [], []>} : vector<2x256xf32>, vector<256x512xf32>, vector<2x512xf32> -> vector<2x512xf32>
    %250 = arith.addf %177, %249 : vector<2x512xf32>
    %251 = vector.extract_strided_slice %250 {offsets = [0, 0], sizes = [2, 384], strides = [1, 1]} : vector<2x512xf32> to vector<2x384xf32>
    %252 = arith.negf %251 : vector<2x384xf32>
    %253 = math.exp %252 : vector<2x384xf32>
    %cst_62 = arith.constant 1.000000e+00 : f32
    %254 = vector.broadcast %cst_62 : f32 to vector<2x384xf32>
    %255 = arith.addf %254, %253 : vector<2x384xf32>
    %256 = arith.divf %254, %255 : vector<2x384xf32>
    %257 = vector.extract_strided_slice %256 {offsets = [0, 0], sizes = [2, 128], strides = [1, 1]} : vector<2x384xf32> to vector<2x128xf32>
    %258 = vector.extract_strided_slice %256 {offsets = [0, 128], sizes = [2, 128], strides = [1, 1]} : vector<2x384xf32> to vector<2x128xf32>
    %259 = vector.extract_strided_slice %256 {offsets = [0, 256], sizes = [2, 128], strides = [1, 1]} : vector<2x384xf32> to vector<2x128xf32>
    %260 = vector.extract_strided_slice %250 {offsets = [0, 384], sizes = [2, 128], strides = [1, 1]} : vector<2x512xf32> to vector<2x128xf32>
    %261 = math.tanh %260 : vector<2x128xf32>
    %262 = arith.mulf %258, %242 : vector<2x128xf32>
    %263 = arith.mulf %257, %261 : vector<2x128xf32>
    %264 = arith.addf %262, %263 : vector<2x128xf32>
    %265 = math.tanh %264 : vector<2x128xf32>
    %266 = arith.mulf %259, %265 : vector<2x128xf32>
    %c4 = arith.constant 4 : index
    %c0_63 = arith.constant 0 : index
    %c0_64 = arith.constant 0 : index
    %267 = vector.load %arg11[%c4, %c0_63, %c0_64] : memref<8x2x128xf32, #tpu.memory_space<vmem>>, vector<1x2x128xf32>
    %268 = vector.shape_cast %267 : vector<1x2x128xf32> to vector<2x128xf32>
    %269 = vector.shape_cast %264 : vector<2x128xf32> to vector<1x2x128xf32>
    tpu.vector_store %arg11[%c4, %c0_63, %c0_64], %269 {strides = array<i32>} : memref<8x2x128xf32, #tpu.memory_space<vmem>>, vector<1x2x128xf32>,
    %270 = tpu.concatenate %264, %266 in 1 : vector<2x128xf32>, vector<2x128xf32> -> vector<2x256xf32>
    %cst_65 = arith.constant dense<0.000000e+00> : vector<2x512xf32>
    %271 = tpu.matmul %270, %178, %cst_65 {dimension_numbers = #tpu.dot_dimension_numbers<[1], [0], [0], [1], [0, 0, 1, 1], [], []>} : vector<2x256xf32>, vector<256x512xf32>, vector<2x512xf32> -> vector<2x512xf32>
    %272 = arith.addf %177, %271 : vector<2x512xf32>
    %273 = vector.extract_strided_slice %272 {offsets = [0, 0], sizes = [2, 384], strides = [1, 1]} : vector<2x512xf32> to vector<2x384xf32>
    %274 = arith.negf %273 : vector<2x384xf32>
    %275 = math.exp %274 : vector<2x384xf32>
    %cst_66 = arith.constant 1.000000e+00 : f32
    %276 = vector.broadcast %cst_66 : f32 to vector<2x384xf32>
    %277 = arith.addf %276, %275 : vector<2x384xf32>
    %278 = arith.divf %276, %277 : vector<2x384xf32>
    %279 = vector.extract_strided_slice %278 {offsets = [0, 0], sizes = [2, 128], strides = [1, 1]} : vector<2x384xf32> to vector<2x128xf32>
    %280 = vector.extract_strided_slice %278 {offsets = [0, 128], sizes = [2, 128], strides = [1, 1]} : vector<2x384xf32> to vector<2x128xf32>
    %281 = vector.extract_strided_slice %278 {offsets = [0, 256], sizes = [2, 128], strides = [1, 1]} : vector<2x384xf32> to vector<2x128xf32>
    %282 = vector.extract_strided_slice %272 {offsets = [0, 384], sizes = [2, 128], strides = [1, 1]} : vector<2x512xf32> to vector<2x128xf32>
    %283 = math.tanh %282 : vector<2x128xf32>
    %284 = arith.mulf %280, %264 : vector<2x128xf32>
    %285 = arith.mulf %279, %283 : vector<2x128xf32>
    %286 = arith.addf %284, %285 : vector<2x128xf32>
    %287 = math.tanh %286 : vector<2x128xf32>
    %288 = arith.mulf %281, %287 : vector<2x128xf32>
    %c3 = arith.constant 3 : index
    %c0_67 = arith.constant 0 : index
    %c0_68 = arith.constant 0 : index
    %289 = vector.load %arg11[%c3, %c0_67, %c0_68] : memref<8x2x128xf32, #tpu.memory_space<vmem>>, vector<1x2x128xf32>
    %290 = vector.shape_cast %289 : vector<1x2x128xf32> to vector<2x128xf32>
    %291 = vector.shape_cast %286 : vector<2x128xf32> to vector<1x2x128xf32>
    tpu.vector_store %arg11[%c3, %c0_67, %c0_68], %291 {strides = array<i32>} : memref<8x2x128xf32, #tpu.memory_space<vmem>>, vector<1x2x128xf32>,
    %292 = tpu.concatenate %286, %288 in 1 : vector<2x128xf32>, vector<2x128xf32> -> vector<2x256xf32>
    %cst_69 = arith.constant dense<0.000000e+00> : vector<2x512xf32>
    %293 = tpu.matmul %292, %178, %cst_69 {dimension_numbers = #tpu.dot_dimension_numbers<[1], [0], [0], [1], [0, 0, 1, 1], [], []>} : vector<2x256xf32>, vector<256x512xf32>, vector<2x512xf32> -> vector<2x512xf32>
    %294 = arith.addf %177, %293 : vector<2x512xf32>
    %295 = vector.extract_strided_slice %294 {offsets = [0, 0], sizes = [2, 384], strides = [1, 1]} : vector<2x512xf32> to vector<2x384xf32>
    %296 = arith.negf %295 : vector<2x384xf32>
    %297 = math.exp %296 : vector<2x384xf32>
    %cst_70 = arith.constant 1.000000e+00 : f32
    %298 = vector.broadcast %cst_70 : f32 to vector<2x384xf32>
    %299 = arith.addf %298, %297 : vector<2x384xf32>
    %300 = arith.divf %298, %299 : vector<2x384xf32>
    %301 = vector.extract_strided_slice %300 {offsets = [0, 0], sizes = [2, 128], strides = [1, 1]} : vector<2x384xf32> to vector<2x128xf32>
    %302 = vector.extract_strided_slice %300 {offsets = [0, 128], sizes = [2, 128], strides = [1, 1]} : vector<2x384xf32> to vector<2x128xf32>
    %303 = vector.extract_strided_slice %300 {offsets = [0, 256], sizes = [2, 128], strides = [1, 1]} : vector<2x384xf32> to vector<2x128xf32>
    %304 = vector.extract_strided_slice %294 {offsets = [0, 384], sizes = [2, 128], strides = [1, 1]} : vector<2x512xf32> to vector<2x128xf32>
    %305 = math.tanh %304 : vector<2x128xf32>
    %306 = arith.mulf %302, %286 : vector<2x128xf32>
    %307 = arith.mulf %301, %305 : vector<2x128xf32>
    %308 = arith.addf %306, %307 : vector<2x128xf32>
    %309 = math.tanh %308 : vector<2x128xf32>
    %310 = arith.mulf %303, %309 : vector<2x128xf32>
    %c2 = arith.constant 2 : index
    %c0_71 = arith.constant 0 : index
    %c0_72 = arith.constant 0 : index
    %311 = vector.load %arg11[%c2, %c0_71, %c0_72] : memref<8x2x128xf32, #tpu.memory_space<vmem>>, vector<1x2x128xf32>
    %312 = vector.shape_cast %311 : vector<1x2x128xf32> to vector<2x128xf32>
    %313 = vector.shape_cast %308 : vector<2x128xf32> to vector<1x2x128xf32>
    tpu.vector_store %arg11[%c2, %c0_71, %c0_72], %313 {strides = array<i32>} : memref<8x2x128xf32, #tpu.memory_space<vmem>>, vector<1x2x128xf32>,
    %314 = tpu.concatenate %308, %310 in 1 : vector<2x128xf32>, vector<2x128xf32> -> vector<2x256xf32>
    %cst_73 = arith.constant dense<0.000000e+00> : vector<2x512xf32>
    %315 = tpu.matmul %314, %178, %cst_73 {dimension_numbers = #tpu.dot_dimension_numbers<[1], [0], [0], [1], [0, 0, 1, 1], [], []>} : vector<2x256xf32>, vector<256x512xf32>, vector<2x512xf32> -> vector<2x512xf32>
    %316 = arith.addf %177, %315 : vector<2x512xf32>
    %317 = vector.extract_strided_slice %316 {offsets = [0, 0], sizes = [2, 384], strides = [1, 1]} : vector<2x512xf32> to vector<2x384xf32>
    %318 = arith.negf %317 : vector<2x384xf32>
    %319 = math.exp %318 : vector<2x384xf32>
    %cst_74 = arith.constant 1.000000e+00 : f32
    %320 = vector.broadcast %cst_74 : f32 to vector<2x384xf32>
    %321 = arith.addf %320, %319 : vector<2x384xf32>
    %322 = arith.divf %320, %321 : vector<2x384xf32>
    %323 = vector.extract_strided_slice %322 {offsets = [0, 0], sizes = [2, 128], strides = [1, 1]} : vector<2x384xf32> to vector<2x128xf32>
    %324 = vector.extract_strided_slice %322 {offsets = [0, 128], sizes = [2, 128], strides = [1, 1]} : vector<2x384xf32> to vector<2x128xf32>
    %325 = vector.extract_strided_slice %322 {offsets = [0, 256], sizes = [2, 128], strides = [1, 1]} : vector<2x384xf32> to vector<2x128xf32>
    %326 = vector.extract_strided_slice %316 {offsets = [0, 384], sizes = [2, 128], strides = [1, 1]} : vector<2x512xf32> to vector<2x128xf32>
    %327 = math.tanh %326 : vector<2x128xf32>
    %328 = arith.mulf %324, %308 : vector<2x128xf32>
    %329 = arith.mulf %323, %327 : vector<2x128xf32>
    %330 = arith.addf %328, %329 : vector<2x128xf32>
    %331 = math.tanh %330 : vector<2x128xf32>
    %332 = arith.mulf %325, %331 : vector<2x128xf32>
    %c1 = arith.constant 1 : index
    %c0_75 = arith.constant 0 : index
    %c0_76 = arith.constant 0 : index
    %333 = vector.load %arg11[%c1, %c0_75, %c0_76] : memref<8x2x128xf32, #tpu.memory_space<vmem>>, vector<1x2x128xf32>
    %334 = vector.shape_cast %333 : vector<1x2x128xf32> to vector<2x128xf32>
    %335 = vector.shape_cast %330 : vector<2x128xf32> to vector<1x2x128xf32>
    tpu.vector_store %arg11[%c1, %c0_75, %c0_76], %335 {strides = array<i32>} : memref<8x2x128xf32, #tpu.memory_space<vmem>>, vector<1x2x128xf32>,
    %336 = tpu.concatenate %330, %332 in 1 : vector<2x128xf32>, vector<2x128xf32> -> vector<2x256xf32>
    %cst_77 = arith.constant dense<0.000000e+00> : vector<2x512xf32>
    %337 = tpu.matmul %336, %178, %cst_77 {dimension_numbers = #tpu.dot_dimension_numbers<[1], [0], [0], [1], [0, 0, 1, 1], [], []>} : vector<2x256xf32>, vector<256x512xf32>, vector<2x512xf32> -> vector<2x512xf32>
    %338 = arith.addf %177, %337 : vector<2x512xf32>
    %339 = vector.extract_strided_slice %338 {offsets = [0, 0], sizes = [2, 384], strides = [1, 1]} : vector<2x512xf32> to vector<2x384xf32>
    %340 = arith.negf %339 : vector<2x384xf32>
    %341 = math.exp %340 : vector<2x384xf32>
    %cst_78 = arith.constant 1.000000e+00 : f32
    %342 = vector.broadcast %cst_78 : f32 to vector<2x384xf32>
    %343 = arith.addf %342, %341 : vector<2x384xf32>
    %344 = arith.divf %342, %343 : vector<2x384xf32>
    %345 = vector.extract_strided_slice %344 {offsets = [0, 0], sizes = [2, 128], strides = [1, 1]} : vector<2x384xf32> to vector<2x128xf32>
    %346 = vector.extract_strided_slice %344 {offsets = [0, 128], sizes = [2, 128], strides = [1, 1]} : vector<2x384xf32> to vector<2x128xf32>
    %347 = vector.extract_strided_slice %338 {offsets = [0, 384], sizes = [2, 128], strides = [1, 1]} : vector<2x512xf32> to vector<2x128xf32>
    %348 = math.tanh %347 : vector<2x128xf32>
    %349 = arith.mulf %346, %330 : vector<2x128xf32>
    %350 = arith.mulf %345, %348 : vector<2x128xf32>
    %351 = arith.addf %349, %350 : vector<2x128xf32>
    %c0_79 = arith.constant 0 : index
    %c0_80 = arith.constant 0 : index
    %c0_81 = arith.constant 0 : index
    %352 = vector.load %arg11[%c0_79, %c0_80, %c0_81] : memref<8x2x128xf32, #tpu.memory_space<vmem>>, vector<1x2x128xf32>
    %353 = vector.shape_cast %352 : vector<1x2x128xf32> to vector<2x128xf32>
    %354 = vector.shape_cast %351 : vector<2x128xf32> to vector<1x2x128xf32>
    tpu.vector_store %arg11[%c0_79, %c0_80, %c0_81], %354 {strides = array<i32>} : memref<8x2x128xf32, #tpu.memory_space<vmem>>, vector<1x2x128xf32>,
    return
  }
}

</mosaic_0001>

<llo_original>
// kernel: lstm_autoencoder_forward.1
$region0: #{lstm_autoencoder_forward.1}
  #allocation0 [shape = 'u32[]', space=smem, size = 0x4, offset = 0x4, fixed_abs, tag = 'smem constant byte address 0x4 - core index']
  #allocation1 [shape = 'u32[144,128]{1,0:T(1,128)}', space=vmem, size = 0x12000, scoped, tag = 'internal scratch']
  %s0 = inlined_call_operand.vmem [shape: f32[16,16], index: 0, kind: input, shape index: {}]
  %s1 = inlined_call_operand.vmem [shape: f32[16,512], index: 1, kind: input, shape index: {}]
  %s2 = inlined_call_operand.vmem [shape: f32[128,512], index: 2, kind: input, shape index: {}]
  %s3 = inlined_call_operand.vmem [shape: f32[1,512], index: 3, kind: input, shape index: {}]
  %s4 = inlined_call_operand.vmem [shape: f32[128,8], index: 4, kind: input, shape index: {}]
  %s5 = inlined_call_operand.vmem [shape: f32[1,8], index: 5, kind: input, shape index: {}]
  %s6 = inlined_call_operand.vmem [shape: f32[8,32], index: 6, kind: input, shape index: {}]
  %s7 = inlined_call_operand.vmem [shape: f32[1,32], index: 7, kind: input, shape index: {}]
  %s8 = inlined_call_operand.vmem [shape: f32[32,512], index: 8, kind: input, shape index: {}]
  %s9 = inlined_call_operand.vmem [shape: f32[256,512], index: 9, kind: input, shape index: {}]
  %s10 = inlined_call_operand.vmem [shape: f32[1,512], index: 10, kind: input, shape index: {}]
  %s11 = inlined_call_operand.vmem [shape: f32[8,2,128], index: 11, kind: output, shape index: {0}]
  %s12 = inlined_call_operand.hbm [shape: f32[2,8], index: 12, kind: output, shape index: {1}]
  %13 = xla_tuple %s11, %s12
  %s14 = sld [smem:[#allocation0]]
  $region62: #{lstm_autoencoder_forward.1} parent=0
    _
  %s16 = ssub.s32 1, %s14
  %s17 = scalar_select 0, %s16, %s14
  $region1: #{lstm_autoencoder_forward.1} parent=0
    #allocation2 [shape = 'u8[1024]{0}', space=vmem, size = 0x400, scoped, tag = 'output window, operand 1, single buffered']
    #allocation3 [shape = 's32[1]{0}', space=sflag, size = 0x4, scoped, tag = 'scoped memory for lstm_autoencoder_forward.1']
    %18 = vsyncpa [#allocation3], 0
    // Predicated region
    $region2: #{lstm_autoencoder_forward.1} parent=1 // pred_check
      _
    $region3: #{lstm_autoencoder_forward.1} parent=1 // pred_check_branch
      %20 = sbr.rel (0) target = $region5
    $region4: #{lstm_autoencoder_forward.1} parent=1 // pred_region
      _
    $region5: #{lstm_autoencoder_forward.1} parent=1 // pred_fallthru
      _
    // Predicated region
    $region6: #{lstm_autoencoder_forward.1} parent=1 // pred_check
      _
    $region7: #{lstm_autoencoder_forward.1} parent=1 // pred_check_branch
      %22 = sbr.rel (0) target = $region9
    $region8: #{lstm_autoencoder_forward.1} parent=1 // pred_region
      _
    $region9: #{lstm_autoencoder_forward.1} parent=1 // pred_fallthru
      _
    // Predicated region
    $region10: #{lstm_autoencoder_forward.1} parent=1 // pred_check
      _
    $region11: #{lstm_autoencoder_forward.1} parent=1 // pred_check_branch
      %24 = sbr.rel (0) target = $region13
    $region12: #{lstm_autoencoder_forward.1} parent=1 // pred_region
      _
    $region13: #{lstm_autoencoder_forward.1} parent=1 // pred_fallthru
      _
    // Predicated region
    $region14: #{lstm_autoencoder_forward.1} parent=1 // pred_check
      _
    $region15: #{lstm_autoencoder_forward.1} parent=1 // pred_check_branch
      %26 = sbr.rel (0) target = $region17
    $region16: #{lstm_autoencoder_forward.1} parent=1 // pred_region
      _
    $region17: #{lstm_autoencoder_forward.1} parent=1 // pred_fallthru
      _
    // Predicated region
    $region18: #{lstm_autoencoder_forward.1} parent=1 // pred_check
      _
    $region19: #{lstm_autoencoder_forward.1} parent=1 // pred_check_branch
      %28 = sbr.rel (0) target = $region21
    $region20: #{lstm_autoencoder_forward.1} parent=1 // pred_region
      _
    $region21: #{lstm_autoencoder_forward.1} parent=1 // pred_fallthru
      _
    // Predicated region
    $region22: #{lstm_autoencoder_forward.1} parent=1 // pred_check
      _
    $region23: #{lstm_autoencoder_forward.1} parent=1 // pred_check_branch
      %30 = sbr.rel (0) target = $region25
    $region24: #{lstm_autoencoder_forward.1} parent=1 // pred_region
      _
    $region25: #{lstm_autoencoder_forward.1} parent=1 // pred_fallthru
      _
    // Predicated region
    $region26: #{lstm_autoencoder_forward.1} parent=1 // pred_check
      _
    $region27: #{lstm_autoencoder_forward.1} parent=1 // pred_check_branch
      %32 = sbr.rel (0) target = $region29
    $region28: #{lstm_autoencoder_forward.1} parent=1 // pred_region
      _
    $region29: #{lstm_autoencoder_forward.1} parent=1 // pred_fallthru
      _
    // Predicated region
    $region30: #{lstm_autoencoder_forward.1} parent=1 // pred_check
      _
    $region31: #{lstm_autoencoder_forward.1} parent=1 // pred_check_branch
      %34 = sbr.rel (0) target = $region33
    $region32: #{lstm_autoencoder_forward.1} parent=1 // pred_region
      _
    $region33: #{lstm_autoencoder_forward.1} parent=1 // pred_fallthru
      _
    // Predicated region
    $region34: #{lstm_autoencoder_forward.1} parent=1 // pred_check
      _
    $region35: #{lstm_autoencoder_forward.1} parent=1 // pred_check_branch
      %36 = sbr.rel (0) target = $region37
    $region36: #{lstm_autoencoder_forward.1} parent=1 // pred_region
      _
    $region37: #{lstm_autoencoder_forward.1} parent=1 // pred_fallthru
      _
    // Predicated region
    $region38: #{lstm_autoencoder_forward.1} parent=1 // pred_check
      _
    $region39: #{lstm_autoencoder_forward.1} parent=1 // pred_check_branch
      %38 = sbr.rel (0) target = $region41
    $region40: #{lstm_autoencoder_forward.1} parent=1 // pred_region
      _
    $region41: #{lstm_autoencoder_forward.1} parent=1 // pred_fallthru
      _
    // Predicated region
    $region42: #{lstm_autoencoder_forward.1} parent=1 // pred_check
      _
    $region43: #{lstm_autoencoder_forward.1} parent=1 // pred_check_branch
      %40 = sbr.rel (0) target = $region45
    $region44: #{lstm_autoencoder_forward.1} parent=1 // pred_region
      _
    $region45: #{lstm_autoencoder_forward.1} parent=1 // pred_fallthru
      _
    %v41 = vld [vmem:[%s0] sm:$0xff]
    %v42 = vld [vmem:[%s0 + $0x8] sm:$0xff]
    %v43 = vld [vmem:[%s1] sm:$0xff]
    %v44 = vld [vmem:[%s1 + $0x8] sm:$0xff]
    %v45 = vld [vmem:[%s1 + $0x10] sm:$0xff]
    %v46 = vld [vmem:[%s1 + $0x18] sm:$0xff]
    %v47 = vld [vmem:[%s1 + $0x20] sm:$0xff]
    %v48 = vld [vmem:[%s1 + $0x28] sm:$0xff]
    %v49 = vld [vmem:[%s1 + $0x30] sm:$0xff]
    %v50 = vld [vmem:[%s1 + $0x38] sm:$0xff]
    %v51 = vld [vmem:[%s3] sm:$0xf]
    %v53 = vlaneseq
    %v54 = vshrl.u32 %v53, 7
    %v55 = vsub.s32 0, %v54
    %v56 = vrot.slane %v51, %v55
    %v57 = vlaneseq
    %v58 = vshrl.u32 %v57, 7
    %v59 = vsub.s32 1, %v58
    %v60 = vrot.slane %v51, %v59
    %v61 = vlaneseq
    %v62 = vshrl.u32 %v61, 7
    %v63 = vsub.s32 2, %v62
    %v64 = vrot.slane %v51, %v63
    %v65 = vlaneseq
    %v66 = vshrl.u32 %v65, 7
    %v67 = vsub.s32 3, %v66
    %v68 = vrot.slane %v51, %v67
    %vm73 = vcmask 130048
    %v75 = vsel %vm73, %v41, 0
    %v78 = vsel %vm73, %v42, 0
    %80 = vmatprep.subr.mxu0 %v44
    %81 = vmatpush1.msra.mxu0 %v43
    %82 = vmatprep.subr.mxu0 %v48
    %83 = vmatpush1.msra.mxu0 %v47
    %84 = vmatprep.subr.mxu0 0.0
    %85 = vmatpush1.msra.mxu0 0.0
    %86 = vmatprep.subr.mxu0 0.0
    %87 = vmatpush1.msra.mxu0 0.0
    %88 = vmatprep.subr.mxu0 0.0
    %89 = vmatpush1.msra.mxu0 0.0
    %90 = vmatprep.subr.mxu0 0.0
    %91 = vmatpush1.msra.mxu0 0.0
    %92 = vmatprep.subr.mxu0 0.0
    %93 = vmatpush1.msra.mxu0 0.0
    %94 = vmatprep.subr.mxu0 0.0
    %95 = vmatpush1.msra.mxu0 0.0
    %96 = vmatprep.subr.mxu0 0.0
    %97 = vmatpush1.msra.mxu0 0.0
    %98 = vmatprep.subr.mxu0 0.0
    %99 = vmatpush1.msra.mxu0 0.0
    %100 = vmatprep.subr.mxu0 0.0
    %101 = vmatpush1.msra.mxu0 0.0
    %102 = vmatprep.subr.mxu0 0.0
    %103 = vmatpush1.msra.mxu0 0.0
    %104 = vmatprep.subr.mxu0 0.0
    %105 = vmatpush1.msra.mxu0 0.0
    %106 = vmatprep.subr.mxu0 0.0
    %107 = vmatpush1.msra.mxu0 0.0
    %108 = vmatprep.subr.mxu0 0.0
    %109 = vmatpush1.msra.mxu0 0.0
    %110 = vmatprep.subr.mxu0 0.0
    %111 = vmatpush1.msra.mxu0 0.0
    %112 = vmatprep.subr.mxu0 0.0
    %113 = vmatpush1.msra.mxu0 0.0
    %114 = vmatprep.subr.mxu0 0.0
    %115 = vmatpush1.msra.mxu0 0.0
    %116 = vmatprep.subr.mxu0 0.0
    %117 = vmatpush1.msra.mxu0 0.0
    %118 = vmatprep.subr.mxu0 0.0
    %119 = vmatpush1.msra.mxu0 0.0
    %120 = vmatprep.subr.mxu0 0.0
    %121 = vmatpush1.msra.mxu0 0.0
    %122 = vmatprep.subr.mxu0 0.0
    %123 = vmatpush1.msra.mxu0 0.0
    %124 = vmatprep.subr.mxu0 0.0
    %125 = vmatpush1.msra.mxu0 0.0
    %126 = vmatprep.subr.mxu0 0.0
    %127 = vmatpush1.msra.mxu0 0.0
    %128 = vmatprep.subr.mxu0 0.0
    %129 = vmatpush1.msra.mxu0 0.0
    %130 = vmatprep.subr.mxu0 0.0
    %131 = vmatpush1.msra.mxu0 0.0
    %132 = vmatprep.subr.mxu0 0.0
    %133 = vmatpush1.msra.mxu0 0.0
    %134 = vmatprep.subr.mxu0 0.0
    %135 = vmatpush1.msra.mxu0 0.0
    %136 = vmatprep.subr.mxu0 0.0
    %137 = vmatpush1.msra.mxu0 0.0
    %138 = vmatprep.subr.mxu0 0.0
    %139 = vmatpush1.msra.mxu0 0.0
    %140 = vmatprep.subr.mxu0 0.0
    %141 = vmatpush1.msra.mxu0 0.0
    %142 = vmatprep.subr.mxu0 0.0
    %143 = vmatpush1.msra.mxu0 0.0
    %144 = vmatprep.mubr.f32.mxu0 0.0
    %145 = vmatmul.mubr.f32.gmra.mrb[0].mxu0 %v75
    %v146 = vpop.f32.mrb[0].mxu0
    %v147 = vadd.f32 %v56, %v146
    %v148 = vpop.f32.mrb[0].mxu0
    %v149 = vadd.f32 %v60, %v148
    %150 = vmatprep.mubr.f32.mxu0 0.0
    %151 = vmatmul.mubr.f32.gmra.mrb[0].mxu0 %v78
    %v152 = vpop.f32.mrb[0].mxu0
    %v153 = vadd.f32 %v56, %v152
    %v154 = vpop.f32.mrb[0].mxu0
    %v155 = vadd.f32 %v60, %v154
    %156 = vdwg.mxu0
    %157 = vmatprep.subr.mxu0 %v46
    %158 = vmatpush1.msra.mxu0 %v45
    %159 = vmatprep.subr.mxu0 %v50
    %160 = vmatpush1.msra.mxu0 %v49
    %161 = vmatprep.subr.mxu0 0.0
    %162 = vmatpush1.msra.mxu0 0.0
    %163 = vmatprep.subr.mxu0 0.0
    %164 = vmatpush1.msra.mxu0 0.0
    %165 = vmatprep.subr.mxu0 0.0
    %166 = vmatpush1.msra.mxu0 0.0
    %167 = vmatprep.subr.mxu0 0.0
    %168 = vmatpush1.msra.mxu0 0.0
    %169 = vmatprep.subr.mxu0 0.0
    %170 = vmatpush1.msra.mxu0 0.0
    %171 = vmatprep.subr.mxu0 0.0
    %172 = vmatpush1.msra.mxu0 0.0
    %173 = vmatprep.subr.mxu0 0.0
    %174 = vmatpush1.msra.mxu0 0.0
    %175 = vmatprep.subr.mxu0 0.0
    %176 = vmatpush1.msra.mxu0 0.0
    %177 = vmatprep.subr.mxu0 0.0
    %178 = vmatpush1.msra.mxu0 0.0
    %179 = vmatprep.subr.mxu0 0.0
    %180 = vmatpush1.msra.mxu0 0.0
    %181 = vmatprep.subr.mxu0 0.0
    %182 = vmatpush1.msra.mxu0 0.0
    %183 = vmatprep.subr.mxu0 0.0
    %184 = vmatpush1.msra.mxu0 0.0
    %185 = vmatprep.subr.mxu0 0.0
    %186 = vmatpush1.msra.mxu0 0.0
    %187 = vmatprep.subr.mxu0 0.0
    %188 = vmatpush1.msra.mxu0 0.0
    %189 = vmatprep.subr.mxu0 0.0
    %190 = vmatpush1.msra.mxu0 0.0
    %191 = vmatprep.subr.mxu0 0.0
    %192 = vmatpush1.msra.mxu0 0.0
    %193 = vmatprep.subr.mxu0 0.0
    %194 = vmatpush1.msra.mxu0 0.0
    %195 = vmatprep.subr.mxu0 0.0
    %196 = vmatpush1.msra.mxu0 0.0
    %197 = vmatprep.subr.mxu0 0.0
    %198 = vmatpush1.msra.mxu0 0.0
    %199 = vmatprep.subr.mxu0 0.0
    %200 = vmatpush1.msra.mxu0 0.0
    %201 = vmatprep.subr.mxu0 0.0
    %202 = vmatpush1.msra.mxu0 0.0
    %203 = vmatprep.subr.mxu0 0.0
    %204 = vmatpush1.msra.mxu0 0.0
    %205 = vmatprep.subr.mxu0 0.0
    %206 = vmatpush1.msra.mxu0 0.0
    %207 = vmatprep.subr.mxu0 0.0
    %208 = vmatpush1.msra.mxu0 0.0
    %209 = vmatprep.subr.mxu0 0.0
    %210 = vmatpush1.msra.mxu0 0.0
    %211 = vmatprep.subr.mxu0 0.0
    %212 = vmatpush1.msra.mxu0 0.0
    %213 = vmatprep.subr.mxu0 0.0
    %214 = vmatpush1.msra.mxu0 0.0
    %215 = vmatprep.subr.mxu0 0.0
    %216 = vmatpush1.msra.mxu0 0.0
    %217 = vmatprep.subr.mxu0 0.0
    %218 = vmatpush1.msra.mxu0 0.0
    %219 = vmatprep.subr.mxu0 0.0
    %220 = vmatpush1.msra.mxu0 0.0
    %221 = vmatprep.mubr.f32.mxu0 0.0
    %222 = vmatmul.mubr.f32.gmra.mrb[0].mxu0 %v75
    %v223 = vpop.f32.mrb[0].mxu0
    %v224 = vadd.f32 %v64, %v223
    %v225 = vpop.f32.mrb[0].mxu0
    %v226 = vadd.f32 %v68, %v225
    %227 = vmatprep.mubr.f32.mxu0 0.0
    %228 = vmatmul.mubr.f32.gmra.mrb[0].mxu0 %v78
    %v229 = vpop.f32.mrb[0].mxu0
    %v230 = vadd.f32 %v64, %v229
    %v231 = vpop.f32.mrb[0].mxu0
    %v232 = vadd.f32 %v68, %v231
    %233 = vdwg.mxu0
    %v234 = vld [vmem:[%s2] sm:$0xff]
    %v235 = vld [vmem:[%s2 + $0x8] sm:$0xff]
    %v236 = vld [vmem:[%s2 + $0x10] sm:$0xff]
    %v237 = vld [vmem:[%s2 + $0x18] sm:$0xff]
    %v238 = vld [vmem:[%s2 + $0x20] sm:$0xff]
    %v239 = vld [vmem:[%s2 + $0x28] sm:$0xff]
    %v240 = vld [vmem:[%s2 + $0x30] sm:$0xff]
    %v241 = vld [vmem:[%s2 + $0x38] sm:$0xff]
    %v242 = vld [vmem:[%s2 + $0x40] sm:$0xff]
    %v243 = vld [vmem:[%s2 + $0x48] sm:$0xff]
    %v244 = vld [vmem:[%s2 + $0x50] sm:$0xff]
    %v245 = vld [vmem:[%s2 + $0x58] sm:$0xff]
    %v246 = vld [vmem:[%s2 + $0x60] sm:$0xff]
    %v247 = vld [vmem:[%s2 + $0x68] sm:$0xff]
    %v248 = vld [vmem:[%s2 + $0x70] sm:$0xff]
    %v249 = vld [vmem:[%s2 + $0x78] sm:$0xff]
    %v250 = vld [vmem:[%s2 + $0x80] sm:$0xff]
    %v251 = vld [vmem:[%s2 + $0x88] sm:$0xff]
    %v252 = vld [vmem:[%s2 + $0x90] sm:$0xff]
    %v253 = vld [vmem:[%s2 + $0x98] sm:$0xff]
    %v254 = vld [vmem:[%s2 + $0xa0] sm:$0xff]
    %v255 = vld [vmem:[%s2 + $0xa8] sm:$0xff]
    %v256 = vld [vmem:[%s2 + $0xb0] sm:$0xff]
    %v257 = vld [vmem:[%s2 + $0xb8] sm:$0xff]
    %v258 = vld [vmem:[%s2 + $0xc0] sm:$0xff]
    %v259 = vld [vmem:[%s2 + $0xc8] sm:$0xff]
    %v260 = vld [vmem:[%s2 + $0xd0] sm:$0xff]
    %v261 = vld [vmem:[%s2 + $0xd8] sm:$0xff]
    %v262 = vld [vmem:[%s2 + $0xe0] sm:$0xff]
    %v263 = vld [vmem:[%s2 + $0xe8] sm:$0xff]
    %v264 = vld [vmem:[%s2 + $0xf0] sm:$0xff]
    %v265 = vld [vmem:[%s2 + $0xf8] sm:$0xff]
    %v266 = vld [vmem:[%s2 + $0x100] sm:$0xff]
    %v267 = vld [vmem:[%s2 + $0x108] sm:$0xff]
    %v268 = vld [vmem:[%s2 + $0x110] sm:$0xff]
    %v269 = vld [vmem:[%s2 + $0x118] sm:$0xff]
    %v270 = vld [vmem:[%s2 + $0x120] sm:$0xff]
    %v271 = vld [vmem:[%s2 + $0x128] sm:$0xff]
    %v272 = vld [vmem:[%s2 + $0x130] sm:$0xff]
    %v273 = vld [vmem:[%s2 + $0x138] sm:$0xff]
    %v274 = vld [vmem:[%s2 + $0x140] sm:$0xff]
    %v275 = vld [vmem:[%s2 + $0x148] sm:$0xff]
    %v276 = vld [vmem:[%s2 + $0x150] sm:$0xff]
    %v277 = vld [vmem:[%s2 + $0x158] sm:$0xff]
    %v278 = vld [vmem:[%s2 + $0x160] sm:$0xff]
    %v279 = vld [vmem:[%s2 + $0x168] sm:$0xff]
    %v280 = vld [vmem:[%s2 + $0x170] sm:$0xff]
    %v281 = vld [vmem:[%s2 + $0x178] sm:$0xff]
    %v282 = vld [vmem:[%s2 + $0x180] sm:$0xff]
    %v283 = vld [vmem:[%s2 + $0x188] sm:$0xff]
    %v284 = vld [vmem:[%s2 + $0x190] sm:$0xff]
    %v285 = vld [vmem:[%s2 + $0x198] sm:$0xff]
    %v286 = vld [vmem:[%s2 + $0x1a0] sm:$0xff]
    %v287 = vld [vmem:[%s2 + $0x1a8] sm:$0xff]
    %v288 = vld [vmem:[%s2 + $0x1b0] sm:$0xff]
    %v289 = vld [vmem:[%s2 + $0x1b8] sm:$0xff]
    %v290 = vld [vmem:[%s2 + $0x1c0] sm:$0xff]
    %v291 = vld [vmem:[%s2 + $0x1c8] sm:$0xff]
    %v292 = vld [vmem:[%s2 + $0x1d0] sm:$0xff]
    %v293 = vld [vmem:[%s2 + $0x1d8] sm:$0xff]
    %v294 = vld [vmem:[%s2 + $0x1e0] sm:$0xff]
    %v295 = vld [vmem:[%s2 + $0x1e8] sm:$0xff]
    %v296 = vld [vmem:[%s2 + $0x1f0] sm:$0xff]
    %v297 = vld [vmem:[%s2 + $0x1f8] sm:$0xff]
    %298 = vmatprep.subr.mxu0 %v235
    %299 = vmatpush1.msra.mxu0 %v234
    %300 = vmatprep.subr.mxu0 %v239
    %301 = vmatpush1.msra.mxu0 %v238
    %302 = vmatprep.subr.mxu0 %v243
    %303 = vmatpush1.msra.mxu0 %v242
    %304 = vmatprep.subr.mxu0 %v247
    %305 = vmatpush1.msra.mxu0 %v246
    %306 = vmatprep.subr.mxu0 %v251
    %307 = vmatpush1.msra.mxu0 %v250
    %308 = vmatprep.subr.mxu0 %v255
    %309 = vmatpush1.msra.mxu0 %v254
    %310 = vmatprep.subr.mxu0 %v259
    %311 = vmatpush1.msra.mxu0 %v258
    %312 = vmatprep.subr.mxu0 %v263
    %313 = vmatpush1.msra.mxu0 %v262
    %314 = vmatprep.subr.mxu0 %v267
    %315 = vmatpush1.msra.mxu0 %v266
    %316 = vmatprep.subr.mxu0 %v271
    %317 = vmatpush1.msra.mxu0 %v270
    %318 = vmatprep.subr.mxu0 %v275
    %319 = vmatpush1.msra.mxu0 %v274
    %320 = vmatprep.subr.mxu0 %v279
    %321 = vmatpush1.msra.mxu0 %v278
    %322 = vmatprep.subr.mxu0 %v283
    %323 = vmatpush1.msra.mxu0 %v282
    %324 = vmatprep.subr.mxu0 %v287
    %325 = vmatpush1.msra.mxu0 %v286
    %326 = vmatprep.subr.mxu0 %v291
    %327 = vmatpush1.msra.mxu0 %v290
    %328 = vmatprep.subr.mxu0 %v295
    %329 = vmatpush1.msra.mxu0 %v294
    %330 = vmatprep.subr.mxu0 0.0
    %331 = vmatpush1.msra.mxu0 0.0
    %332 = vmatprep.subr.mxu0 0.0
    %333 = vmatpush1.msra.mxu0 0.0
    %334 = vmatprep.subr.mxu0 0.0
    %335 = vmatpush1.msra.mxu0 0.0
    %336 = vmatprep.subr.mxu0 0.0
    %337 = vmatpush1.msra.mxu0 0.0
    %338 = vmatprep.subr.mxu0 0.0
    %339 = vmatpush1.msra.mxu0 0.0
    %340 = vmatprep.subr.mxu0 0.0
    %341 = vmatpush1.msra.mxu0 0.0
    %342 = vmatprep.subr.mxu0 0.0
    %343 = vmatpush1.msra.mxu0 0.0
    %344 = vmatprep.subr.mxu0 0.0
    %345 = vmatpush1.msra.mxu0 0.0
    %346 = vmatprep.subr.mxu0 0.0
    %347 = vmatpush1.msra.mxu0 0.0
    %348 = vmatprep.subr.mxu0 0.0
    %349 = vmatpush1.msra.mxu0 0.0
    %350 = vmatprep.subr.mxu0 0.0
    %351 = vmatpush1.msra.mxu0 0.0
    %352 = vmatprep.subr.mxu0 0.0
    %353 = vmatpush1.msra.mxu0 0.0
    %354 = vmatprep.subr.mxu0 0.0
    %355 = vmatpush1.msra.mxu0 0.0
    %356 = vmatprep.subr.mxu0 0.0
    %357 = vmatpush1.msra.mxu0 0.0
    %358 = vmatprep.subr.mxu0 0.0
    %359 = vmatpush1.msra.mxu0 0.0
    %360 = vmatprep.subr.mxu0 0.0
    %361 = vmatpush1.msra.mxu0 0.0
    %362 = vmatprep.mubr.f32.mxu0 0.0
    %363 = vmatmul.mubr.f32.gmra.mrb[0].mxu0 0.0
    %v364 = vpop.f32.mrb[0].mxu0
    %v365 = vadd.f32 0.0, %v364
    %v366 = vpop.f32.mrb[0].mxu0
    %v367 = vadd.f32 0.0, %v366
    %368 = vdwg.mxu0
    %369 = vmatprep.subr.mxu0 %v237
    %370 = vmatpush1.msra.mxu0 %v236
    %371 = vmatprep.subr.mxu0 %v241
    %372 = vmatpush1.msra.mxu0 %v240
    %373 = vmatprep.subr.mxu0 %v245
    %374 = vmatpush1.msra.mxu0 %v244
    %375 = vmatprep.subr.mxu0 %v249
    %376 = vmatpush1.msra.mxu0 %v248
    %377 = vmatprep.subr.mxu0 %v253
    %378 = vmatpush1.msra.mxu0 %v252
    %379 = vmatprep.subr.mxu0 %v257
    %380 = vmatpush1.msra.mxu0 %v256
    %381 = vmatprep.subr.mxu0 %v261
    %382 = vmatpush1.msra.mxu0 %v260
    %383 = vmatprep.subr.mxu0 %v265
    %384 = vmatpush1.msra.mxu0 %v264
    %385 = vmatprep.subr.mxu0 %v269
    %386 = vmatpush1.msra.mxu0 %v268
    %387 = vmatprep.subr.mxu0 %v273
    %388 = vmatpush1.msra.mxu0 %v272
    %389 = vmatprep.subr.mxu0 %v277
    %390 = vmatpush1.msra.mxu0 %v276
    %391 = vmatprep.subr.mxu0 %v281
    %392 = vmatpush1.msra.mxu0 %v280
    %393 = vmatprep.subr.mxu0 %v285
    %394 = vmatpush1.msra.mxu0 %v284
    %395 = vmatprep.subr.mxu0 %v289
    %396 = vmatpush1.msra.mxu0 %v288
    %397 = vmatprep.subr.mxu0 %v293
    %398 = vmatpush1.msra.mxu0 %v292
    %399 = vmatprep.subr.mxu0 %v297
    %400 = vmatpush1.msra.mxu0 %v296
    %401 = vmatprep.subr.mxu0 0.0
    %402 = vmatpush1.msra.mxu0 0.0
    %403 = vmatprep.subr.mxu0 0.0
    %404 = vmatpush1.msra.mxu0 0.0
    %405 = vmatprep.subr.mxu0 0.0
    %406 = vmatpush1.msra.mxu0 0.0
    %407 = vmatprep.subr.mxu0 0.0
    %408 = vmatpush1.msra.mxu0 0.0
    %409 = vmatprep.subr.mxu0 0.0
    %410 = vmatpush1.msra.mxu0 0.0
    %411 = vmatprep.subr.mxu0 0.0
    %412 = vmatpush1.msra.mxu0 0.0
    %413 = vmatprep.subr.mxu0 0.0
    %414 = vmatpush1.msra.mxu0 0.0
    %415 = vmatprep.subr.mxu0 0.0
    %416 = vmatpush1.msra.mxu0 0.0
    %417 = vmatprep.subr.mxu0 0.0
    %418 = vmatpush1.msra.mxu0 0.0
    %419 = vmatprep.subr.mxu0 0.0
    %420 = vmatpush1.msra.mxu0 0.0
    %421 = vmatprep.subr.mxu0 0.0
    %422 = vmatpush1.msra.mxu0 0.0
    %423 = vmatprep.subr.mxu0 0.0
    %424 = vmatpush1.msra.mxu0 0.0
    %425 = vmatprep.subr.mxu0 0.0
    %426 = vmatpush1.msra.mxu0 0.0
    %427 = vmatprep.subr.mxu0 0.0
    %428 = vmatpush1.msra.mxu0 0.0
    %429 = vmatprep.subr.mxu0 0.0
    %430 = vmatpush1.msra.mxu0 0.0
    %431 = vmatprep.subr.mxu0 0.0
    %432 = vmatpush1.msra.mxu0 0.0
    %433 = vmatprep.mubr.f32.mxu0 0.0
    %434 = vmatmul.mubr.f32.gmra.mrb[0].mxu0 0.0
    %v435 = vpop.f32.mrb[0].mxu0
    %v436 = vadd.f32 0.0, %v435
    %v437 = vpop.f32.mrb[0].mxu0
    %v438 = vadd.f32 0.0, %v437
    %439 = vdwg.mxu0
    %v440 = vadd.f32 %v147, %v365
    %v441 = vadd.f32 %v149, %v367
    %v442 = vadd.f32 %v224, %v436
    %v443 = vadd.f32 %v226, %v438
    %v444 = vxor.u32 %v440, 2147483648
    %v445 = vxor.u32 %v441, 2147483648
    %v446 = vxor.u32 %v442, 2147483648
    %v447 = vmul.f32 %v444, 1.442695
    %v448 = vpow.pop %v447
    %v449 = vmul.f32 %v445, 1.442695
    %v450 = vpow.pop %v449
    %v451 = vmul.f32 %v446, 1.442695
    %v452 = vpow.pop %v451
    %v453 = vadd.f32 %v448, 1.0
    %v454 = vadd.f32 %v450, 1.0
    %v455 = vadd.f32 %v452, 1.0
    %v456 = vrcp.pop %v453
    %v457 = vmul.f32 1.0, %v456
    %v458 = vrcp.pop %v454
    %v459 = vmul.f32 1.0, %v458
    %v460 = vrcp.pop %v455
    %v461 = vmul.f32 1.0, %v460
    %v462 = vtanh.pop %v443
    %v463 = vmul.f32 %v459, 0.0
    %v464 = vmul.f32 %v457, %v462
    %v465 = vadd.f32 %v463, %v464
    %v466 = vtanh.pop %v465
    %v467 = vmul.f32 %v461, %v466
    %468 = vmatprep.subr.mxu0 %v235
    %469 = vmatpush1.msra.mxu0 %v234
    %470 = vmatprep.subr.mxu0 %v239
    %471 = vmatpush1.msra.mxu0 %v238
    %472 = vmatprep.subr.mxu0 %v243
    %473 = vmatpush1.msra.mxu0 %v242
    %474 = vmatprep.subr.mxu0 %v247
    %475 = vmatpush1.msra.mxu0 %v246
    %476 = vmatprep.subr.mxu0 %v251
    %477 = vmatpush1.msra.mxu0 %v250
    %478 = vmatprep.subr.mxu0 %v255
    %479 = vmatpush1.msra.mxu0 %v254
    %480 = vmatprep.subr.mxu0 %v259
    %481 = vmatpush1.msra.mxu0 %v258
    %482 = vmatprep.subr.mxu0 %v263
    %483 = vmatpush1.msra.mxu0 %v262
    %484 = vmatprep.subr.mxu0 %v267
    %485 = vmatpush1.msra.mxu0 %v266
    %486 = vmatprep.subr.mxu0 %v271
    %487 = vmatpush1.msra.mxu0 %v270
    %488 = vmatprep.subr.mxu0 %v275
    %489 = vmatpush1.msra.mxu0 %v274
    %490 = vmatprep.subr.mxu0 %v279
    %491 = vmatpush1.msra.mxu0 %v278
    %492 = vmatprep.subr.mxu0 %v283
    %493 = vmatpush1.msra.mxu0 %v282
    %494 = vmatprep.subr.mxu0 %v287
    %495 = vmatpush1.msra.mxu0 %v286
    %496 = vmatprep.subr.mxu0 %v291
    %497 = vmatpush1.msra.mxu0 %v290
    %498 = vmatprep.subr.mxu0 %v295
    %499 = vmatpush1.msra.mxu0 %v294
    %500 = vmatprep.subr.mxu0 0.0
    %501 = vmatpush1.msra.mxu0 0.0
    %502 = vmatprep.subr.mxu0 0.0
    %503 = vmatpush1.msra.mxu0 0.0
    %504 = vmatprep.subr.mxu0 0.0
    %505 = vmatpush1.msra.mxu0 0.0
    %506 = vmatprep.subr.mxu0 0.0
    %507 = vmatpush1.msra.mxu0 0.0
    %508 = vmatprep.subr.mxu0 0.0
    %509 = vmatpush1.msra.mxu0 0.0
    %510 = vmatprep.subr.mxu0 0.0
    %511 = vmatpush1.msra.mxu0 0.0
    %512 = vmatprep.subr.mxu0 0.0
    %513 = vmatpush1.msra.mxu0 0.0
    %514 = vmatprep.subr.mxu0 0.0
    %515 = vmatpush1.msra.mxu0 0.0
    %516 = vmatprep.subr.mxu0 0.0
    %517 = vmatpush1.msra.mxu0 0.0
    %518 = vmatprep.subr.mxu0 0.0
    %519 = vmatpush1.msra.mxu0 0.0
    %520 = vmatprep.subr.mxu0 0.0
    %521 = vmatpush1.msra.mxu0 0.0
    %522 = vmatprep.subr.mxu0 0.0
    %523 = vmatpush1.msra.mxu0 0.0
    %524 = vmatprep.subr.mxu0 0.0
    %525 = vmatpush1.msra.mxu0 0.0
    %526 = vmatprep.subr.mxu0 0.0
    %527 = vmatpush1.msra.mxu0 0.0
    %528 = vmatprep.subr.mxu0 0.0
    %529 = vmatpush1.msra.mxu0 0.0
    %530 = vmatprep.subr.mxu0 0.0
    %531 = vmatpush1.msra.mxu0 0.0
    %532 = vmatprep.mubr.f32.mxu0 0.0
    %533 = vmatmul.mubr.f32.gmra.mrb[0].mxu0 %v467
    %v534 = vpop.f32.mrb[0].mxu0
    %v535 = vadd.f32 0.0, %v534
    %v536 = vpop.f32.mrb[0].mxu0
    %v537 = vadd.f32 0.0, %v536
    %538 = vdwg.mxu0
    %539 = vmatprep.subr.mxu0 %v237
    %540 = vmatpush1.msra.mxu0 %v236
    %541 = vmatprep.subr.mxu0 %v241
    %542 = vmatpush1.msra.mxu0 %v240
    %543 = vmatprep.subr.mxu0 %v245
    %544 = vmatpush1.msra.mxu0 %v244
    %545 = vmatprep.subr.mxu0 %v249
    %546 = vmatpush1.msra.mxu0 %v248
    %547 = vmatprep.subr.mxu0 %v253
    %548 = vmatpush1.msra.mxu0 %v252
    %549 = vmatprep.subr.mxu0 %v257
    %550 = vmatpush1.msra.mxu0 %v256
    %551 = vmatprep.subr.mxu0 %v261
    %552 = vmatpush1.msra.mxu0 %v260
    %553 = vmatprep.subr.mxu0 %v265
    %554 = vmatpush1.msra.mxu0 %v264
    %555 = vmatprep.subr.mxu0 %v269
    %556 = vmatpush1.msra.mxu0 %v268
    %557 = vmatprep.subr.mxu0 %v273
    %558 = vmatpush1.msra.mxu0 %v272
    %559 = vmatprep.subr.mxu0 %v277
    %560 = vmatpush1.msra.mxu0 %v276
    %561 = vmatprep.subr.mxu0 %v281
    %562 = vmatpush1.msra.mxu0 %v280
    %563 = vmatprep.subr.mxu0 %v285
    %564 = vmatpush1.msra.mxu0 %v284
    %565 = vmatprep.subr.mxu0 %v289
    %566 = vmatpush1.msra.mxu0 %v288
    %567 = vmatprep.subr.mxu0 %v293
    %568 = vmatpush1.msra.mxu0 %v292
    %569 = vmatprep.subr.mxu0 %v297
    %570 = vmatpush1.msra.mxu0 %v296
    %571 = vmatprep.subr.mxu0 0.0
    %572 = vmatpush1.msra.mxu0 0.0
    %573 = vmatprep.subr.mxu0 0.0
    %574 = vmatpush1.msra.mxu0 0.0
    %575 = vmatprep.subr.mxu0 0.0
    %576 = vmatpush1.msra.mxu0 0.0
    %577 = vmatprep.subr.mxu0 0.0
    %578 = vmatpush1.msra.mxu0 0.0
    %579 = vmatprep.subr.mxu0 0.0
    %580 = vmatpush1.msra.mxu0 0.0
    %581 = vmatprep.subr.mxu0 0.0
    %582 = vmatpush1.msra.mxu0 0.0
    %583 = vmatprep.subr.mxu0 0.0
    %584 = vmatpush1.msra.mxu0 0.0
    %585 = vmatprep.subr.mxu0 0.0
    %586 = vmatpush1.msra.mxu0 0.0
    %587 = vmatprep.subr.mxu0 0.0
    %588 = vmatpush1.msra.mxu0 0.0
    %589 = vmatprep.subr.mxu0 0.0
    %590 = vmatpush1.msra.mxu0 0.0
    %591 = vmatprep.subr.mxu0 0.0
    %592 = vmatpush1.msra.mxu0 0.0
    %593 = vmatprep.subr.mxu0 0.0
    %594 = vmatpush1.msra.mxu0 0.0
    %595 = vmatprep.subr.mxu0 0.0
    %596 = vmatpush1.msra.mxu0 0.0
    %597 = vmatprep.subr.mxu0 0.0
    %598 = vmatpush1.msra.mxu0 0.0
    %599 = vmatprep.subr.mxu0 0.0
    %600 = vmatpush1.msra.mxu0 0.0
    %601 = vmatprep.subr.mxu0 0.0
    %602 = vmatpush1.msra.mxu0 0.0
    %603 = vmatprep.mubr.f32.mxu0 0.0
    %604 = vmatmul.mubr.f32.gmra.mrb[0].mxu0 %v467
    %v605 = vpop.f32.mrb[0].mxu0
    %v606 = vadd.f32 0.0, %v605
    %v607 = vpop.f32.mrb[0].mxu0
    %v608 = vadd.f32 0.0, %v607
    %609 = vdwg.mxu0
    %v614 = vrot.slane %v535, 6
    %v615 = vrot.slane %v537, 6
    %v616 = vrot.slane %v606, 6
    %v617 = vrot.slane %v608, 6
    %v622 = vadd.f32 %v147, %v614
    %v623 = vadd.f32 %v149, %v615
    %v624 = vadd.f32 %v224, %v616
    %v625 = vadd.f32 %v226, %v617
    %v626 = vxor.u32 %v622, 2147483648
    %v627 = vxor.u32 %v623, 2147483648
    %v628 = vxor.u32 %v624, 2147483648
    %v629 = vmul.f32 %v626, 1.442695
    %v630 = vpow.pop %v629
    %v631 = vmul.f32 %v627, 1.442695
    %v632 = vpow.pop %v631
    %v633 = vmul.f32 %v628, 1.442695
    %v634 = vpow.pop %v633
    %v635 = vadd.f32 %v630, 1.0
    %v636 = vadd.f32 %v632, 1.0
    %v637 = vadd.f32 %v634, 1.0
    %v638 = vrcp.pop %v635
    %v639 = vmul.f32 1.0, %v638
    %v640 = vrcp.pop %v636
    %v641 = vmul.f32 1.0, %v640
    %v642 = vrcp.pop %v637
    %v643 = vmul.f32 1.0, %v642
    %v644 = vtanh.pop %v625
    %v646 = vrot.slane %v465, 6
    %v648 = vmul.f32 %v641, %v646
    %v649 = vmul.f32 %v639, %v644
    %v650 = vadd.f32 %v648, %v649
    %v651 = vtanh.pop %v650
    %v652 = vmul.f32 %v643, %v651
    %v654 = vrot.slane %v652, 2
    %656 = vmatprep.subr.mxu0 %v235
    %657 = vmatpush1.msra.mxu0 %v234
    %658 = vmatprep.subr.mxu0 %v239
    %659 = vmatpush1.msra.mxu0 %v238
    %660 = vmatprep.subr.mxu0 %v243
    %661 = vmatpush1.msra.mxu0 %v242
    %662 = vmatprep.subr.mxu0 %v247
    %663 = vmatpush1.msra.mxu0 %v246
    %664 = vmatprep.subr.mxu0 %v251
    %665 = vmatpush1.msra.mxu0 %v250
    %666 = vmatprep.subr.mxu0 %v255
    %667 = vmatpush1.msra.mxu0 %v254
    %668 = vmatprep.subr.mxu0 %v259
    %669 = vmatpush1.msra.mxu0 %v258
    %670 = vmatprep.subr.mxu0 %v263
    %671 = vmatpush1.msra.mxu0 %v262
    %672 = vmatprep.subr.mxu0 %v267
    %673 = vmatpush1.msra.mxu0 %v266
    %674 = vmatprep.subr.mxu0 %v271
    %675 = vmatpush1.msra.mxu0 %v270
    %676 = vmatprep.subr.mxu0 %v275
    %677 = vmatpush1.msra.mxu0 %v274
    %678 = vmatprep.subr.mxu0 %v279
    %679 = vmatpush1.msra.mxu0 %v278
    %680 = vmatprep.subr.mxu0 %v283
    %681 = vmatpush1.msra.mxu0 %v282
    %682 = vmatprep.subr.mxu0 %v287
    %683 = vmatpush1.msra.mxu0 %v286
    %684 = vmatprep.subr.mxu0 %v291
    %685 = vmatpush1.msra.mxu0 %v290
    %686 = vmatprep.subr.mxu0 %v295
    %687 = vmatpush1.msra.mxu0 %v294
    %688 = vmatprep.subr.mxu0 0.0
    %689 = vmatpush1.msra.mxu0 0.0
    %690 = vmatprep.subr.mxu0 0.0
    %691 = vmatpush1.msra.mxu0 0.0
    %692 = vmatprep.subr.mxu0 0.0
    %693 = vmatpush1.msra.mxu0 0.0
    %694 = vmatprep.subr.mxu0 0.0
    %695 = vmatpush1.msra.mxu0 0.0
    %696 = vmatprep.subr.mxu0 0.0
    %697 = vmatpush1.msra.mxu0 0.0
    %698 = vmatprep.subr.mxu0 0.0
    %699 = vmatpush1.msra.mxu0 0.0
    %700 = vmatprep.subr.mxu0 0.0
    %701 = vmatpush1.msra.mxu0 0.0
    %702 = vmatprep.subr.mxu0 0.0
    %703 = vmatpush1.msra.mxu0 0.0
    %704 = vmatprep.subr.mxu0 0.0
    %705 = vmatpush1.msra.mxu0 0.0
    %706 = vmatprep.subr.mxu0 0.0
    %707 = vmatpush1.msra.mxu0 0.0
    %708 = vmatprep.subr.mxu0 0.0
    %709 = vmatpush1.msra.mxu0 0.0
    %710 = vmatprep.subr.mxu0 0.0
    %711 = vmatpush1.msra.mxu0 0.0
    %712 = vmatprep.subr.mxu0 0.0
    %713 = vmatpush1.msra.mxu0 0.0
    %714 = vmatprep.subr.mxu0 0.0
    %715 = vmatpush1.msra.mxu0 0.0
    %716 = vmatprep.subr.mxu0 0.0
    %717 = vmatpush1.msra.mxu0 0.0
    %718 = vmatprep.subr.mxu0 0.0
    %719 = vmatpush1.msra.mxu0 0.0
    %720 = vmatprep.mubr.f32.mxu0 0.0
    %721 = vmatmul.mubr.f32.gmra.mrb[0].mxu0 %v654
    %v722 = vpop.f32.mrb[0].mxu0
    %v723 = vadd.f32 0.0, %v722
    %v724 = vpop.f32.mrb[0].mxu0
    %v725 = vadd.f32 0.0, %v724
    %726 = vdwg.mxu0
    %727 = vmatprep.subr.mxu0 %v237
    %728 = vmatpush1.msra.mxu0 %v236
    %729 = vmatprep.subr.mxu0 %v241
    %730 = vmatpush1.msra.mxu0 %v240
    %731 = vmatprep.subr.mxu0 %v245
    %732 = vmatpush1.msra.mxu0 %v244
    %733 = vmatprep.subr.mxu0 %v249
    %734 = vmatpush1.msra.mxu0 %v248
    %735 = vmatprep.subr.mxu0 %v253
    %736 = vmatpush1.msra.mxu0 %v252
    %737 = vmatprep.subr.mxu0 %v257
    %738 = vmatpush1.msra.mxu0 %v256
    %739 = vmatprep.subr.mxu0 %v261
    %740 = vmatpush1.msra.mxu0 %v260
    %741 = vmatprep.subr.mxu0 %v265
    %742 = vmatpush1.msra.mxu0 %v264
    %743 = vmatprep.subr.mxu0 %v269
    %744 = vmatpush1.msra.mxu0 %v268
    %745 = vmatprep.subr.mxu0 %v273
    %746 = vmatpush1.msra.mxu0 %v272
    %747 = vmatprep.subr.mxu0 %v277
    %748 = vmatpush1.msra.mxu0 %v276
    %749 = vmatprep.subr.mxu0 %v281
    %750 = vmatpush1.msra.mxu0 %v280
    %751 = vmatprep.subr.mxu0 %v285
    %752 = vmatpush1.msra.mxu0 %v284
    %753 = vmatprep.subr.mxu0 %v289
    %754 = vmatpush1.msra.mxu0 %v288
    %755 = vmatprep.subr.mxu0 %v293
    %756 = vmatpush1.msra.mxu0 %v292
    %757 = vmatprep.subr.mxu0 %v297
    %758 = vmatpush1.msra.mxu0 %v296
    %759 = vmatprep.subr.mxu0 0.0
    %760 = vmatpush1.msra.mxu0 0.0
    %761 = vmatprep.subr.mxu0 0.0
    %762 = vmatpush1.msra.mxu0 0.0
    %763 = vmatprep.subr.mxu0 0.0
    %764 = vmatpush1.msra.mxu0 0.0
    %765 = vmatprep.subr.mxu0 0.0
    %766 = vmatpush1.msra.mxu0 0.0
    %767 = vmatprep.subr.mxu0 0.0
    %768 = vmatpush1.msra.mxu0 0.0
    %769 = vmatprep.subr.mxu0 0.0
    %770 = vmatpush1.msra.mxu0 0.0
    %771 = vmatprep.subr.mxu0 0.0
    %772 = vmatpush1.msra.mxu0 0.0
    %773 = vmatprep.subr.mxu0 0.0
    %774 = vmatpush1.msra.mxu0 0.0
    %775 = vmatprep.subr.mxu0 0.0
    %776 = vmatpush1.msra.mxu0 0.0
    %777 = vmatprep.subr.mxu0 0.0
    %778 = vmatpush1.msra.mxu0 0.0
    %779 = vmatprep.subr.mxu0 0.0
    %780 = vmatpush1.msra.mxu0 0.0
    %781 = vmatprep.subr.mxu0 0.0
    %782 = vmatpush1.msra.mxu0 0.0
    %783 = vmatprep.subr.mxu0 0.0
    %784 = vmatpush1.msra.mxu0 0.0
    %785 = vmatprep.subr.mxu0 0.0
    %786 = vmatpush1.msra.mxu0 0.0
    %787 = vmatprep.subr.mxu0 0.0
    %788 = vmatpush1.msra.mxu0 0.0
    %789 = vmatprep.subr.mxu0 0.0
    %790 = vmatpush1.msra.mxu0 0.0
    %791 = vmatprep.mubr.f32.mxu0 0.0
    %792 = vmatmul.mubr.f32.gmra.mrb[0].mxu0 %v654
    %v793 = vpop.f32.mrb[0].mxu0
    %v794 = vadd.f32 0.0, %v793
    %v795 = vpop.f32.mrb[0].mxu0
    %v796 = vadd.f32 0.0, %v795
    %797 = vdwg.mxu0
    %v802 = vrot.slane %v723, 4
    %v803 = vrot.slane %v725, 4
    %v804 = vrot.slane %v794, 4
    %v805 = vrot.slane %v796, 4
    %v810 = vadd.f32 %v147, %v802
    %v811 = vadd.f32 %v149, %v803
    %v812 = vadd.f32 %v224, %v804
    %v813 = vadd.f32 %v226, %v805
    %v814 = vxor.u32 %v810, 2147483648
    %v815 = vxor.u32 %v811, 2147483648
    %v816 = vxor.u32 %v812, 2147483648
    %v817 = vmul.f32 %v814, 1.442695
    %v818 = vpow.pop %v817
    %v819 = vmul.f32 %v815, 1.442695
    %v820 = vpow.pop %v819
    %v821 = vmul.f32 %v816, 1.442695
    %v822 = vpow.pop %v821
    %v823 = vadd.f32 %v818, 1.0
    %v824 = vadd.f32 %v820, 1.0
    %v825 = vadd.f32 %v822, 1.0
    %v826 = vrcp.pop %v823
    %v827 = vmul.f32 1.0, %v826
    %v828 = vrcp.pop %v824
    %v829 = vmul.f32 1.0, %v828
    %v830 = vrcp.pop %v825
    %v831 = vmul.f32 1.0, %v830
    %v832 = vtanh.pop %v813
    %v834 = vrot.slane %v650, 6
    %v836 = vmul.f32 %v829, %v834
    %v837 = vmul.f32 %v827, %v832
    %v838 = vadd.f32 %v836, %v837
    %v839 = vtanh.pop %v838
    %v840 = vmul.f32 %v831, %v839
    %v842 = vrot.slane %v840, 4
    %844 = vmatprep.subr.mxu0 %v235
    %845 = vmatpush1.msra.mxu0 %v234
    %846 = vmatprep.subr.mxu0 %v239
    %847 = vmatpush1.msra.mxu0 %v238
    %848 = vmatprep.subr.mxu0 %v243
    %849 = vmatpush1.msra.mxu0 %v242
    %850 = vmatprep.subr.mxu0 %v247
    %851 = vmatpush1.msra.mxu0 %v246
    %852 = vmatprep.subr.mxu0 %v251
    %853 = vmatpush1.msra.mxu0 %v250
    %854 = vmatprep.subr.mxu0 %v255
    %855 = vmatpush1.msra.mxu0 %v254
    %856 = vmatprep.subr.mxu0 %v259
    %857 = vmatpush1.msra.mxu0 %v258
    %858 = vmatprep.subr.mxu0 %v263
    %859 = vmatpush1.msra.mxu0 %v262
    %860 = vmatprep.subr.mxu0 %v267
    %861 = vmatpush1.msra.mxu0 %v266
    %862 = vmatprep.subr.mxu0 %v271
    %863 = vmatpush1.msra.mxu0 %v270
    %864 = vmatprep.subr.mxu0 %v275
    %865 = vmatpush1.msra.mxu0 %v274
    %866 = vmatprep.subr.mxu0 %v279
    %867 = vmatpush1.msra.mxu0 %v278
    %868 = vmatprep.subr.mxu0 %v283
    %869 = vmatpush1.msra.mxu0 %v282
    %870 = vmatprep.subr.mxu0 %v287
    %871 = vmatpush1.msra.mxu0 %v286
    %872 = vmatprep.subr.mxu0 %v291
    %873 = vmatpush1.msra.mxu0 %v290
    %874 = vmatprep.subr.mxu0 %v295
    %875 = vmatpush1.msra.mxu0 %v294
    %876 = vmatprep.subr.mxu0 0.0
    %877 = vmatpush1.msra.mxu0 0.0
    %878 = vmatprep.subr.mxu0 0.0
    %879 = vmatpush1.msra.mxu0 0.0
    %880 = vmatprep.subr.mxu0 0.0
    %881 = vmatpush1.msra.mxu0 0.0
    %882 = vmatprep.subr.mxu0 0.0
    %883 = vmatpush1.msra.mxu0 0.0
    %884 = vmatprep.subr.mxu0 0.0
    %885 = vmatpush1.msra.mxu0 0.0
    %886 = vmatprep.subr.mxu0 0.0
    %887 = vmatpush1.msra.mxu0 0.0
    %888 = vmatprep.subr.mxu0 0.0
    %889 = vmatpush1.msra.mxu0 0.0
    %890 = vmatprep.subr.mxu0 0.0
    %891 = vmatpush1.msra.mxu0 0.0
    %892 = vmatprep.subr.mxu0 0.0
    %893 = vmatpush1.msra.mxu0 0.0
    %894 = vmatprep.subr.mxu0 0.0
    %895 = vmatpush1.msra.mxu0 0.0
    %896 = vmatprep.subr.mxu0 0.0
    %897 = vmatpush1.msra.mxu0 0.0
    %898 = vmatprep.subr.mxu0 0.0
    %899 = vmatpush1.msra.mxu0 0.0
    %900 = vmatprep.subr.mxu0 0.0
    %901 = vmatpush1.msra.mxu0 0.0
    %902 = vmatprep.subr.mxu0 0.0
    %903 = vmatpush1.msra.mxu0 0.0
    %904 = vmatprep.subr.mxu0 0.0
    %905 = vmatpush1.msra.mxu0 0.0
    %906 = vmatprep.subr.mxu0 0.0
    %907 = vmatpush1.msra.mxu0 0.0
    %908 = vmatprep.mubr.f32.mxu0 0.0
    %909 = vmatmul.mubr.f32.gmra.mrb[0].mxu0 %v842
    %v910 = vpop.f32.mrb[0].mxu0
    %v911 = vadd.f32 0.0, %v910
    %v912 = vpop.f32.mrb[0].mxu0
    %v913 = vadd.f32 0.0, %v912
    %914 = vdwg.mxu0
    %915 = vmatprep.subr.mxu0 %v237
    %916 = vmatpush1.msra.mxu0 %v236
    %917 = vmatprep.subr.mxu0 %v241
    %918 = vmatpush1.msra.mxu0 %v240
    %919 = vmatprep.subr.mxu0 %v245
    %920 = vmatpush1.msra.mxu0 %v244
    %921 = vmatprep.subr.mxu0 %v249
    %922 = vmatpush1.msra.mxu0 %v248
    %923 = vmatprep.subr.mxu0 %v253
    %924 = vmatpush1.msra.mxu0 %v252
    %925 = vmatprep.subr.mxu0 %v257
    %926 = vmatpush1.msra.mxu0 %v256
    %927 = vmatprep.subr.mxu0 %v261
    %928 = vmatpush1.msra.mxu0 %v260
    %929 = vmatprep.subr.mxu0 %v265
    %930 = vmatpush1.msra.mxu0 %v264
    %931 = vmatprep.subr.mxu0 %v269
    %932 = vmatpush1.msra.mxu0 %v268
    %933 = vmatprep.subr.mxu0 %v273
    %934 = vmatpush1.msra.mxu0 %v272
    %935 = vmatprep.subr.mxu0 %v277
    %936 = vmatpush1.msra.mxu0 %v276
    %937 = vmatprep.subr.mxu0 %v281
    %938 = vmatpush1.msra.mxu0 %v280
    %939 = vmatprep.subr.mxu0 %v285
    %940 = vmatpush1.msra.mxu0 %v284
    %941 = vmatprep.subr.mxu0 %v289
    %942 = vmatpush1.msra.mxu0 %v288
    %943 = vmatprep.subr.mxu0 %v293
    %944 = vmatpush1.msra.mxu0 %v292
    %945 = vmatprep.subr.mxu0 %v297
    %946 = vmatpush1.msra.mxu0 %v296
    %947 = vmatprep.subr.mxu0 0.0
    %948 = vmatpush1.msra.mxu0 0.0
    %949 = vmatprep.subr.mxu0 0.0
    %950 = vmatpush1.msra.mxu0 0.0
    %951 = vmatprep.subr.mxu0 0.0
    %952 = vmatpush1.msra.mxu0 0.0
    %953 = vmatprep.subr.mxu0 0.0
    %954 = vmatpush1.msra.mxu0 0.0
    %955 = vmatprep.subr.mxu0 0.0
    %956 = vmatpush1.msra.mxu0 0.0
    %957 = vmatprep.subr.mxu0 0.0
    %958 = vmatpush1.msra.mxu0 0.0
    %959 = vmatprep.subr.mxu0 0.0
    %960 = vmatpush1.msra.mxu0 0.0
    %961 = vmatprep.subr.mxu0 0.0
    %962 = vmatpush1.msra.mxu0 0.0
    %963 = vmatprep.subr.mxu0 0.0
    %964 = vmatpush1.msra.mxu0 0.0
    %965 = vmatprep.subr.mxu0 0.0
    %966 = vmatpush1.msra.mxu0 0.0
    %967 = vmatprep.subr.mxu0 0.0
    %968 = vmatpush1.msra.mxu0 0.0
    %969 = vmatprep.subr.mxu0 0.0
    %970 = vmatpush1.msra.mxu0 0.0
    %971 = vmatprep.subr.mxu0 0.0
    %972 = vmatpush1.msra.mxu0 0.0
    %973 = vmatprep.subr.mxu0 0.0
    %974 = vmatpush1.msra.mxu0 0.0
    %975 = vmatprep.subr.mxu0 0.0
    %976 = vmatpush1.msra.mxu0 0.0
    %977 = vmatprep.subr.mxu0 0.0
    %978 = vmatpush1.msra.mxu0 0.0
    %979 = vmatprep.mubr.f32.mxu0 0.0
    %980 = vmatmul.mubr.f32.gmra.mrb[0].mxu0 %v842
    %v981 = vpop.f32.mrb[0].mxu0
    %v982 = vadd.f32 0.0, %v981
    %v983 = vpop.f32.mrb[0].mxu0
    %v984 = vadd.f32 0.0, %v983
    %985 = vdwg.mxu0
    %v990 = vrot.slane %v911, 2
    %v991 = vrot.slane %v913, 2
    %v992 = vrot.slane %v982, 2
    %v993 = vrot.slane %v984, 2
    %v998 = vadd.f32 %v147, %v990
    %v999 = vadd.f32 %v149, %v991
    %v1000 = vadd.f32 %v224, %v992
    %v1001 = vadd.f32 %v226, %v993
    %v1002 = vxor.u32 %v998, 2147483648
    %v1003 = vxor.u32 %v999, 2147483648
    %v1004 = vxor.u32 %v1000, 2147483648
    %v1005 = vmul.f32 %v1002, 1.442695
    %v1006 = vpow.pop %v1005
    %v1007 = vmul.f32 %v1003, 1.442695
    %v1008 = vpow.pop %v1007
    %v1009 = vmul.f32 %v1004, 1.442695
    %v1010 = vpow.pop %v1009
    %v1011 = vadd.f32 %v1006, 1.0
    %v1012 = vadd.f32 %v1008, 1.0
    %v1013 = vadd.f32 %v1010, 1.0
    %v1014 = vrcp.pop %v1011
    %v1015 = vmul.f32 1.0, %v1014
    %v1016 = vrcp.pop %v1012
    %v1017 = vmul.f32 1.0, %v1016
    %v1018 = vrcp.pop %v1013
    %v1019 = vmul.f32 1.0, %v1018
    %v1020 = vtanh.pop %v1001
    %v1022 = vrot.slane %v838, 6
    %v1024 = vmul.f32 %v1017, %v1022
    %v1025 = vmul.f32 %v1015, %v1020
    %v1026 = vadd.f32 %v1024, %v1025
    %v1027 = vtanh.pop %v1026
    %v1028 = vmul.f32 %v1019, %v1027
    %v1030 = vrot.slane %v1028, 6
    %1032 = vmatprep.subr.mxu0 %v235
    %1033 = vmatpush1.msra.mxu0 %v234
    %1034 = vmatprep.subr.mxu0 %v239
    %1035 = vmatpush1.msra.mxu0 %v238
    %1036 = vmatprep.subr.mxu0 %v243
    %1037 = vmatpush1.msra.mxu0 %v242
    %1038 = vmatprep.subr.mxu0 %v247
    %1039 = vmatpush1.msra.mxu0 %v246
    %1040 = vmatprep.subr.mxu0 %v251
    %1041 = vmatpush1.msra.mxu0 %v250
    %1042 = vmatprep.subr.mxu0 %v255
    %1043 = vmatpush1.msra.mxu0 %v254
    %1044 = vmatprep.subr.mxu0 %v259
    %1045 = vmatpush1.msra.mxu0 %v258
    %1046 = vmatprep.subr.mxu0 %v263
    %1047 = vmatpush1.msra.mxu0 %v262
    %1048 = vmatprep.subr.mxu0 %v267
    %1049 = vmatpush1.msra.mxu0 %v266
    %1050 = vmatprep.subr.mxu0 %v271
    %1051 = vmatpush1.msra.mxu0 %v270
    %1052 = vmatprep.subr.mxu0 %v275
    %1053 = vmatpush1.msra.mxu0 %v274
    %1054 = vmatprep.subr.mxu0 %v279
    %1055 = vmatpush1.msra.mxu0 %v278
    %1056 = vmatprep.subr.mxu0 %v283
    %1057 = vmatpush1.msra.mxu0 %v282
    %1058 = vmatprep.subr.mxu0 %v287
    %1059 = vmatpush1.msra.mxu0 %v286
    %1060 = vmatprep.subr.mxu0 %v291
    %1061 = vmatpush1.msra.mxu0 %v290
    %1062 = vmatprep.subr.mxu0 %v295
    %1063 = vmatpush1.msra.mxu0 %v294
    %1064 = vmatprep.subr.mxu0 0.0
    %1065 = vmatpush1.msra.mxu0 0.0
    %1066 = vmatprep.subr.mxu0 0.0
    %1067 = vmatpush1.msra.mxu0 0.0
    %1068 = vmatprep.subr.mxu0 0.0
    %1069 = vmatpush1.msra.mxu0 0.0
    %1070 = vmatprep.subr.mxu0 0.0
    %1071 = vmatpush1.msra.mxu0 0.0
    %1072 = vmatprep.subr.mxu0 0.0
    %1073 = vmatpush1.msra.mxu0 0.0
    %1074 = vmatprep.subr.mxu0 0.0
    %1075 = vmatpush1.msra.mxu0 0.0
    %1076 = vmatprep.subr.mxu0 0.0
    %1077 = vmatpush1.msra.mxu0 0.0
    %1078 = vmatprep.subr.mxu0 0.0
    %1079 = vmatpush1.msra.mxu0 0.0
    %1080 = vmatprep.subr.mxu0 0.0
    %1081 = vmatpush1.msra.mxu0 0.0
    %1082 = vmatprep.subr.mxu0 0.0
    %1083 = vmatpush1.msra.mxu0 0.0
    %1084 = vmatprep.subr.mxu0 0.0
    %1085 = vmatpush1.msra.mxu0 0.0
    %1086 = vmatprep.subr.mxu0 0.0
    %1087 = vmatpush1.msra.mxu0 0.0
    %1088 = vmatprep.subr.mxu0 0.0
    %1089 = vmatpush1.msra.mxu0 0.0
    %1090 = vmatprep.subr.mxu0 0.0
    %1091 = vmatpush1.msra.mxu0 0.0
    %1092 = vmatprep.subr.mxu0 0.0
    %1093 = vmatpush1.msra.mxu0 0.0
    %1094 = vmatprep.subr.mxu0 0.0
    %1095 = vmatpush1.msra.mxu0 0.0
    %1096 = vmatprep.mubr.f32.mxu0 0.0
    %1097 = vmatmul.mubr.f32.gmra.mrb[0].mxu0 %v1030
    %v1098 = vpop.f32.mrb[0].mxu0
    %v1099 = vadd.f32 0.0, %v1098
    %v1100 = vpop.f32.mrb[0].mxu0
    %v1101 = vadd.f32 0.0, %v1100
    %1102 = vdwg.mxu0
    %1103 = vmatprep.subr.mxu0 %v237
    %1104 = vmatpush1.msra.mxu0 %v236
    %1105 = vmatprep.subr.mxu0 %v241
    %1106 = vmatpush1.msra.mxu0 %v240
    %1107 = vmatprep.subr.mxu0 %v245
    %1108 = vmatpush1.msra.mxu0 %v244
    %1109 = vmatprep.subr.mxu0 %v249
    %1110 = vmatpush1.msra.mxu0 %v248
    %1111 = vmatprep.subr.mxu0 %v253
    %1112 = vmatpush1.msra.mxu0 %v252
    %1113 = vmatprep.subr.mxu0 %v257
    %1114 = vmatpush1.msra.mxu0 %v256
    %1115 = vmatprep.subr.mxu0 %v261
    %1116 = vmatpush1.msra.mxu0 %v260
    %1117 = vmatprep.subr.mxu0 %v265
    %1118 = vmatpush1.msra.mxu0 %v264
    %1119 = vmatprep.subr.mxu0 %v269
    %1120 = vmatpush1.msra.mxu0 %v268
    %1121 = vmatprep.subr.mxu0 %v273
    %1122 = vmatpush1.msra.mxu0 %v272
    %1123 = vmatprep.subr.mxu0 %v277
    %1124 = vmatpush1.msra.mxu0 %v276
    %1125 = vmatprep.subr.mxu0 %v281
    %1126 = vmatpush1.msra.mxu0 %v280
    %1127 = vmatprep.subr.mxu0 %v285
    %1128 = vmatpush1.msra.mxu0 %v284
    %1129 = vmatprep.subr.mxu0 %v289
    %1130 = vmatpush1.msra.mxu0 %v288
    %1131 = vmatprep.subr.mxu0 %v293
    %1132 = vmatpush1.msra.mxu0 %v292
    %1133 = vmatprep.subr.mxu0 %v297
    %1134 = vmatpush1.msra.mxu0 %v296
    %1135 = vmatprep.subr.mxu0 0.0
    %1136 = vmatpush1.msra.mxu0 0.0
    %1137 = vmatprep.subr.mxu0 0.0
    %1138 = vmatpush1.msra.mxu0 0.0
    %1139 = vmatprep.subr.mxu0 0.0
    %1140 = vmatpush1.msra.mxu0 0.0
    %1141 = vmatprep.subr.mxu0 0.0
    %1142 = vmatpush1.msra.mxu0 0.0
    %1143 = vmatprep.subr.mxu0 0.0
    %1144 = vmatpush1.msra.mxu0 0.0
    %1145 = vmatprep.subr.mxu0 0.0
    %1146 = vmatpush1.msra.mxu0 0.0
    %1147 = vmatprep.subr.mxu0 0.0
    %1148 = vmatpush1.msra.mxu0 0.0
    %1149 = vmatprep.subr.mxu0 0.0
    %1150 = vmatpush1.msra.mxu0 0.0
    %1151 = vmatprep.subr.mxu0 0.0
    %1152 = vmatpush1.msra.mxu0 0.0
    %1153 = vmatprep.subr.mxu0 0.0
    %1154 = vmatpush1.msra.mxu0 0.0
    %1155 = vmatprep.subr.mxu0 0.0
    %1156 = vmatpush1.msra.mxu0 0.0
    %1157 = vmatprep.subr.mxu0 0.0
    %1158 = vmatpush1.msra.mxu0 0.0
    %1159 = vmatprep.subr.mxu0 0.0
    %1160 = vmatpush1.msra.mxu0 0.0
    %1161 = vmatprep.subr.mxu0 0.0
    %1162 = vmatpush1.msra.mxu0 0.0
    %1163 = vmatprep.subr.mxu0 0.0
    %1164 = vmatpush1.msra.mxu0 0.0
    %1165 = vmatprep.subr.mxu0 0.0
    %1166 = vmatpush1.msra.mxu0 0.0
    %1167 = vmatprep.mubr.f32.mxu0 0.0
    %1168 = vmatmul.mubr.f32.gmra.mrb[0].mxu0 %v1030
    %v1169 = vpop.f32.mrb[0].mxu0
    %v1170 = vadd.f32 0.0, %v1169
    %v1171 = vpop.f32.mrb[0].mxu0
    %v1172 = vadd.f32 0.0, %v1171
    %1173 = vdwg.mxu0
    %v1174 = vadd.f32 %v153, %v1099
    %v1175 = vadd.f32 %v155, %v1101
    %v1176 = vadd.f32 %v230, %v1170
    %v1177 = vadd.f32 %v232, %v1172
    %v1178 = vxor.u32 %v1174, 2147483648
    %v1179 = vxor.u32 %v1175, 2147483648
    %v1180 = vxor.u32 %v1176, 2147483648
    %v1181 = vmul.f32 %v1178, 1.442695
    %v1182 = vpow.pop %v1181
    %v1183 = vmul.f32 %v1179, 1.442695
    %v1184 = vpow.pop %v1183
    %v1185 = vmul.f32 %v1180, 1.442695
    %v1186 = vpow.pop %v1185
    %v1187 = vadd.f32 %v1182, 1.0
    %v1188 = vadd.f32 %v1184, 1.0
    %v1189 = vadd.f32 %v1186, 1.0
    %v1190 = vrcp.pop %v1187
    %v1191 = vmul.f32 1.0, %v1190
    %v1192 = vrcp.pop %v1188
    %v1193 = vmul.f32 1.0, %v1192
    %v1194 = vrcp.pop %v1189
    %v1195 = vmul.f32 1.0, %v1194
    %v1196 = vtanh.pop %v1177
    %v1198 = vrot.slane %v1026, 6
    %v1200 = vmul.f32 %v1193, %v1198
    %v1201 = vmul.f32 %v1191, %v1196
    %v1202 = vadd.f32 %v1200, %v1201
    %v1203 = vtanh.pop %v1202
    %v1204 = vmul.f32 %v1195, %v1203
    %1205 = vmatprep.subr.mxu0 %v235
    %1206 = vmatpush1.msra.mxu0 %v234
    %1207 = vmatprep.subr.mxu0 %v239
    %1208 = vmatpush1.msra.mxu0 %v238
    %1209 = vmatprep.subr.mxu0 %v243
    %1210 = vmatpush1.msra.mxu0 %v242
    %1211 = vmatprep.subr.mxu0 %v247
    %1212 = vmatpush1.msra.mxu0 %v246
    %1213 = vmatprep.subr.mxu0 %v251
    %1214 = vmatpush1.msra.mxu0 %v250
    %1215 = vmatprep.subr.mxu0 %v255
    %1216 = vmatpush1.msra.mxu0 %v254
    %1217 = vmatprep.subr.mxu0 %v259
    %1218 = vmatpush1.msra.mxu0 %v258
    %1219 = vmatprep.subr.mxu0 %v263
    %1220 = vmatpush1.msra.mxu0 %v262
    %1221 = vmatprep.subr.mxu0 %v267
    %1222 = vmatpush1.msra.mxu0 %v266
    %1223 = vmatprep.subr.mxu0 %v271
    %1224 = vmatpush1.msra.mxu0 %v270
    %1225 = vmatprep.subr.mxu0 %v275
    %1226 = vmatpush1.msra.mxu0 %v274
    %1227 = vmatprep.subr.mxu0 %v279
    %1228 = vmatpush1.msra.mxu0 %v278
    %1229 = vmatprep.subr.mxu0 %v283
    %1230 = vmatpush1.msra.mxu0 %v282
    %1231 = vmatprep.subr.mxu0 %v287
    %1232 = vmatpush1.msra.mxu0 %v286
    %1233 = vmatprep.subr.mxu0 %v291
    %1234 = vmatpush1.msra.mxu0 %v290
    %1235 = vmatprep.subr.mxu0 %v295
    %1236 = vmatpush1.msra.mxu0 %v294
    %1237 = vmatprep.subr.mxu0 0.0
    %1238 = vmatpush1.msra.mxu0 0.0
    %1239 = vmatprep.subr.mxu0 0.0
    %1240 = vmatpush1.msra.mxu0 0.0
    %1241 = vmatprep.subr.mxu0 0.0
    %1242 = vmatpush1.msra.mxu0 0.0
    %1243 = vmatprep.subr.mxu0 0.0
    %1244 = vmatpush1.msra.mxu0 0.0
    %1245 = vmatprep.subr.mxu0 0.0
    %1246 = vmatpush1.msra.mxu0 0.0
    %1247 = vmatprep.subr.mxu0 0.0
    %1248 = vmatpush1.msra.mxu0 0.0
    %1249 = vmatprep.subr.mxu0 0.0
    %1250 = vmatpush1.msra.mxu0 0.0
    %1251 = vmatprep.subr.mxu0 0.0
    %1252 = vmatpush1.msra.mxu0 0.0
    %1253 = vmatprep.subr.mxu0 0.0
    %1254 = vmatpush1.msra.mxu0 0.0
    %1255 = vmatprep.subr.mxu0 0.0
    %1256 = vmatpush1.msra.mxu0 0.0
    %1257 = vmatprep.subr.mxu0 0.0
    %1258 = vmatpush1.msra.mxu0 0.0
    %1259 = vmatprep.subr.mxu0 0.0
    %1260 = vmatpush1.msra.mxu0 0.0
    %1261 = vmatprep.subr.mxu0 0.0
    %1262 = vmatpush1.msra.mxu0 0.0
    %1263 = vmatprep.subr.mxu0 0.0
    %1264 = vmatpush1.msra.mxu0 0.0
    %1265 = vmatprep.subr.mxu0 0.0
    %1266 = vmatpush1.msra.mxu0 0.0
    %1267 = vmatprep.subr.mxu0 0.0
    %1268 = vmatpush1.msra.mxu0 0.0
    %1269 = vmatprep.mubr.f32.mxu0 0.0
    %1270 = vmatmul.mubr.f32.gmra.mrb[0].mxu0 %v1204
    %v1271 = vpop.f32.mrb[0].mxu0
    %v1272 = vadd.f32 0.0, %v1271
    %v1273 = vpop.f32.mrb[0].mxu0
    %v1274 = vadd.f32 0.0, %v1273
    %1275 = vdwg.mxu0
    %1276 = vmatprep.subr.mxu0 %v237
    %1277 = vmatpush1.msra.mxu0 %v236
    %1278 = vmatprep.subr.mxu0 %v241
    %1279 = vmatpush1.msra.mxu0 %v240
    %1280 = vmatprep.subr.mxu0 %v245
    %1281 = vmatpush1.msra.mxu0 %v244
    %1282 = vmatprep.subr.mxu0 %v249
    %1283 = vmatpush1.msra.mxu0 %v248
    %1284 = vmatprep.subr.mxu0 %v253
    %1285 = vmatpush1.msra.mxu0 %v252
    %1286 = vmatprep.subr.mxu0 %v257
    %1287 = vmatpush1.msra.mxu0 %v256
    %1288 = vmatprep.subr.mxu0 %v261
    %1289 = vmatpush1.msra.mxu0 %v260
    %1290 = vmatprep.subr.mxu0 %v265
    %1291 = vmatpush1.msra.mxu0 %v264
    %1292 = vmatprep.subr.mxu0 %v269
    %1293 = vmatpush1.msra.mxu0 %v268
    %1294 = vmatprep.subr.mxu0 %v273
    %1295 = vmatpush1.msra.mxu0 %v272
    %1296 = vmatprep.subr.mxu0 %v277
    %1297 = vmatpush1.msra.mxu0 %v276
    %1298 = vmatprep.subr.mxu0 %v281
    %1299 = vmatpush1.msra.mxu0 %v280
    %1300 = vmatprep.subr.mxu0 %v285
    %1301 = vmatpush1.msra.mxu0 %v284
    %1302 = vmatprep.subr.mxu0 %v289
    %1303 = vmatpush1.msra.mxu0 %v288
    %1304 = vmatprep.subr.mxu0 %v293
    %1305 = vmatpush1.msra.mxu0 %v292
    %1306 = vmatprep.subr.mxu0 %v297
    %1307 = vmatpush1.msra.mxu0 %v296
    %1308 = vmatprep.subr.mxu0 0.0
    %1309 = vmatpush1.msra.mxu0 0.0
    %1310 = vmatprep.subr.mxu0 0.0
    %1311 = vmatpush1.msra.mxu0 0.0
    %1312 = vmatprep.subr.mxu0 0.0
    %1313 = vmatpush1.msra.mxu0 0.0
    %1314 = vmatprep.subr.mxu0 0.0
    %1315 = vmatpush1.msra.mxu0 0.0
    %1316 = vmatprep.subr.mxu0 0.0
    %1317 = vmatpush1.msra.mxu0 0.0
    %1318 = vmatprep.subr.mxu0 0.0
    %1319 = vmatpush1.msra.mxu0 0.0
    %1320 = vmatprep.subr.mxu0 0.0
    %1321 = vmatpush1.msra.mxu0 0.0
    %1322 = vmatprep.subr.mxu0 0.0
    %1323 = vmatpush1.msra.mxu0 0.0
    %1324 = vmatprep.subr.mxu0 0.0
    %1325 = vmatpush1.msra.mxu0 0.0
    %1326 = vmatprep.subr.mxu0 0.0
    %1327 = vmatpush1.msra.mxu0 0.0
    %1328 = vmatprep.subr.mxu0 0.0
    %1329 = vmatpush1.msra.mxu0 0.0
    %1330 = vmatprep.subr.mxu0 0.0
    %1331 = vmatpush1.msra.mxu0 0.0
    %1332 = vmatprep.subr.mxu0 0.0
    %1333 = vmatpush1.msra.mxu0 0.0
    %1334 = vmatprep.subr.mxu0 0.0
    %1335 = vmatpush1.msra.mxu0 0.0
    %1336 = vmatprep.subr.mxu0 0.0
    %1337 = vmatpush1.msra.mxu0 0.0
    %1338 = vmatprep.subr.mxu0 0.0
    %1339 = vmatpush1.msra.mxu0 0.0
    %1340 = vmatprep.mubr.f32.mxu0 0.0
    %1341 = vmatmul.mubr.f32.gmra.mrb[0].mxu0 %v1204
    %v1342 = vpop.f32.mrb[0].mxu0
    %v1343 = vadd.f32 0.0, %v1342
    %v1344 = vpop.f32.mrb[0].mxu0
    %v1345 = vadd.f32 0.0, %v1344
    %1346 = vdwg.mxu0
    %v1351 = vrot.slane %v1272, 6
    %v1352 = vrot.slane %v1274, 6
    %v1353 = vrot.slane %v1343, 6
    %v1354 = vrot.slane %v1345, 6
    %v1359 = vadd.f32 %v153, %v1351
    %v1360 = vadd.f32 %v155, %v1352
    %v1361 = vadd.f32 %v230, %v1353
    %v1362 = vadd.f32 %v232, %v1354
    %v1363 = vxor.u32 %v1359, 2147483648
    %v1364 = vxor.u32 %v1360, 2147483648
    %v1365 = vxor.u32 %v1361, 2147483648
    %v1366 = vmul.f32 %v1363, 1.442695
    %v1367 = vpow.pop %v1366
    %v1368 = vmul.f32 %v1364, 1.442695
    %v1369 = vpow.pop %v1368
    %v1370 = vmul.f32 %v1365, 1.442695
    %v1371 = vpow.pop %v1370
    %v1372 = vadd.f32 %v1367, 1.0
    %v1373 = vadd.f32 %v1369, 1.0
    %v1374 = vadd.f32 %v1371, 1.0
    %v1375 = vrcp.pop %v1372
    %v1376 = vmul.f32 1.0, %v1375
    %v1377 = vrcp.pop %v1373
    %v1378 = vmul.f32 1.0, %v1377
    %v1379 = vrcp.pop %v1374
    %v1380 = vmul.f32 1.0, %v1379
    %v1381 = vtanh.pop %v1362
    %v1383 = vrot.slane %v1202, 6
    %v1385 = vmul.f32 %v1378, %v1383
    %v1386 = vmul.f32 %v1376, %v1381
    %v1387 = vadd.f32 %v1385, %v1386
    %v1388 = vtanh.pop %v1387
    %v1389 = vmul.f32 %v1380, %v1388
    %v1391 = vrot.slane %v1389, 2
    %1393 = vmatprep.subr.mxu0 %v235
    %1394 = vmatpush1.msra.mxu0 %v234
    %1395 = vmatprep.subr.mxu0 %v239
    %1396 = vmatpush1.msra.mxu0 %v238
    %1397 = vmatprep.subr.mxu0 %v243
    %1398 = vmatpush1.msra.mxu0 %v242
    %1399 = vmatprep.subr.mxu0 %v247
    %1400 = vmatpush1.msra.mxu0 %v246
    %1401 = vmatprep.subr.mxu0 %v251
    %1402 = vmatpush1.msra.mxu0 %v250
    %1403 = vmatprep.subr.mxu0 %v255
    %1404 = vmatpush1.msra.mxu0 %v254
    %1405 = vmatprep.subr.mxu0 %v259
    %1406 = vmatpush1.msra.mxu0 %v258
    %1407 = vmatprep.subr.mxu0 %v263
    %1408 = vmatpush1.msra.mxu0 %v262
    %1409 = vmatprep.subr.mxu0 %v267
    %1410 = vmatpush1.msra.mxu0 %v266
    %1411 = vmatprep.subr.mxu0 %v271
    %1412 = vmatpush1.msra.mxu0 %v270
    %1413 = vmatprep.subr.mxu0 %v275
    %1414 = vmatpush1.msra.mxu0 %v274
    %1415 = vmatprep.subr.mxu0 %v279
    %1416 = vmatpush1.msra.mxu0 %v278
    %1417 = vmatprep.subr.mxu0 %v283
    %1418 = vmatpush1.msra.mxu0 %v282
    %1419 = vmatprep.subr.mxu0 %v287
    %1420 = vmatpush1.msra.mxu0 %v286
    %1421 = vmatprep.subr.mxu0 %v291
    %1422 = vmatpush1.msra.mxu0 %v290
    %1423 = vmatprep.subr.mxu0 %v295
    %1424 = vmatpush1.msra.mxu0 %v294
    %1425 = vmatprep.subr.mxu0 0.0
    %1426 = vmatpush1.msra.mxu0 0.0
    %1427 = vmatprep.subr.mxu0 0.0
    %1428 = vmatpush1.msra.mxu0 0.0
    %1429 = vmatprep.subr.mxu0 0.0
    %1430 = vmatpush1.msra.mxu0 0.0
    %1431 = vmatprep.subr.mxu0 0.0
    %1432 = vmatpush1.msra.mxu0 0.0
    %1433 = vmatprep.subr.mxu0 0.0
    %1434 = vmatpush1.msra.mxu0 0.0
    %1435 = vmatprep.subr.mxu0 0.0
    %1436 = vmatpush1.msra.mxu0 0.0
    %1437 = vmatprep.subr.mxu0 0.0
    %1438 = vmatpush1.msra.mxu0 0.0
    %1439 = vmatprep.subr.mxu0 0.0
    %1440 = vmatpush1.msra.mxu0 0.0
    %1441 = vmatprep.subr.mxu0 0.0
    %1442 = vmatpush1.msra.mxu0 0.0
    %1443 = vmatprep.subr.mxu0 0.0
    %1444 = vmatpush1.msra.mxu0 0.0
    %1445 = vmatprep.subr.mxu0 0.0
    %1446 = vmatpush1.msra.mxu0 0.0
    %1447 = vmatprep.subr.mxu0 0.0
    %1448 = vmatpush1.msra.mxu0 0.0
    %1449 = vmatprep.subr.mxu0 0.0
    %1450 = vmatpush1.msra.mxu0 0.0
    %1451 = vmatprep.subr.mxu0 0.0
    %1452 = vmatpush1.msra.mxu0 0.0
    %1453 = vmatprep.subr.mxu0 0.0
    %1454 = vmatpush1.msra.mxu0 0.0
    %1455 = vmatprep.subr.mxu0 0.0
    %1456 = vmatpush1.msra.mxu0 0.0
    %1457 = vmatprep.mubr.f32.mxu0 0.0
    %1458 = vmatmul.mubr.f32.gmra.mrb[0].mxu0 %v1391
    %v1459 = vpop.f32.mrb[0].mxu0
    %v1460 = vadd.f32 0.0, %v1459
    %v1461 = vpop.f32.mrb[0].mxu0
    %v1462 = vadd.f32 0.0, %v1461
    %1463 = vdwg.mxu0
    %1464 = vmatprep.subr.mxu0 %v237
    %1465 = vmatpush1.msra.mxu0 %v236
    %1466 = vmatprep.subr.mxu0 %v241
    %1467 = vmatpush1.msra.mxu0 %v240
    %1468 = vmatprep.subr.mxu0 %v245
    %1469 = vmatpush1.msra.mxu0 %v244
    %1470 = vmatprep.subr.mxu0 %v249
    %1471 = vmatpush1.msra.mxu0 %v248
    %1472 = vmatprep.subr.mxu0 %v253
    %1473 = vmatpush1.msra.mxu0 %v252
    %1474 = vmatprep.subr.mxu0 %v257
    %1475 = vmatpush1.msra.mxu0 %v256
    %1476 = vmatprep.subr.mxu0 %v261
    %1477 = vmatpush1.msra.mxu0 %v260
    %1478 = vmatprep.subr.mxu0 %v265
    %1479 = vmatpush1.msra.mxu0 %v264
    %1480 = vmatprep.subr.mxu0 %v269
    %1481 = vmatpush1.msra.mxu0 %v268
    %1482 = vmatprep.subr.mxu0 %v273
    %1483 = vmatpush1.msra.mxu0 %v272
    %1484 = vmatprep.subr.mxu0 %v277
    %1485 = vmatpush1.msra.mxu0 %v276
    %1486 = vmatprep.subr.mxu0 %v281
    %1487 = vmatpush1.msra.mxu0 %v280
    %1488 = vmatprep.subr.mxu0 %v285
    %1489 = vmatpush1.msra.mxu0 %v284
    %1490 = vmatprep.subr.mxu0 %v289
    %1491 = vmatpush1.msra.mxu0 %v288
    %1492 = vmatprep.subr.mxu0 %v293
    %1493 = vmatpush1.msra.mxu0 %v292
    %1494 = vmatprep.subr.mxu0 %v297
    %1495 = vmatpush1.msra.mxu0 %v296
    %1496 = vmatprep.subr.mxu0 0.0
    %1497 = vmatpush1.msra.mxu0 0.0
    %1498 = vmatprep.subr.mxu0 0.0
    %1499 = vmatpush1.msra.mxu0 0.0
    %1500 = vmatprep.subr.mxu0 0.0
    %1501 = vmatpush1.msra.mxu0 0.0
    %1502 = vmatprep.subr.mxu0 0.0
    %1503 = vmatpush1.msra.mxu0 0.0
    %1504 = vmatprep.subr.mxu0 0.0
    %1505 = vmatpush1.msra.mxu0 0.0
    %1506 = vmatprep.subr.mxu0 0.0
    %1507 = vmatpush1.msra.mxu0 0.0
    %1508 = vmatprep.subr.mxu0 0.0
    %1509 = vmatpush1.msra.mxu0 0.0
    %1510 = vmatprep.subr.mxu0 0.0
    %1511 = vmatpush1.msra.mxu0 0.0
    %1512 = vmatprep.subr.mxu0 0.0
    %1513 = vmatpush1.msra.mxu0 0.0
    %1514 = vmatprep.subr.mxu0 0.0
    %1515 = vmatpush1.msra.mxu0 0.0
    %1516 = vmatprep.subr.mxu0 0.0
    %1517 = vmatpush1.msra.mxu0 0.0
    %1518 = vmatprep.subr.mxu0 0.0
    %1519 = vmatpush1.msra.mxu0 0.0
    %1520 = vmatprep.subr.mxu0 0.0
    %1521 = vmatpush1.msra.mxu0 0.0
    %1522 = vmatprep.subr.mxu0 0.0
    %1523 = vmatpush1.msra.mxu0 0.0
    %1524 = vmatprep.subr.mxu0 0.0
    %1525 = vmatpush1.msra.mxu0 0.0
    %1526 = vmatprep.subr.mxu0 0.0
    %1527 = vmatpush1.msra.mxu0 0.0
    %1528 = vmatprep.mubr.f32.mxu0 0.0
    %1529 = vmatmul.mubr.f32.gmra.mrb[0].mxu0 %v1391
    %v1530 = vpop.f32.mrb[0].mxu0
    %v1531 = vadd.f32 0.0, %v1530
    %v1532 = vpop.f32.mrb[0].mxu0
    %v1533 = vadd.f32 0.0, %v1532
    %1534 = vdwg.mxu0
    %v1539 = vrot.slane %v1460, 4
    %v1540 = vrot.slane %v1462, 4
    %v1541 = vrot.slane %v1531, 4
    %v1542 = vrot.slane %v1533, 4
    %v1547 = vadd.f32 %v153, %v1539
    %v1548 = vadd.f32 %v155, %v1540
    %v1549 = vadd.f32 %v230, %v1541
    %v1550 = vadd.f32 %v232, %v1542
    %v1551 = vxor.u32 %v1547, 2147483648
    %v1552 = vxor.u32 %v1548, 2147483648
    %v1553 = vxor.u32 %v1549, 2147483648
    %v1554 = vmul.f32 %v1551, 1.442695
    %v1555 = vpow.pop %v1554
    %v1556 = vmul.f32 %v1552, 1.442695
    %v1557 = vpow.pop %v1556
    %v1558 = vmul.f32 %v1553, 1.442695
    %v1559 = vpow.pop %v1558
    %v1560 = vadd.f32 %v1555, 1.0
    %v1561 = vadd.f32 %v1557, 1.0
    %v1562 = vadd.f32 %v1559, 1.0
    %v1563 = vrcp.pop %v1560
    %v1564 = vmul.f32 1.0, %v1563
    %v1565 = vrcp.pop %v1561
    %v1566 = vmul.f32 1.0, %v1565
    %v1567 = vrcp.pop %v1562
    %v1568 = vmul.f32 1.0, %v1567
    %v1569 = vtanh.pop %v1550
    %v1571 = vrot.slane %v1387, 6
    %v1573 = vmul.f32 %v1566, %v1571
    %v1574 = vmul.f32 %v1564, %v1569
    %v1575 = vadd.f32 %v1573, %v1574
    %v1576 = vtanh.pop %v1575
    %v1577 = vmul.f32 %v1568, %v1576
    %v1579 = vrot.slane %v1577, 4
    %1581 = vmatprep.subr.mxu0 %v235
    %1582 = vmatpush1.msra.mxu0 %v234
    %1583 = vmatprep.subr.mxu0 %v239
    %1584 = vmatpush1.msra.mxu0 %v238
    %1585 = vmatprep.subr.mxu0 %v243
    %1586 = vmatpush1.msra.mxu0 %v242
    %1587 = vmatprep.subr.mxu0 %v247
    %1588 = vmatpush1.msra.mxu0 %v246
    %1589 = vmatprep.subr.mxu0 %v251
    %1590 = vmatpush1.msra.mxu0 %v250
    %1591 = vmatprep.subr.mxu0 %v255
    %1592 = vmatpush1.msra.mxu0 %v254
    %1593 = vmatprep.subr.mxu0 %v259
    %1594 = vmatpush1.msra.mxu0 %v258
    %1595 = vmatprep.subr.mxu0 %v263
    %1596 = vmatpush1.msra.mxu0 %v262
    %1597 = vmatprep.subr.mxu0 %v267
    %1598 = vmatpush1.msra.mxu0 %v266
    %1599 = vmatprep.subr.mxu0 %v271
    %1600 = vmatpush1.msra.mxu0 %v270
    %1601 = vmatprep.subr.mxu0 %v275
    %1602 = vmatpush1.msra.mxu0 %v274
    %1603 = vmatprep.subr.mxu0 %v279
    %1604 = vmatpush1.msra.mxu0 %v278
    %1605 = vmatprep.subr.mxu0 %v283
    %1606 = vmatpush1.msra.mxu0 %v282
    %1607 = vmatprep.subr.mxu0 %v287
    %1608 = vmatpush1.msra.mxu0 %v286
    %1609 = vmatprep.subr.mxu0 %v291
    %1610 = vmatpush1.msra.mxu0 %v290
    %1611 = vmatprep.subr.mxu0 %v295
    %1612 = vmatpush1.msra.mxu0 %v294
    %1613 = vmatprep.subr.mxu0 0.0
    %1614 = vmatpush1.msra.mxu0 0.0
    %1615 = vmatprep.subr.mxu0 0.0
    %1616 = vmatpush1.msra.mxu0 0.0
    %1617 = vmatprep.subr.mxu0 0.0
    %1618 = vmatpush1.msra.mxu0 0.0
    %1619 = vmatprep.subr.mxu0 0.0
    %1620 = vmatpush1.msra.mxu0 0.0
    %1621 = vmatprep.subr.mxu0 0.0
    %1622 = vmatpush1.msra.mxu0 0.0
    %1623 = vmatprep.subr.mxu0 0.0
    %1624 = vmatpush1.msra.mxu0 0.0
    %1625 = vmatprep.subr.mxu0 0.0
    %1626 = vmatpush1.msra.mxu0 0.0
    %1627 = vmatprep.subr.mxu0 0.0
    %1628 = vmatpush1.msra.mxu0 0.0
    %1629 = vmatprep.subr.mxu0 0.0
    %1630 = vmatpush1.msra.mxu0 0.0
    %1631 = vmatprep.subr.mxu0 0.0
    %1632 = vmatpush1.msra.mxu0 0.0
    %1633 = vmatprep.subr.mxu0 0.0
    %1634 = vmatpush1.msra.mxu0 0.0
    %1635 = vmatprep.subr.mxu0 0.0
    %1636 = vmatpush1.msra.mxu0 0.0
    %1637 = vmatprep.subr.mxu0 0.0
    %1638 = vmatpush1.msra.mxu0 0.0
    %1639 = vmatprep.subr.mxu0 0.0
    %1640 = vmatpush1.msra.mxu0 0.0
    %1641 = vmatprep.subr.mxu0 0.0
    %1642 = vmatpush1.msra.mxu0 0.0
    %1643 = vmatprep.subr.mxu0 0.0
    %1644 = vmatpush1.msra.mxu0 0.0
    %1645 = vmatprep.mubr.f32.mxu0 0.0
    %1646 = vmatmul.mubr.f32.gmra.mrb[0].mxu0 %v1579
    %v1647 = vpop.f32.mrb[0].mxu0
    %v1648 = vadd.f32 0.0, %v1647
    %v1649 = vpop.f32.mrb[0].mxu0
    %v1650 = vadd.f32 0.0, %v1649
    %1651 = vdwg.mxu0
    %1652 = vmatprep.subr.mxu0 %v237
    %1653 = vmatpush1.msra.mxu0 %v236
    %1654 = vmatprep.subr.mxu0 %v241
    %1655 = vmatpush1.msra.mxu0 %v240
    %1656 = vmatprep.subr.mxu0 %v245
    %1657 = vmatpush1.msra.mxu0 %v244
    %1658 = vmatprep.subr.mxu0 %v249
    %1659 = vmatpush1.msra.mxu0 %v248
    %1660 = vmatprep.subr.mxu0 %v253
    %1661 = vmatpush1.msra.mxu0 %v252
    %1662 = vmatprep.subr.mxu0 %v257
    %1663 = vmatpush1.msra.mxu0 %v256
    %1664 = vmatprep.subr.mxu0 %v261
    %1665 = vmatpush1.msra.mxu0 %v260
    %1666 = vmatprep.subr.mxu0 %v265
    %1667 = vmatpush1.msra.mxu0 %v264
    %1668 = vmatprep.subr.mxu0 %v269
    %1669 = vmatpush1.msra.mxu0 %v268
    %1670 = vmatprep.subr.mxu0 %v273
    %1671 = vmatpush1.msra.mxu0 %v272
    %1672 = vmatprep.subr.mxu0 %v277
    %1673 = vmatpush1.msra.mxu0 %v276
    %1674 = vmatprep.subr.mxu0 %v281
    %1675 = vmatpush1.msra.mxu0 %v280
    %1676 = vmatprep.subr.mxu0 %v285
    %1677 = vmatpush1.msra.mxu0 %v284
    %1678 = vmatprep.subr.mxu0 %v289
    %1679 = vmatpush1.msra.mxu0 %v288
    %1680 = vmatprep.subr.mxu0 %v293
    %1681 = vmatpush1.msra.mxu0 %v292
    %1682 = vmatprep.subr.mxu0 %v297
    %1683 = vmatpush1.msra.mxu0 %v296
    %1684 = vmatprep.subr.mxu0 0.0
    %1685 = vmatpush1.msra.mxu0 0.0
    %1686 = vmatprep.subr.mxu0 0.0
    %1687 = vmatpush1.msra.mxu0 0.0
    %1688 = vmatprep.subr.mxu0 0.0
    %1689 = vmatpush1.msra.mxu0 0.0
    %1690 = vmatprep.subr.mxu0 0.0
    %1691 = vmatpush1.msra.mxu0 0.0
    %1692 = vmatprep.subr.mxu0 0.0
    %1693 = vmatpush1.msra.mxu0 0.0
    %1694 = vmatprep.subr.mxu0 0.0
    %1695 = vmatpush1.msra.mxu0 0.0
    %1696 = vmatprep.subr.mxu0 0.0
    %1697 = vmatpush1.msra.mxu0 0.0
    %1698 = vmatprep.subr.mxu0 0.0
    %1699 = vmatpush1.msra.mxu0 0.0
    %1700 = vmatprep.subr.mxu0 0.0
    %1701 = vmatpush1.msra.mxu0 0.0
    %1702 = vmatprep.subr.mxu0 0.0
    %1703 = vmatpush1.msra.mxu0 0.0
    %1704 = vmatprep.subr.mxu0 0.0
    %1705 = vmatpush1.msra.mxu0 0.0
    %1706 = vmatprep.subr.mxu0 0.0
    %1707 = vmatpush1.msra.mxu0 0.0
    %1708 = vmatprep.subr.mxu0 0.0
    %1709 = vmatpush1.msra.mxu0 0.0
    %1710 = vmatprep.subr.mxu0 0.0
    %1711 = vmatpush1.msra.mxu0 0.0
    %1712 = vmatprep.subr.mxu0 0.0
    %1713 = vmatpush1.msra.mxu0 0.0
    %1714 = vmatprep.subr.mxu0 0.0
    %1715 = vmatpush1.msra.mxu0 0.0
    %1716 = vmatprep.mubr.f32.mxu0 0.0
    %1717 = vmatmul.mubr.f32.gmra.mrb[0].mxu0 %v1579
    %v1718 = vpop.f32.mrb[0].mxu0
    %v1719 = vpop.f32.mrb[0].mxu0
    %v1720 = vadd.f32 0.0, %v1719
    %1721 = vdwg.mxu0
    %v1725 = vrot.slane %v1648, 2
    %v1726 = vrot.slane %v1650, 2
    %v1727 = vrot.slane %v1720, 2
    %v1731 = vadd.f32 %v153, %v1725
    %v1732 = vadd.f32 %v155, %v1726
    %v1733 = vadd.f32 %v232, %v1727
    %v1734 = vxor.u32 %v1731, 2147483648
    %v1735 = vxor.u32 %v1732, 2147483648
    %v1736 = vmul.f32 %v1734, 1.442695
    %v1737 = vpow.pop %v1736
    %v1738 = vmul.f32 %v1735, 1.442695
    %v1739 = vpow.pop %v1738
    %v1740 = vadd.f32 %v1737, 1.0
    %v1741 = vadd.f32 %v1739, 1.0
    %v1742 = vrcp.pop %v1740
    %v1743 = vmul.f32 1.0, %v1742
    %v1744 = vrcp.pop %v1741
    %v1745 = vmul.f32 1.0, %v1744
    %v1746 = vtanh.pop %v1733
    %v1748 = vrot.slane %v1575, 6
    %v1750 = vmul.f32 %v1745, %v1748
    %v1751 = vmul.f32 %v1743, %v1746
    %v1752 = vadd.f32 %v1750, %v1751
    %v1753 = vld [vmem:[%s4] sm:$0xff]
    %v1754 = vld [vmem:[%s4 + $0x8] sm:$0xff]
    %v1755 = vld [vmem:[%s4 + $0x10] sm:$0xff]
    %v1756 = vld [vmem:[%s4 + $0x18] sm:$0xff]
    %v1757 = vld [vmem:[%s4 + $0x20] sm:$0xff]
    %v1758 = vld [vmem:[%s4 + $0x28] sm:$0xff]
    %v1759 = vld [vmem:[%s4 + $0x30] sm:$0xff]
    %v1760 = vld [vmem:[%s4 + $0x38] sm:$0xff]
    %v1761 = vld [vmem:[%s4 + $0x40] sm:$0xff]
    %v1762 = vld [vmem:[%s4 + $0x48] sm:$0xff]
    %v1763 = vld [vmem:[%s4 + $0x50] sm:$0xff]
    %v1764 = vld [vmem:[%s4 + $0x58] sm:$0xff]
    %v1765 = vld [vmem:[%s4 + $0x60] sm:$0xff]
    %v1766 = vld [vmem:[%s4 + $0x68] sm:$0xff]
    %v1767 = vld [vmem:[%s4 + $0x70] sm:$0xff]
    %v1768 = vld [vmem:[%s4 + $0x78] sm:$0xff]
    %v1769 = vld [vmem:[%s5] sm:$0x1]
    %v1771 = vlaneseq
    %v1772 = vshrl.u32 %v1771, 7
    %v1773 = vsub.s32 0, %v1772
    %v1774 = vrot.slane %v1769, %v1773
    %v1777 = vrot.slane %v1752, 6
    %1779 = vmatprep.subr.mxu0 0.0
    %1780 = vmatpush1.msra.mxu0 %v1753
    %1781 = vmatprep.subr.mxu0 0.0
    %1782 = vmatpush1.msra.mxu0 %v1754
    %1783 = vmatprep.subr.mxu0 0.0
    %1784 = vmatpush1.msra.mxu0 %v1755
    %1785 = vmatprep.subr.mxu0 0.0
    %1786 = vmatpush1.msra.mxu0 %v1756
    %1787 = vmatprep.subr.mxu0 0.0
    %1788 = vmatpush1.msra.mxu0 %v1757
    %1789 = vmatprep.subr.mxu0 0.0
    %1790 = vmatpush1.msra.mxu0 %v1758
    %1791 = vmatprep.subr.mxu0 0.0
    %1792 = vmatpush1.msra.mxu0 %v1759
    %1793 = vmatprep.subr.mxu0 0.0
    %1794 = vmatpush1.msra.mxu0 %v1760
    %1795 = vmatprep.subr.mxu0 0.0
    %1796 = vmatpush1.msra.mxu0 %v1761
    %1797 = vmatprep.subr.mxu0 0.0
    %1798 = vmatpush1.msra.mxu0 %v1762
    %1799 = vmatprep.subr.mxu0 0.0
    %1800 = vmatpush1.msra.mxu0 %v1763
    %1801 = vmatprep.subr.mxu0 0.0
    %1802 = vmatpush1.msra.mxu0 %v1764
    %1803 = vmatprep.subr.mxu0 0.0
    %1804 = vmatpush1.msra.mxu0 %v1765
    %1805 = vmatprep.subr.mxu0 0.0
    %1806 = vmatpush1.msra.mxu0 %v1766
    %1807 = vmatprep.subr.mxu0 0.0
    %1808 = vmatpush1.msra.mxu0 %v1767
    %1809 = vmatprep.subr.mxu0 0.0
    %1810 = vmatpush1.msra.mxu0 %v1768
    %1811 = vmatprep.subr.mxu0 0.0
    %1812 = vmatpush1.msra.mxu0 0.0
    %1813 = vmatprep.subr.mxu0 0.0
    %1814 = vmatpush1.msra.mxu0 0.0
    %1815 = vmatprep.subr.mxu0 0.0
    %1816 = vmatpush1.msra.mxu0 0.0
    %1817 = vmatprep.subr.mxu0 0.0
    %1818 = vmatpush1.msra.mxu0 0.0
    %1819 = vmatprep.subr.mxu0 0.0
    %1820 = vmatpush1.msra.mxu0 0.0
    %1821 = vmatprep.subr.mxu0 0.0
    %1822 = vmatpush1.msra.mxu0 0.0
    %1823 = vmatprep.subr.mxu0 0.0
    %1824 = vmatpush1.msra.mxu0 0.0
    %1825 = vmatprep.subr.mxu0 0.0
    %1826 = vmatpush1.msra.mxu0 0.0
    %1827 = vmatprep.subr.mxu0 0.0
    %1828 = vmatpush1.msra.mxu0 0.0
    %1829 = vmatprep.subr.mxu0 0.0
    %1830 = vmatpush1.msra.mxu0 0.0
    %1831 = vmatprep.subr.mxu0 0.0
    %1832 = vmatpush1.msra.mxu0 0.0
    %1833 = vmatprep.subr.mxu0 0.0
    %1834 = vmatpush1.msra.mxu0 0.0
    %1835 = vmatprep.subr.mxu0 0.0
    %1836 = vmatpush1.msra.mxu0 0.0
    %1837 = vmatprep.subr.mxu0 0.0
    %1838 = vmatpush1.msra.mxu0 0.0
    %1839 = vmatprep.subr.mxu0 0.0
    %1840 = vmatpush1.msra.mxu0 0.0
    %1841 = vmatprep.subr.mxu0 0.0
    %1842 = vmatpush1.msra.mxu0 0.0
    %1843 = vmatprep.mubr.f32.mxu0 0.0
    %1844 = vmatmul.mubr.f32.gmra.mrb[0].mxu0 %v1777
    %v1845 = vpop.f32.mrb[0].mxu0
    %v1846 = vadd.f32 %v1774, %v1845
    %v1847 = vpop.f32.mrb[0].mxu0
    %1848 = vdwg.mxu0
    %v1849 = vmax.f32 %v1846, 0.0
    %vm1850 = vcmask 58368
    %1851 = vst.msk [vmem:[#allocation2] sm:$0x3] %vm1850, %v1849
    %v1852 = vld [vmem:[%s6] sm:$0xff]
    %v1853 = vld [vmem:[%s7] sm:$0x1]
    %v1855 = vlaneseq
    %v1856 = vshrl.u32 %v1855, 7
    %v1857 = vsub.s32 0, %v1856
    %v1858 = vrot.slane %v1853, %v1857
    %vm1860 = vcmask 64512
    %v1862 = vsel %vm1860, %v1849, 0
    %1864 = vmatprep.subr.mxu0 0.0
    %1865 = vmatpush1.msra.mxu0 %v1852
    %1866 = vmatprep.subr.mxu0 0.0
    %1867 = vmatpush1.msra.mxu0 0.0
    %1868 = vmatprep.subr.mxu0 0.0
    %1869 = vmatpush1.msra.mxu0 0.0
    %1870 = vmatprep.subr.mxu0 0.0
    %1871 = vmatpush1.msra.mxu0 0.0
    %1872 = vmatprep.subr.mxu0 0.0
    %1873 = vmatpush1.msra.mxu0 0.0
    %1874 = vmatprep.subr.mxu0 0.0
    %1875 = vmatpush1.msra.mxu0 0.0
    %1876 = vmatprep.subr.mxu0 0.0
    %1877 = vmatpush1.msra.mxu0 0.0
    %1878 = vmatprep.subr.mxu0 0.0
    %1879 = vmatpush1.msra.mxu0 0.0
    %1880 = vmatprep.subr.mxu0 0.0
    %1881 = vmatpush1.msra.mxu0 0.0
    %1882 = vmatprep.subr.mxu0 0.0
    %1883 = vmatpush1.msra.mxu0 0.0
    %1884 = vmatprep.subr.mxu0 0.0
    %1885 = vmatpush1.msra.mxu0 0.0
    %1886 = vmatprep.subr.mxu0 0.0
    %1887 = vmatpush1.msra.mxu0 0.0
    %1888 = vmatprep.subr.mxu0 0.0
    %1889 = vmatpush1.msra.mxu0 0.0
    %1890 = vmatprep.subr.mxu0 0.0
    %1891 = vmatpush1.msra.mxu0 0.0
    %1892 = vmatprep.subr.mxu0 0.0
    %1893 = vmatpush1.msra.mxu0 0.0
    %1894 = vmatprep.subr.mxu0 0.0
    %1895 = vmatpush1.msra.mxu0 0.0
    %1896 = vmatprep.subr.mxu0 0.0
    %1897 = vmatpush1.msra.mxu0 0.0
    %1898 = vmatprep.subr.mxu0 0.0
    %1899 = vmatpush1.msra.mxu0 0.0
    %1900 = vmatprep.subr.mxu0 0.0
    %1901 = vmatpush1.msra.mxu0 0.0
    %1902 = vmatprep.subr.mxu0 0.0
    %1903 = vmatpush1.msra.mxu0 0.0
    %1904 = vmatprep.subr.mxu0 0.0
    %1905 = vmatpush1.msra.mxu0 0.0
    %1906 = vmatprep.subr.mxu0 0.0
    %1907 = vmatpush1.msra.mxu0 0.0
    %1908 = vmatprep.subr.mxu0 0.0
    %1909 = vmatpush1.msra.mxu0 0.0
    %1910 = vmatprep.subr.mxu0 0.0
    %1911 = vmatpush1.msra.mxu0 0.0
    %1912 = vmatprep.subr.mxu0 0.0
    %1913 = vmatpush1.msra.mxu0 0.0
    %1914 = vmatprep.subr.mxu0 0.0
    %1915 = vmatpush1.msra.mxu0 0.0
    %1916 = vmatprep.subr.mxu0 0.0
    %1917 = vmatpush1.msra.mxu0 0.0
    %1918 = vmatprep.subr.mxu0 0.0
    %1919 = vmatpush1.msra.mxu0 0.0
    %1920 = vmatprep.subr.mxu0 0.0
    %1921 = vmatpush1.msra.mxu0 0.0
    %1922 = vmatprep.subr.mxu0 0.0
    %1923 = vmatpush1.msra.mxu0 0.0
    %1924 = vmatprep.subr.mxu0 0.0
    %1925 = vmatpush1.msra.mxu0 0.0
    %1926 = vmatprep.subr.mxu0 0.0
    %1927 = vmatpush1.msra.mxu0 0.0
    %1928 = vmatprep.mubr.f32.mxu0 0.0
    %1929 = vmatmul.mubr.f32.gmra.mrb[0].mxu0 %v1862
    %v1930 = vpop.f32.mrb[0].mxu0
    %v1931 = vadd.f32 %v1858, %v1930
    %v1932 = vpop.f32.mrb[0].mxu0
    %1933 = vdwg.mxu0
    %v1934 = vmax.f32 %v1931, 0.0
    %v1935 = vld [vmem:[%s8] sm:$0xff]
    %v1936 = vld [vmem:[%s8 + $0x8] sm:$0xff]
    %v1937 = vld [vmem:[%s8 + $0x10] sm:$0xff]
    %v1938 = vld [vmem:[%s8 + $0x18] sm:$0xff]
    %v1939 = vld [vmem:[%s8 + $0x20] sm:$0xff]
    %v1940 = vld [vmem:[%s8 + $0x28] sm:$0xff]
    %v1941 = vld [vmem:[%s8 + $0x30] sm:$0xff]
    %v1942 = vld [vmem:[%s8 + $0x38] sm:$0xff]
    %v1943 = vld [vmem:[%s8 + $0x40] sm:$0xff]
    %v1944 = vld [vmem:[%s8 + $0x48] sm:$0xff]
    %v1945 = vld [vmem:[%s8 + $0x50] sm:$0xff]
    %v1946 = vld [vmem:[%s8 + $0x58] sm:$0xff]
    %v1947 = vld [vmem:[%s8 + $0x60] sm:$0xff]
    %v1948 = vld [vmem:[%s8 + $0x68] sm:$0xff]
    %v1949 = vld [vmem:[%s8 + $0x70] sm:$0xff]
    %v1950 = vld [vmem:[%s8 + $0x78] sm:$0xff]
    %v1951 = vld [vmem:[%s10] sm:$0xf]
    %v1953 = vlaneseq
    %v1954 = vshrl.u32 %v1953, 7
    %v1955 = vsub.s32 0, %v1954
    %v1956 = vrot.slane %v1951, %v1955
    %v1957 = vlaneseq
    %v1958 = vshrl.u32 %v1957, 7
    %v1959 = vsub.s32 1, %v1958
    %v1960 = vrot.slane %v1951, %v1959
    %v1961 = vlaneseq
    %v1962 = vshrl.u32 %v1961, 7
    %v1963 = vsub.s32 2, %v1962
    %v1964 = vrot.slane %v1951, %v1963
    %v1965 = vlaneseq
    %v1966 = vshrl.u32 %v1965, 7
    %v1967 = vsub.s32 3, %v1966
    %v1968 = vrot.slane %v1951, %v1967
    %vm1973 = vcmask 261120
    %v1975 = vsel %vm1973, %v1934, 0
    %1977 = vmatprep.subr.mxu0 %v1936
    %1978 = vmatpush1.msra.mxu0 %v1935
    %1979 = vmatprep.subr.mxu0 %v1940
    %1980 = vmatpush1.msra.mxu0 %v1939
    %1981 = vmatprep.subr.mxu0 %v1944
    %1982 = vmatpush1.msra.mxu0 %v1943
    %1983 = vmatprep.subr.mxu0 %v1948
    %1984 = vmatpush1.msra.mxu0 %v1947
    %1985 = vmatprep.subr.mxu0 0.0
    %1986 = vmatpush1.msra.mxu0 0.0
    %1987 = vmatprep.subr.mxu0 0.0
    %1988 = vmatpush1.msra.mxu0 0.0
    %1989 = vmatprep.subr.mxu0 0.0
    %1990 = vmatpush1.msra.mxu0 0.0
    %1991 = vmatprep.subr.mxu0 0.0
    %1992 = vmatpush1.msra.mxu0 0.0
    %1993 = vmatprep.subr.mxu0 0.0
    %1994 = vmatpush1.msra.mxu0 0.0
    %1995 = vmatprep.subr.mxu0 0.0
    %1996 = vmatpush1.msra.mxu0 0.0
    %1997 = vmatprep.subr.mxu0 0.0
    %1998 = vmatpush1.msra.mxu0 0.0
    %1999 = vmatprep.subr.mxu0 0.0
    %2000 = vmatpush1.msra.mxu0 0.0
    %2001 = vmatprep.subr.mxu0 0.0
    %2002 = vmatpush1.msra.mxu0 0.0
    %2003 = vmatprep.subr.mxu0 0.0
    %2004 = vmatpush1.msra.mxu0 0.0
    %2005 = vmatprep.subr.mxu0 0.0
    %2006 = vmatpush1.msra.mxu0 0.0
    %2007 = vmatprep.subr.mxu0 0.0
    %2008 = vmatpush1.msra.mxu0 0.0
    %2009 = vmatprep.subr.mxu0 0.0
    %2010 = vmatpush1.msra.mxu0 0.0
    %2011 = vmatprep.subr.mxu0 0.0
    %2012 = vmatpush1.msra.mxu0 0.0
    %2013 = vmatprep.subr.mxu0 0.0
    %2014 = vmatpush1.msra.mxu0 0.0
    %2015 = vmatprep.subr.mxu0 0.0
    %2016 = vmatpush1.msra.mxu0 0.0
    %2017 = vmatprep.subr.mxu0 0.0
    %2018 = vmatpush1.msra.mxu0 0.0
    %2019 = vmatprep.subr.mxu0 0.0
    %2020 = vmatpush1.msra.mxu0 0.0
    %2021 = vmatprep.subr.mxu0 0.0
    %2022 = vmatpush1.msra.mxu0 0.0
    %2023 = vmatprep.subr.mxu0 0.0
    %2024 = vmatpush1.msra.mxu0 0.0
    %2025 = vmatprep.subr.mxu0 0.0
    %2026 = vmatpush1.msra.mxu0 0.0
    %2027 = vmatprep.subr.mxu0 0.0
    %2028 = vmatpush1.msra.mxu0 0.0
    %2029 = vmatprep.subr.mxu0 0.0
    %2030 = vmatpush1.msra.mxu0 0.0
    %2031 = vmatprep.subr.mxu0 0.0
    %2032 = vmatpush1.msra.mxu0 0.0
    %2033 = vmatprep.subr.mxu0 0.0
    %2034 = vmatpush1.msra.mxu0 0.0
    %2035 = vmatprep.subr.mxu0 0.0
    %2036 = vmatpush1.msra.mxu0 0.0
    %2037 = vmatprep.subr.mxu0 0.0
    %2038 = vmatpush1.msra.mxu0 0.0
    %2039 = vmatprep.subr.mxu0 0.0
    %2040 = vmatpush1.msra.mxu0 0.0
    %2041 = vmatprep.mubr.f32.mxu0 0.0
    %2042 = vmatmul.mubr.f32.gmra.mrb[0].mxu0 %v1975
    %v2043 = vpop.f32.mrb[0].mxu0
    %v2044 = vadd.f32 %v1956, %v2043
    %v2045 = vpop.f32.mrb[0].mxu0
    %v2046 = vadd.f32 %v1960, %v2045
    %2047 = vdwg.mxu0
    %2048 = vmatprep.subr.mxu0 %v1938
    %2049 = vmatpush1.msra.mxu0 %v1937
    %2050 = vmatprep.subr.mxu0 %v1942
    %2051 = vmatpush1.msra.mxu0 %v1941
    %2052 = vmatprep.subr.mxu0 %v1946
    %2053 = vmatpush1.msra.mxu0 %v1945
    %2054 = vmatprep.subr.mxu0 %v1950
    %2055 = vmatpush1.msra.mxu0 %v1949
    %2056 = vmatprep.subr.mxu0 0.0
    %2057 = vmatpush1.msra.mxu0 0.0
    %2058 = vmatprep.subr.mxu0 0.0
    %2059 = vmatpush1.msra.mxu0 0.0
    %2060 = vmatprep.subr.mxu0 0.0
    %2061 = vmatpush1.msra.mxu0 0.0
    %2062 = vmatprep.subr.mxu0 0.0
    %2063 = vmatpush1.msra.mxu0 0.0
    %2064 = vmatprep.subr.mxu0 0.0
    %2065 = vmatpush1.msra.mxu0 0.0
    %2066 = vmatprep.subr.mxu0 0.0
    %2067 = vmatpush1.msra.mxu0 0.0
    %2068 = vmatprep.subr.mxu0 0.0
    %2069 = vmatpush1.msra.mxu0 0.0
    %2070 = vmatprep.subr.mxu0 0.0
    %2071 = vmatpush1.msra.mxu0 0.0
    %2072 = vmatprep.subr.mxu0 0.0
    %2073 = vmatpush1.msra.mxu0 0.0
    %2074 = vmatprep.subr.mxu0 0.0
    %2075 = vmatpush1.msra.mxu0 0.0
    %2076 = vmatprep.subr.mxu0 0.0
    %2077 = vmatpush1.msra.mxu0 0.0
    %2078 = vmatprep.subr.mxu0 0.0
    %2079 = vmatpush1.msra.mxu0 0.0
    %2080 = vmatprep.subr.mxu0 0.0
    %2081 = vmatpush1.msra.mxu0 0.0
    %2082 = vmatprep.subr.mxu0 0.0
    %2083 = vmatpush1.msra.mxu0 0.0
    %2084 = vmatprep.subr.mxu0 0.0
    %2085 = vmatpush1.msra.mxu0 0.0
    %2086 = vmatprep.subr.mxu0 0.0
    %2087 = vmatpush1.msra.mxu0 0.0
    %2088 = vmatprep.subr.mxu0 0.0
    %2089 = vmatpush1.msra.mxu0 0.0
    %2090 = vmatprep.subr.mxu0 0.0
    %2091 = vmatpush1.msra.mxu0 0.0
    %2092 = vmatprep.subr.mxu0 0.0
    %2093 = vmatpush1.msra.mxu0 0.0
    %2094 = vmatprep.subr.mxu0 0.0
    %2095 = vmatpush1.msra.mxu0 0.0
    %2096 = vmatprep.subr.mxu0 0.0
    %2097 = vmatpush1.msra.mxu0 0.0
    %2098 = vmatprep.subr.mxu0 0.0
    %2099 = vmatpush1.msra.mxu0 0.0
    %2100 = vmatprep.subr.mxu0 0.0
    %2101 = vmatpush1.msra.mxu0 0.0
    %2102 = vmatprep.subr.mxu0 0.0
    %2103 = vmatpush1.msra.mxu0 0.0
    %2104 = vmatprep.subr.mxu0 0.0
    %2105 = vmatpush1.msra.mxu0 0.0
    %2106 = vmatprep.subr.mxu0 0.0
    %2107 = vmatpush1.msra.mxu0 0.0
    %2108 = vmatprep.subr.mxu0 0.0
    %2109 = vmatpush1.msra.mxu0 0.0
    %2110 = vmatprep.subr.mxu0 0.0
    %2111 = vmatpush1.msra.mxu0 0.0
    %2112 = vmatprep.mubr.f32.mxu0 0.0
    %2113 = vmatmul.mubr.f32.gmra.mrb[0].mxu0 %v1975
    %v2114 = vpop.f32.mrb[0].mxu0
    %v2115 = vadd.f32 %v1964, %v2114
    %v2116 = vpop.f32.mrb[0].mxu0
    %v2117 = vadd.f32 %v1968, %v2116
    %2118 = vdwg.mxu0
    %v2119 = vld [vmem:[%s9] sm:$0xff]
    %v2120 = vld [vmem:[%s9 + $0x8] sm:$0xff]
    %v2121 = vld [vmem:[%s9 + $0x10] sm:$0xff]
    %v2122 = vld [vmem:[%s9 + $0x18] sm:$0xff]
    %v2123 = vld [vmem:[%s9 + $0x20] sm:$0xff]
    %v2124 = vld [vmem:[%s9 + $0x28] sm:$0xff]
    %v2125 = vld [vmem:[%s9 + $0x30] sm:$0xff]
    %v2126 = vld [vmem:[%s9 + $0x38] sm:$0xff]
    %v2127 = vld [vmem:[%s9 + $0x40] sm:$0xff]
    %v2128 = vld [vmem:[%s9 + $0x48] sm:$0xff]
    %v2129 = vld [vmem:[%s9 + $0x50] sm:$0xff]
    %v2130 = vld [vmem:[%s9 + $0x58] sm:$0xff]
    %v2131 = vld [vmem:[%s9 + $0x60] sm:$0xff]
    %v2132 = vld [vmem:[%s9 + $0x68] sm:$0xff]
    %v2133 = vld [vmem:[%s9 + $0x70] sm:$0xff]
    %v2134 = vld [vmem:[%s9 + $0x78] sm:$0xff]
    %v2135 = vld [vmem:[%s9 + $0x80] sm:$0xff]
    %v2136 = vld [vmem:[%s9 + $0x88] sm:$0xff]
    %v2137 = vld [vmem:[%s9 + $0x90] sm:$0xff]
    %v2138 = vld [vmem:[%s9 + $0x98] sm:$0xff]
    %v2139 = vld [vmem:[%s9 + $0xa0] sm:$0xff]
    %v2140 = vld [vmem:[%s9 + $0xa8] sm:$0xff]
    %v2141 = vld [vmem:[%s9 + $0xb0] sm:$0xff]
    %v2142 = vld [vmem:[%s9 + $0xb8] sm:$0xff]
    %v2143 = vld [vmem:[%s9 + $0xc0] sm:$0xff]
    %v2144 = vld [vmem:[%s9 + $0xc8] sm:$0xff]
    %v2145 = vld [vmem:[%s9 + $0xd0] sm:$0xff]
    %v2146 = vld [vmem:[%s9 + $0xd8] sm:$0xff]
    %v2147 = vld [vmem:[%s9 + $0xe0] sm:$0xff]
    %v2148 = vld [vmem:[%s9 + $0xe8] sm:$0xff]
    %v2149 = vld [vmem:[%s9 + $0xf0] sm:$0xff]
    %v2150 = vld [vmem:[%s9 + $0xf8] sm:$0xff]
    %v2151 = vld [vmem:[%s9 + $0x100] sm:$0xff]
    %v2152 = vld [vmem:[%s9 + $0x108] sm:$0xff]
    %v2153 = vld [vmem:[%s9 + $0x110] sm:$0xff]
    %v2154 = vld [vmem:[%s9 + $0x118] sm:$0xff]
    %v2155 = vld [vmem:[%s9 + $0x120] sm:$0xff]
    %v2156 = vld [vmem:[%s9 + $0x128] sm:$0xff]
    %v2157 = vld [vmem:[%s9 + $0x130] sm:$0xff]
    %v2158 = vld [vmem:[%s9 + $0x138] sm:$0xff]
    %v2159 = vld [vmem:[%s9 + $0x140] sm:$0xff]
    %v2160 = vld [vmem:[%s9 + $0x148] sm:$0xff]
    %v2161 = vld [vmem:[%s9 + $0x150] sm:$0xff]
    %v2162 = vld [vmem:[%s9 + $0x158] sm:$0xff]
    %v2163 = vld [vmem:[%s9 + $0x160] sm:$0xff]
    %v2164 = vld [vmem:[%s9 + $0x168] sm:$0xff]
    %v2165 = vld [vmem:[%s9 + $0x170] sm:$0xff]
    %v2166 = vld [vmem:[%s9 + $0x178] sm:$0xff]
    %v2167 = vld [vmem:[%s9 + $0x180] sm:$0xff]
    %v2168 = vld [vmem:[%s9 + $0x188] sm:$0xff]
    %v2169 = vld [vmem:[%s9 + $0x190] sm:$0xff]
    %v2170 = vld [vmem:[%s9 + $0x198] sm:$0xff]
    %v2171 = vld [vmem:[%s9 + $0x1a0] sm:$0xff]
    %v2172 = vld [vmem:[%s9 + $0x1a8] sm:$0xff]
    %v2173 = vld [vmem:[%s9 + $0x1b0] sm:$0xff]
    %v2174 = vld [vmem:[%s9 + $0x1b8] sm:$0xff]
    %v2175 = vld [vmem:[%s9 + $0x1c0] sm:$0xff]
    %v2176 = vld [vmem:[%s9 + $0x1c8] sm:$0xff]
    %v2177 = vld [vmem:[%s9 + $0x1d0] sm:$0xff]
    %v2178 = vld [vmem:[%s9 + $0x1d8] sm:$0xff]
    %v2179 = vld [vmem:[%s9 + $0x1e0] sm:$0xff]
    %v2180 = vld [vmem:[%s9 + $0x1e8] sm:$0xff]
    %v2181 = vld [vmem:[%s9 + $0x1f0] sm:$0xff]
    %v2182 = vld [vmem:[%s9 + $0x1f8] sm:$0xff]
    %v2183 = vld [vmem:[%s9 + $0x200] sm:$0xff]
    %v2184 = vld [vmem:[%s9 + $0x208] sm:$0xff]
    %v2185 = vld [vmem:[%s9 + $0x210] sm:$0xff]
    %v2186 = vld [vmem:[%s9 + $0x218] sm:$0xff]
    %v2187 = vld [vmem:[%s9 + $0x220] sm:$0xff]
    %v2188 = vld [vmem:[%s9 + $0x228] sm:$0xff]
    %v2189 = vld [vmem:[%s9 + $0x230] sm:$0xff]
    %v2190 = vld [vmem:[%s9 + $0x238] sm:$0xff]
    %v2191 = vld [vmem:[%s9 + $0x240] sm:$0xff]
    %v2192 = vld [vmem:[%s9 + $0x248] sm:$0xff]
    %v2193 = vld [vmem:[%s9 + $0x250] sm:$0xff]
    %v2194 = vld [vmem:[%s9 + $0x258] sm:$0xff]
    %v2195 = vld [vmem:[%s9 + $0x260] sm:$0xff]
    %v2196 = vld [vmem:[%s9 + $0x268] sm:$0xff]
    %v2197 = vld [vmem:[%s9 + $0x270] sm:$0xff]
    %v2198 = vld [vmem:[%s9 + $0x278] sm:$0xff]
    %v2199 = vld [vmem:[%s9 + $0x280] sm:$0xff]
    %v2200 = vld [vmem:[%s9 + $0x288] sm:$0xff]
    %v2201 = vld [vmem:[%s9 + $0x290] sm:$0xff]
    %v2202 = vld [vmem:[%s9 + $0x298] sm:$0xff]
    %v2203 = vld [vmem:[%s9 + $0x2a0] sm:$0xff]
    %v2204 = vld [vmem:[%s9 + $0x2a8] sm:$0xff]
    %v2205 = vld [vmem:[%s9 + $0x2b0] sm:$0xff]
    %v2206 = vld [vmem:[%s9 + $0x2b8] sm:$0xff]
    %v2207 = vld [vmem:[%s9 + $0x2c0] sm:$0xff]
    %v2208 = vld [vmem:[%s9 + $0x2c8] sm:$0xff]
    %v2209 = vld [vmem:[%s9 + $0x2d0] sm:$0xff]
    %v2210 = vld [vmem:[%s9 + $0x2d8] sm:$0xff]
    %v2211 = vld [vmem:[%s9 + $0x2e0] sm:$0xff]
    %v2212 = vld [vmem:[%s9 + $0x2e8] sm:$0xff]
    %v2213 = vld [vmem:[%s9 + $0x2f0] sm:$0xff]
    %v2214 = vld [vmem:[%s9 + $0x2f8] sm:$0xff]
    %v2215 = vld [vmem:[%s9 + $0x300] sm:$0xff]
    %v2216 = vld [vmem:[%s9 + $0x308] sm:$0xff]
    %v2217 = vld [vmem:[%s9 + $0x310] sm:$0xff]
    %v2218 = vld [vmem:[%s9 + $0x318] sm:$0xff]
    %v2219 = vld [vmem:[%s9 + $0x320] sm:$0xff]
    %v2220 = vld [vmem:[%s9 + $0x328] sm:$0xff]
    %v2221 = vld [vmem:[%s9 + $0x330] sm:$0xff]
    %v2222 = vld [vmem:[%s9 + $0x338] sm:$0xff]
    %v2223 = vld [vmem:[%s9 + $0x340] sm:$0xff]
    %v2224 = vld [vmem:[%s9 + $0x348] sm:$0xff]
    %v2225 = vld [vmem:[%s9 + $0x350] sm:$0xff]
    %v2226 = vld [vmem:[%s9 + $0x358] sm:$0xff]
    %v2227 = vld [vmem:[%s9 + $0x360] sm:$0xff]
    %v2228 = vld [vmem:[%s9 + $0x368] sm:$0xff]
    %v2229 = vld [vmem:[%s9 + $0x370] sm:$0xff]
    %v2230 = vld [vmem:[%s9 + $0x378] sm:$0xff]
    %v2231 = vld [vmem:[%s9 + $0x380] sm:$0xff]
    %v2232 = vld [vmem:[%s9 + $0x388] sm:$0xff]
    %v2233 = vld [vmem:[%s9 + $0x390] sm:$0xff]
    %v2234 = vld [vmem:[%s9 + $0x398] sm:$0xff]
    %v2235 = vld [vmem:[%s9 + $0x3a0] sm:$0xff]
    %v2236 = vld [vmem:[%s9 + $0x3a8] sm:$0xff]
    %v2237 = vld [vmem:[%s9 + $0x3b0] sm:$0xff]
    %v2238 = vld [vmem:[%s9 + $0x3b8] sm:$0xff]
    %v2239 = vld [vmem:[%s9 + $0x3c0] sm:$0xff]
    %v2240 = vld [vmem:[%s9 + $0x3c8] sm:$0xff]
    %v2241 = vld [vmem:[%s9 + $0x3d0] sm:$0xff]
    %v2242 = vld [vmem:[%s9 + $0x3d8] sm:$0xff]
    %v2243 = vld [vmem:[%s9 + $0x3e0] sm:$0xff]
    %v2244 = vld [vmem:[%s9 + $0x3e8] sm:$0xff]
    %v2245 = vld [vmem:[%s9 + $0x3f0] sm:$0xff]
    %v2246 = vld [vmem:[%s9 + $0x3f8] sm:$0xff]
    %2247 = vmatprep.subr.mxu0 %v2120
    %2248 = vmatpush1.msra.mxu0 %v2119
    %2249 = vmatprep.subr.mxu0 %v2124
    %2250 = vmatpush1.msra.mxu0 %v2123
    %2251 = vmatprep.subr.mxu0 %v2128
    %2252 = vmatpush1.msra.mxu0 %v2127
    %2253 = vmatprep.subr.mxu0 %v2132
    %2254 = vmatpush1.msra.mxu0 %v2131
    %2255 = vmatprep.subr.mxu0 %v2136
    %2256 = vmatpush1.msra.mxu0 %v2135
    %2257 = vmatprep.subr.mxu0 %v2140
    %2258 = vmatpush1.msra.mxu0 %v2139
    %2259 = vmatprep.subr.mxu0 %v2144
    %2260 = vmatpush1.msra.mxu0 %v2143
    %2261 = vmatprep.subr.mxu0 %v2148
    %2262 = vmatpush1.msra.mxu0 %v2147
    %2263 = vmatprep.subr.mxu0 %v2152
    %2264 = vmatpush1.msra.mxu0 %v2151
    %2265 = vmatprep.subr.mxu0 %v2156
    %2266 = vmatpush1.msra.mxu0 %v2155
    %2267 = vmatprep.subr.mxu0 %v2160
    %2268 = vmatpush1.msra.mxu0 %v2159
    %2269 = vmatprep.subr.mxu0 %v2164
    %2270 = vmatpush1.msra.mxu0 %v2163
    %2271 = vmatprep.subr.mxu0 %v2168
    %2272 = vmatpush1.msra.mxu0 %v2167
    %2273 = vmatprep.subr.mxu0 %v2172
    %2274 = vmatpush1.msra.mxu0 %v2171
    %2275 = vmatprep.subr.mxu0 %v2176
    %2276 = vmatpush1.msra.mxu0 %v2175
    %2277 = vmatprep.subr.mxu0 %v2180
    %2278 = vmatpush1.msra.mxu0 %v2179
    %2279 = vmatprep.subr.mxu0 %v2184
    %2280 = vmatpush1.msra.mxu0 %v2183
    %2281 = vmatprep.subr.mxu0 %v2188
    %2282 = vmatpush1.msra.mxu0 %v2187
    %2283 = vmatprep.subr.mxu0 %v2192
    %2284 = vmatpush1.msra.mxu0 %v2191
    %2285 = vmatprep.subr.mxu0 %v2196
    %2286 = vmatpush1.msra.mxu0 %v2195
    %2287 = vmatprep.subr.mxu0 %v2200
    %2288 = vmatpush1.msra.mxu0 %v2199
    %2289 = vmatprep.subr.mxu0 %v2204
    %2290 = vmatpush1.msra.mxu0 %v2203
    %2291 = vmatprep.subr.mxu0 %v2208
    %2292 = vmatpush1.msra.mxu0 %v2207
    %2293 = vmatprep.subr.mxu0 %v2212
    %2294 = vmatpush1.msra.mxu0 %v2211
    %2295 = vmatprep.subr.mxu0 %v2216
    %2296 = vmatpush1.msra.mxu0 %v2215
    %2297 = vmatprep.subr.mxu0 %v2220
    %2298 = vmatpush1.msra.mxu0 %v2219
    %2299 = vmatprep.subr.mxu0 %v2224
    %2300 = vmatpush1.msra.mxu0 %v2223
    %2301 = vmatprep.subr.mxu0 %v2228
    %2302 = vmatpush1.msra.mxu0 %v2227
    %2303 = vmatprep.subr.mxu0 %v2232
    %2304 = vmatpush1.msra.mxu0 %v2231
    %2305 = vmatprep.subr.mxu0 %v2236
    %2306 = vmatpush1.msra.mxu0 %v2235
    %2307 = vmatprep.subr.mxu0 %v2240
    %2308 = vmatpush1.msra.mxu0 %v2239
    %2309 = vmatprep.subr.mxu0 %v2244
    %2310 = vmatpush1.msra.mxu0 %v2243
    %2311 = vmatprep.mubr.f32.mxu0 0.0
    %2312 = vmatmul.mubr.f32.gmra.mrb[0].mxu0 0.0
    %v2313 = vpop.f32.mrb[0].mxu0
    %v2314 = vadd.f32 0.0, %v2313
    %v2315 = vpop.f32.mrb[0].mxu0
    %v2316 = vadd.f32 0.0, %v2315
    %2317 = vdwg.mxu0
    %2318 = vmatprep.subr.mxu0 %v2122
    %2319 = vmatpush1.msra.mxu0 %v2121
    %2320 = vmatprep.subr.mxu0 %v2126
    %2321 = vmatpush1.msra.mxu0 %v2125
    %2322 = vmatprep.subr.mxu0 %v2130
    %2323 = vmatpush1.msra.mxu0 %v2129
    %2324 = vmatprep.subr.mxu0 %v2134
    %2325 = vmatpush1.msra.mxu0 %v2133
    %2326 = vmatprep.subr.mxu0 %v2138
    %2327 = vmatpush1.msra.mxu0 %v2137
    %2328 = vmatprep.subr.mxu0 %v2142
    %2329 = vmatpush1.msra.mxu0 %v2141
    %2330 = vmatprep.subr.mxu0 %v2146
    %2331 = vmatpush1.msra.mxu0 %v2145
    %2332 = vmatprep.subr.mxu0 %v2150
    %2333 = vmatpush1.msra.mxu0 %v2149
    %2334 = vmatprep.subr.mxu0 %v2154
    %2335 = vmatpush1.msra.mxu0 %v2153
    %2336 = vmatprep.subr.mxu0 %v2158
    %2337 = vmatpush1.msra.mxu0 %v2157
    %2338 = vmatprep.subr.mxu0 %v2162
    %2339 = vmatpush1.msra.mxu0 %v2161
    %2340 = vmatprep.subr.mxu0 %v2166
    %2341 = vmatpush1.msra.mxu0 %v2165
    %2342 = vmatprep.subr.mxu0 %v2170
    %2343 = vmatpush1.msra.mxu0 %v2169
    %2344 = vmatprep.subr.mxu0 %v2174
    %2345 = vmatpush1.msra.mxu0 %v2173
    %2346 = vmatprep.subr.mxu0 %v2178
    %2347 = vmatpush1.msra.mxu0 %v2177
    %2348 = vmatprep.subr.mxu0 %v2182
    %2349 = vmatpush1.msra.mxu0 %v2181
    %2350 = vmatprep.subr.mxu0 %v2186
    %2351 = vmatpush1.msra.mxu0 %v2185
    %2352 = vmatprep.subr.mxu0 %v2190
    %2353 = vmatpush1.msra.mxu0 %v2189
    %2354 = vmatprep.subr.mxu0 %v2194
    %2355 = vmatpush1.msra.mxu0 %v2193
    %2356 = vmatprep.subr.mxu0 %v2198
    %2357 = vmatpush1.msra.mxu0 %v2197
    %2358 = vmatprep.subr.mxu0 %v2202
    %2359 = vmatpush1.msra.mxu0 %v2201
    %2360 = vmatprep.subr.mxu0 %v2206
    %2361 = vmatpush1.msra.mxu0 %v2205
    %2362 = vmatprep.subr.mxu0 %v2210
    %2363 = vmatpush1.msra.mxu0 %v2209
    %2364 = vmatprep.subr.mxu0 %v2214
    %2365 = vmatpush1.msra.mxu0 %v2213
    %2366 = vmatprep.subr.mxu0 %v2218
    %2367 = vmatpush1.msra.mxu0 %v2217
    %2368 = vmatprep.subr.mxu0 %v2222
    %2369 = vmatpush1.msra.mxu0 %v2221
    %2370 = vmatprep.subr.mxu0 %v2226
    %2371 = vmatpush1.msra.mxu0 %v2225
    %2372 = vmatprep.subr.mxu0 %v2230
    %2373 = vmatpush1.msra.mxu0 %v2229
    %2374 = vmatprep.subr.mxu0 %v2234
    %2375 = vmatpush1.msra.mxu0 %v2233
    %2376 = vmatprep.subr.mxu0 %v2238
    %2377 = vmatpush1.msra.mxu0 %v2237
    %2378 = vmatprep.subr.mxu0 %v2242
    %2379 = vmatpush1.msra.mxu0 %v2241
    %2380 = vmatprep.subr.mxu0 %v2246
    %2381 = vmatpush1.msra.mxu0 %v2245
    %2382 = vmatprep.mubr.f32.mxu0 0.0
    %2383 = vmatmul.mubr.f32.gmra.mrb[0].mxu0 0.0
    %v2384 = vpop.f32.mrb[0].mxu0
    %v2385 = vadd.f32 0.0, %v2384
    %v2386 = vpop.f32.mrb[0].mxu0
    %v2387 = vadd.f32 0.0, %v2386
    %2388 = vdwg.mxu0
    %v2389 = vadd.f32 %v2044, %v2314
    %v2390 = vadd.f32 %v2046, %v2316
    %v2391 = vadd.f32 %v2115, %v2385
    %v2392 = vadd.f32 %v2117, %v2387
    %v2393 = vxor.u32 %v2389, 2147483648
    %v2394 = vxor.u32 %v2390, 2147483648
    %v2395 = vxor.u32 %v2391, 2147483648
    %v2396 = vmul.f32 %v2393, 1.442695
    %v2397 = vpow.pop %v2396
    %v2398 = vmul.f32 %v2394, 1.442695
    %v2399 = vpow.pop %v2398
    %v2400 = vmul.f32 %v2395, 1.442695
    %v2401 = vpow.pop %v2400
    %v2402 = vadd.f32 %v2397, 1.0
    %v2403 = vadd.f32 %v2399, 1.0
    %v2404 = vadd.f32 %v2401, 1.0
    %v2405 = vrcp.pop %v2402
    %v2406 = vmul.f32 1.0, %v2405
    %v2407 = vrcp.pop %v2403
    %v2408 = vmul.f32 1.0, %v2407
    %v2409 = vrcp.pop %v2404
    %v2410 = vmul.f32 1.0, %v2409
    %v2411 = vtanh.pop %v2392
    %v2412 = vmul.f32 %v2408, 0.0
    %v2413 = vmul.f32 %v2406, %v2411
    %v2414 = vadd.f32 %v2412, %v2413
    %v2415 = vtanh.pop %v2414
    %v2416 = vmul.f32 %v2410, %v2415
    %s2417 = scalar_lea.vmem %s11, 14
    %2418 = vst [vmem:[%s2417] sm:$0x3] %v2414
    %2419 = vmatprep.subr.mxu0 %v2120
    %2420 = vmatpush1.msra.mxu0 %v2119
    %2421 = vmatprep.subr.mxu0 %v2124
    %2422 = vmatpush1.msra.mxu0 %v2123
    %2423 = vmatprep.subr.mxu0 %v2128
    %2424 = vmatpush1.msra.mxu0 %v2127
    %2425 = vmatprep.subr.mxu0 %v2132
    %2426 = vmatpush1.msra.mxu0 %v2131
    %2427 = vmatprep.subr.mxu0 %v2136
    %2428 = vmatpush1.msra.mxu0 %v2135
    %2429 = vmatprep.subr.mxu0 %v2140
    %2430 = vmatpush1.msra.mxu0 %v2139
    %2431 = vmatprep.subr.mxu0 %v2144
    %2432 = vmatpush1.msra.mxu0 %v2143
    %2433 = vmatprep.subr.mxu0 %v2148
    %2434 = vmatpush1.msra.mxu0 %v2147
    %2435 = vmatprep.subr.mxu0 %v2152
    %2436 = vmatpush1.msra.mxu0 %v2151
    %2437 = vmatprep.subr.mxu0 %v2156
    %2438 = vmatpush1.msra.mxu0 %v2155
    %2439 = vmatprep.subr.mxu0 %v2160
    %2440 = vmatpush1.msra.mxu0 %v2159
    %2441 = vmatprep.subr.mxu0 %v2164
    %2442 = vmatpush1.msra.mxu0 %v2163
    %2443 = vmatprep.subr.mxu0 %v2168
    %2444 = vmatpush1.msra.mxu0 %v2167
    %2445 = vmatprep.subr.mxu0 %v2172
    %2446 = vmatpush1.msra.mxu0 %v2171
    %2447 = vmatprep.subr.mxu0 %v2176
    %2448 = vmatpush1.msra.mxu0 %v2175
    %2449 = vmatprep.subr.mxu0 %v2180
    %2450 = vmatpush1.msra.mxu0 %v2179
    %2451 = vmatprep.subr.mxu0 %v2184
    %2452 = vmatpush1.msra.mxu0 %v2183
    %2453 = vmatprep.subr.mxu0 %v2188
    %2454 = vmatpush1.msra.mxu0 %v2187
    %2455 = vmatprep.subr.mxu0 %v2192
    %2456 = vmatpush1.msra.mxu0 %v2191
    %2457 = vmatprep.subr.mxu0 %v2196
    %2458 = vmatpush1.msra.mxu0 %v2195
    %2459 = vmatprep.subr.mxu0 %v2200
    %2460 = vmatpush1.msra.mxu0 %v2199
    %2461 = vmatprep.subr.mxu0 %v2204
    %2462 = vmatpush1.msra.mxu0 %v2203
    %2463 = vmatprep.subr.mxu0 %v2208
    %2464 = vmatpush1.msra.mxu0 %v2207
    %2465 = vmatprep.subr.mxu0 %v2212
    %2466 = vmatpush1.msra.mxu0 %v2211
    %2467 = vmatprep.subr.mxu0 %v2216
    %2468 = vmatpush1.msra.mxu0 %v2215
    %2469 = vmatprep.subr.mxu0 %v2220
    %2470 = vmatpush1.msra.mxu0 %v2219
    %2471 = vmatprep.subr.mxu0 %v2224
    %2472 = vmatpush1.msra.mxu0 %v2223
    %2473 = vmatprep.subr.mxu0 %v2228
    %2474 = vmatpush1.msra.mxu0 %v2227
    %2475 = vmatprep.subr.mxu0 %v2232
    %2476 = vmatpush1.msra.mxu0 %v2231
    %2477 = vmatprep.subr.mxu0 %v2236
    %2478 = vmatpush1.msra.mxu0 %v2235
    %2479 = vmatprep.subr.mxu0 %v2240
    %2480 = vmatpush1.msra.mxu0 %v2239
    %2481 = vmatprep.subr.mxu0 %v2244
    %2482 = vmatpush1.msra.mxu0 %v2243
    %2483 = vmatprep.mubr.f32.mxu0 %v2416
    %2484 = vmatmul.mubr.f32.gmra.mrb[0].mxu0 %v2414
    %v2485 = vpop.f32.mrb[0].mxu0
    %v2486 = vadd.f32 0.0, %v2485
    %v2487 = vpop.f32.mrb[0].mxu0
    %v2488 = vadd.f32 0.0, %v2487
    %2489 = vdwg.mxu0
    %2490 = vmatprep.subr.mxu0 %v2122
    %2491 = vmatpush1.msra.mxu0 %v2121
    %2492 = vmatprep.subr.mxu0 %v2126
    %2493 = vmatpush1.msra.mxu0 %v2125
    %2494 = vmatprep.subr.mxu0 %v2130
    %2495 = vmatpush1.msra.mxu0 %v2129
    %2496 = vmatprep.subr.mxu0 %v2134
    %2497 = vmatpush1.msra.mxu0 %v2133
    %2498 = vmatprep.subr.mxu0 %v2138
    %2499 = vmatpush1.msra.mxu0 %v2137
    %2500 = vmatprep.subr.mxu0 %v2142
    %2501 = vmatpush1.msra.mxu0 %v2141
    %2502 = vmatprep.subr.mxu0 %v2146
    %2503 = vmatpush1.msra.mxu0 %v2145
    %2504 = vmatprep.subr.mxu0 %v2150
    %2505 = vmatpush1.msra.mxu0 %v2149
    %2506 = vmatprep.subr.mxu0 %v2154
    %2507 = vmatpush1.msra.mxu0 %v2153
    %2508 = vmatprep.subr.mxu0 %v2158
    %2509 = vmatpush1.msra.mxu0 %v2157
    %2510 = vmatprep.subr.mxu0 %v2162
    %2511 = vmatpush1.msra.mxu0 %v2161
    %2512 = vmatprep.subr.mxu0 %v2166
    %2513 = vmatpush1.msra.mxu0 %v2165
    %2514 = vmatprep.subr.mxu0 %v2170
    %2515 = vmatpush1.msra.mxu0 %v2169
    %2516 = vmatprep.subr.mxu0 %v2174
    %2517 = vmatpush1.msra.mxu0 %v2173
    %2518 = vmatprep.subr.mxu0 %v2178
    %2519 = vmatpush1.msra.mxu0 %v2177
    %2520 = vmatprep.subr.mxu0 %v2182
    %2521 = vmatpush1.msra.mxu0 %v2181
    %2522 = vmatprep.subr.mxu0 %v2186
    %2523 = vmatpush1.msra.mxu0 %v2185
    %2524 = vmatprep.subr.mxu0 %v2190
    %2525 = vmatpush1.msra.mxu0 %v2189
    %2526 = vmatprep.subr.mxu0 %v2194
    %2527 = vmatpush1.msra.mxu0 %v2193
    %2528 = vmatprep.subr.mxu0 %v2198
    %2529 = vmatpush1.msra.mxu0 %v2197
    %2530 = vmatprep.subr.mxu0 %v2202
    %2531 = vmatpush1.msra.mxu0 %v2201
    %2532 = vmatprep.subr.mxu0 %v2206
    %2533 = vmatpush1.msra.mxu0 %v2205
    %2534 = vmatprep.subr.mxu0 %v2210
    %2535 = vmatpush1.msra.mxu0 %v2209
    %2536 = vmatprep.subr.mxu0 %v2214
    %2537 = vmatpush1.msra.mxu0 %v2213
    %2538 = vmatprep.subr.mxu0 %v2218
    %2539 = vmatpush1.msra.mxu0 %v2217
    %2540 = vmatprep.subr.mxu0 %v2222
    %2541 = vmatpush1.msra.mxu0 %v2221
    %2542 = vmatprep.subr.mxu0 %v2226
    %2543 = vmatpush1.msra.mxu0 %v2225
    %2544 = vmatprep.subr.mxu0 %v2230
    %2545 = vmatpush1.msra.mxu0 %v2229
    %2546 = vmatprep.subr.mxu0 %v2234
    %2547 = vmatpush1.msra.mxu0 %v2233
    %2548 = vmatprep.subr.mxu0 %v2238
    %2549 = vmatpush1.msra.mxu0 %v2237
    %2550 = vmatprep.subr.mxu0 %v2242
    %2551 = vmatpush1.msra.mxu0 %v2241
    %2552 = vmatprep.subr.mxu0 %v2246
    %2553 = vmatpush1.msra.mxu0 %v2245
    %2554 = vmatprep.mubr.f32.mxu0 %v2416
    %2555 = vmatmul.mubr.f32.gmra.mrb[0].mxu0 %v2414
    %v2556 = vpop.f32.mrb[0].mxu0
    %v2557 = vadd.f32 0.0, %v2556
    %v2558 = vpop.f32.mrb[0].mxu0
    %v2559 = vadd.f32 0.0, %v2558
    %2560 = vdwg.mxu0
    %v2561 = vadd.f32 %v2044, %v2486
    %v2562 = vadd.f32 %v2046, %v2488
    %v2563 = vadd.f32 %v2115, %v2557
    %v2564 = vadd.f32 %v2117, %v2559
    %v2565 = vxor.u32 %v2561, 2147483648
    %v2566 = vxor.u32 %v2562, 2147483648
    %v2567 = vxor.u32 %v2563, 2147483648
    %v2568 = vmul.f32 %v2565, 1.442695
    %v2569 = vpow.pop %v2568
    %v2570 = vmul.f32 %v2566, 1.442695
    %v2571 = vpow.pop %v2570
    %v2572 = vmul.f32 %v2567, 1.442695
    %v2573 = vpow.pop %v2572
    %v2574 = vadd.f32 %v2569, 1.0
    %v2575 = vadd.f32 %v2571, 1.0
    %v2576 = vadd.f32 %v2573, 1.0
    %v2577 = vrcp.pop %v2574
    %v2578 = vmul.f32 1.0, %v2577
    %v2579 = vrcp.pop %v2575
    %v2580 = vmul.f32 1.0, %v2579
    %v2581 = vrcp.pop %v2576
    %v2582 = vmul.f32 1.0, %v2581
    %v2583 = vtanh.pop %v2564
    %v2584 = vmul.f32 %v2580, %v2414
    %v2585 = vmul.f32 %v2578, %v2583
    %v2586 = vadd.f32 %v2584, %v2585
    %v2587 = vtanh.pop %v2586
    %v2588 = vmul.f32 %v2582, %v2587
    %s2589 = scalar_lea.vmem %s11, 12
    %2590 = vst [vmem:[%s2589] sm:$0x3] %v2586
    %2591 = vmatprep.subr.mxu0 %v2120
    %2592 = vmatpush1.msra.mxu0 %v2119
    %2593 = vmatprep.subr.mxu0 %v2124
    %2594 = vmatpush1.msra.mxu0 %v2123
    %2595 = vmatprep.subr.mxu0 %v2128
    %2596 = vmatpush1.msra.mxu0 %v2127
    %2597 = vmatprep.subr.mxu0 %v2132
    %2598 = vmatpush1.msra.mxu0 %v2131
    %2599 = vmatprep.subr.mxu0 %v2136
    %2600 = vmatpush1.msra.mxu0 %v2135
    %2601 = vmatprep.subr.mxu0 %v2140
    %2602 = vmatpush1.msra.mxu0 %v2139
    %2603 = vmatprep.subr.mxu0 %v2144
    %2604 = vmatpush1.msra.mxu0 %v2143
    %2605 = vmatprep.subr.mxu0 %v2148
    %2606 = vmatpush1.msra.mxu0 %v2147
    %2607 = vmatprep.subr.mxu0 %v2152
    %2608 = vmatpush1.msra.mxu0 %v2151
    %2609 = vmatprep.subr.mxu0 %v2156
    %2610 = vmatpush1.msra.mxu0 %v2155
    %2611 = vmatprep.subr.mxu0 %v2160
    %2612 = vmatpush1.msra.mxu0 %v2159
    %2613 = vmatprep.subr.mxu0 %v2164
    %2614 = vmatpush1.msra.mxu0 %v2163
    %2615 = vmatprep.subr.mxu0 %v2168
    %2616 = vmatpush1.msra.mxu0 %v2167
    %2617 = vmatprep.subr.mxu0 %v2172
    %2618 = vmatpush1.msra.mxu0 %v2171
    %2619 = vmatprep.subr.mxu0 %v2176
    %2620 = vmatpush1.msra.mxu0 %v2175
    %2621 = vmatprep.subr.mxu0 %v2180
    %2622 = vmatpush1.msra.mxu0 %v2179
    %2623 = vmatprep.subr.mxu0 %v2184
    %2624 = vmatpush1.msra.mxu0 %v2183
    %2625 = vmatprep.subr.mxu0 %v2188
    %2626 = vmatpush1.msra.mxu0 %v2187
    %2627 = vmatprep.subr.mxu0 %v2192
    %2628 = vmatpush1.msra.mxu0 %v2191
    %2629 = vmatprep.subr.mxu0 %v2196
    %2630 = vmatpush1.msra.mxu0 %v2195
    %2631 = vmatprep.subr.mxu0 %v2200
    %2632 = vmatpush1.msra.mxu0 %v2199
    %2633 = vmatprep.subr.mxu0 %v2204
    %2634 = vmatpush1.msra.mxu0 %v2203
    %2635 = vmatprep.subr.mxu0 %v2208
    %2636 = vmatpush1.msra.mxu0 %v2207
    %2637 = vmatprep.subr.mxu0 %v2212
    %2638 = vmatpush1.msra.mxu0 %v2211
    %2639 = vmatprep.subr.mxu0 %v2216
    %2640 = vmatpush1.msra.mxu0 %v2215
    %2641 = vmatprep.subr.mxu0 %v2220
    %2642 = vmatpush1.msra.mxu0 %v2219
    %2643 = vmatprep.subr.mxu0 %v2224
    %2644 = vmatpush1.msra.mxu0 %v2223
    %2645 = vmatprep.subr.mxu0 %v2228
    %2646 = vmatpush1.msra.mxu0 %v2227
    %2647 = vmatprep.subr.mxu0 %v2232
    %2648 = vmatpush1.msra.mxu0 %v2231
    %2649 = vmatprep.subr.mxu0 %v2236
    %2650 = vmatpush1.msra.mxu0 %v2235
    %2651 = vmatprep.subr.mxu0 %v2240
    %2652 = vmatpush1.msra.mxu0 %v2239
    %2653 = vmatprep.subr.mxu0 %v2244
    %2654 = vmatpush1.msra.mxu0 %v2243
    %2655 = vmatprep.mubr.f32.mxu0 %v2588
    %2656 = vmatmul.mubr.f32.gmra.mrb[0].mxu0 %v2586
    %v2657 = vpop.f32.mrb[0].mxu0
    %v2658 = vadd.f32 0.0, %v2657
    %v2659 = vpop.f32.mrb[0].mxu0
    %v2660 = vadd.f32 0.0, %v2659
    %2661 = vdwg.mxu0
    %2662 = vmatprep.subr.mxu0 %v2122
    %2663 = vmatpush1.msra.mxu0 %v2121
    %2664 = vmatprep.subr.mxu0 %v2126
    %2665 = vmatpush1.msra.mxu0 %v2125
    %2666 = vmatprep.subr.mxu0 %v2130
    %2667 = vmatpush1.msra.mxu0 %v2129
    %2668 = vmatprep.subr.mxu0 %v2134
    %2669 = vmatpush1.msra.mxu0 %v2133
    %2670 = vmatprep.subr.mxu0 %v2138
    %2671 = vmatpush1.msra.mxu0 %v2137
    %2672 = vmatprep.subr.mxu0 %v2142
    %2673 = vmatpush1.msra.mxu0 %v2141
    %2674 = vmatprep.subr.mxu0 %v2146
    %2675 = vmatpush1.msra.mxu0 %v2145
    %2676 = vmatprep.subr.mxu0 %v2150
    %2677 = vmatpush1.msra.mxu0 %v2149
    %2678 = vmatprep.subr.mxu0 %v2154
    %2679 = vmatpush1.msra.mxu0 %v2153
    %2680 = vmatprep.subr.mxu0 %v2158
    %2681 = vmatpush1.msra.mxu0 %v2157
    %2682 = vmatprep.subr.mxu0 %v2162
    %2683 = vmatpush1.msra.mxu0 %v2161
    %2684 = vmatprep.subr.mxu0 %v2166
    %2685 = vmatpush1.msra.mxu0 %v2165
    %2686 = vmatprep.subr.mxu0 %v2170
    %2687 = vmatpush1.msra.mxu0 %v2169
    %2688 = vmatprep.subr.mxu0 %v2174
    %2689 = vmatpush1.msra.mxu0 %v2173
    %2690 = vmatprep.subr.mxu0 %v2178
    %2691 = vmatpush1.msra.mxu0 %v2177
    %2692 = vmatprep.subr.mxu0 %v2182
    %2693 = vmatpush1.msra.mxu0 %v2181
    %2694 = vmatprep.subr.mxu0 %v2186
    %2695 = vmatpush1.msra.mxu0 %v2185
    %2696 = vmatprep.subr.mxu0 %v2190
    %2697 = vmatpush1.msra.mxu0 %v2189
    %2698 = vmatprep.subr.mxu0 %v2194
    %2699 = vmatpush1.msra.mxu0 %v2193
    %2700 = vmatprep.subr.mxu0 %v2198
    %2701 = vmatpush1.msra.mxu0 %v2197
    %2702 = vmatprep.subr.mxu0 %v2202
    %2703 = vmatpush1.msra.mxu0 %v2201
    %2704 = vmatprep.subr.mxu0 %v2206
    %2705 = vmatpush1.msra.mxu0 %v2205
    %2706 = vmatprep.subr.mxu0 %v2210
    %2707 = vmatpush1.msra.mxu0 %v2209
    %2708 = vmatprep.subr.mxu0 %v2214
    %2709 = vmatpush1.msra.mxu0 %v2213
    %2710 = vmatprep.subr.mxu0 %v2218
    %2711 = vmatpush1.msra.mxu0 %v2217
    %2712 = vmatprep.subr.mxu0 %v2222
    %2713 = vmatpush1.msra.mxu0 %v2221
    %2714 = vmatprep.subr.mxu0 %v2226
    %2715 = vmatpush1.msra.mxu0 %v2225
    %2716 = vmatprep.subr.mxu0 %v2230
    %2717 = vmatpush1.msra.mxu0 %v2229
    %2718 = vmatprep.subr.mxu0 %v2234
    %2719 = vmatpush1.msra.mxu0 %v2233
    %2720 = vmatprep.subr.mxu0 %v2238
    %2721 = vmatpush1.msra.mxu0 %v2237
    %2722 = vmatprep.subr.mxu0 %v2242
    %2723 = vmatpush1.msra.mxu0 %v2241
    %2724 = vmatprep.subr.mxu0 %v2246
    %2725 = vmatpush1.msra.mxu0 %v2245
    %2726 = vmatprep.mubr.f32.mxu0 %v2588
    %2727 = vmatmul.mubr.f32.gmra.mrb[0].mxu0 %v2586
    %v2728 = vpop.f32.mrb[0].mxu0
    %v2729 = vadd.f32 0.0, %v2728
    %v2730 = vpop.f32.mrb[0].mxu0
    %v2731 = vadd.f32 0.0, %v2730
    %2732 = vdwg.mxu0
    %v2733 = vadd.f32 %v2044, %v2658
    %v2734 = vadd.f32 %v2046, %v2660
    %v2735 = vadd.f32 %v2115, %v2729
    %v2736 = vadd.f32 %v2117, %v2731
    %v2737 = vxor.u32 %v2733, 2147483648
    %v2738 = vxor.u32 %v2734, 2147483648
    %v2739 = vxor.u32 %v2735, 2147483648
    %v2740 = vmul.f32 %v2737, 1.442695
    %v2741 = vpow.pop %v2740
    %v2742 = vmul.f32 %v2738, 1.442695
    %v2743 = vpow.pop %v2742
    %v2744 = vmul.f32 %v2739, 1.442695
    %v2745 = vpow.pop %v2744
    %v2746 = vadd.f32 %v2741, 1.0
    %v2747 = vadd.f32 %v2743, 1.0
    %v2748 = vadd.f32 %v2745, 1.0
    %v2749 = vrcp.pop %v2746
    %v2750 = vmul.f32 1.0, %v2749
    %v2751 = vrcp.pop %v2747
    %v2752 = vmul.f32 1.0, %v2751
    %v2753 = vrcp.pop %v2748
    %v2754 = vmul.f32 1.0, %v2753
    %v2755 = vtanh.pop %v2736
    %v2756 = vmul.f32 %v2752, %v2586
    %v2757 = vmul.f32 %v2750, %v2755
    %v2758 = vadd.f32 %v2756, %v2757
    %v2759 = vtanh.pop %v2758
    %v2760 = vmul.f32 %v2754, %v2759
    %s2761 = scalar_lea.vmem %s11, 10
    %2762 = vst [vmem:[%s2761] sm:$0x3] %v2758
    %2763 = vmatprep.subr.mxu0 %v2120
    %2764 = vmatpush1.msra.mxu0 %v2119
    %2765 = vmatprep.subr.mxu0 %v2124
    %2766 = vmatpush1.msra.mxu0 %v2123
    %2767 = vmatprep.subr.mxu0 %v2128
    %2768 = vmatpush1.msra.mxu0 %v2127
    %2769 = vmatprep.subr.mxu0 %v2132
    %2770 = vmatpush1.msra.mxu0 %v2131
    %2771 = vmatprep.subr.mxu0 %v2136
    %2772 = vmatpush1.msra.mxu0 %v2135
    %2773 = vmatprep.subr.mxu0 %v2140
    %2774 = vmatpush1.msra.mxu0 %v2139
    %2775 = vmatprep.subr.mxu0 %v2144
    %2776 = vmatpush1.msra.mxu0 %v2143
    %2777 = vmatprep.subr.mxu0 %v2148
    %2778 = vmatpush1.msra.mxu0 %v2147
    %2779 = vmatprep.subr.mxu0 %v2152
    %2780 = vmatpush1.msra.mxu0 %v2151
    %2781 = vmatprep.subr.mxu0 %v2156
    %2782 = vmatpush1.msra.mxu0 %v2155
    %2783 = vmatprep.subr.mxu0 %v2160
    %2784 = vmatpush1.msra.mxu0 %v2159
    %2785 = vmatprep.subr.mxu0 %v2164
    %2786 = vmatpush1.msra.mxu0 %v2163
    %2787 = vmatprep.subr.mxu0 %v2168
    %2788 = vmatpush1.msra.mxu0 %v2167
    %2789 = vmatprep.subr.mxu0 %v2172
    %2790 = vmatpush1.msra.mxu0 %v2171
    %2791 = vmatprep.subr.mxu0 %v2176
    %2792 = vmatpush1.msra.mxu0 %v2175
    %2793 = vmatprep.subr.mxu0 %v2180
    %2794 = vmatpush1.msra.mxu0 %v2179
    %2795 = vmatprep.subr.mxu0 %v2184
    %2796 = vmatpush1.msra.mxu0 %v2183
    %2797 = vmatprep.subr.mxu0 %v2188
    %2798 = vmatpush1.msra.mxu0 %v2187
    %2799 = vmatprep.subr.mxu0 %v2192
    %2800 = vmatpush1.msra.mxu0 %v2191
    %2801 = vmatprep.subr.mxu0 %v2196
    %2802 = vmatpush1.msra.mxu0 %v2195
    %2803 = vmatprep.subr.mxu0 %v2200
    %2804 = vmatpush1.msra.mxu0 %v2199
    %2805 = vmatprep.subr.mxu0 %v2204
    %2806 = vmatpush1.msra.mxu0 %v2203
    %2807 = vmatprep.subr.mxu0 %v2208
    %2808 = vmatpush1.msra.mxu0 %v2207
    %2809 = vmatprep.subr.mxu0 %v2212
    %2810 = vmatpush1.msra.mxu0 %v2211
    %2811 = vmatprep.subr.mxu0 %v2216
    %2812 = vmatpush1.msra.mxu0 %v2215
    %2813 = vmatprep.subr.mxu0 %v2220
    %2814 = vmatpush1.msra.mxu0 %v2219
    %2815 = vmatprep.subr.mxu0 %v2224
    %2816 = vmatpush1.msra.mxu0 %v2223
    %2817 = vmatprep.subr.mxu0 %v2228
    %2818 = vmatpush1.msra.mxu0 %v2227
    %2819 = vmatprep.subr.mxu0 %v2232
    %2820 = vmatpush1.msra.mxu0 %v2231
    %2821 = vmatprep.subr.mxu0 %v2236
    %2822 = vmatpush1.msra.mxu0 %v2235
    %2823 = vmatprep.subr.mxu0 %v2240
    %2824 = vmatpush1.msra.mxu0 %v2239
    %2825 = vmatprep.subr.mxu0 %v2244
    %2826 = vmatpush1.msra.mxu0 %v2243
    %2827 = vmatprep.mubr.f32.mxu0 %v2760
    %2828 = vmatmul.mubr.f32.gmra.mrb[0].mxu0 %v2758
    %v2829 = vpop.f32.mrb[0].mxu0
    %v2830 = vadd.f32 0.0, %v2829
    %v2831 = vpop.f32.mrb[0].mxu0
    %v2832 = vadd.f32 0.0, %v2831
    %2833 = vdwg.mxu0
    %2834 = vmatprep.subr.mxu0 %v2122
    %2835 = vmatpush1.msra.mxu0 %v2121
    %2836 = vmatprep.subr.mxu0 %v2126
    %2837 = vmatpush1.msra.mxu0 %v2125
    %2838 = vmatprep.subr.mxu0 %v2130
    %2839 = vmatpush1.msra.mxu0 %v2129
    %2840 = vmatprep.subr.mxu0 %v2134
    %2841 = vmatpush1.msra.mxu0 %v2133
    %2842 = vmatprep.subr.mxu0 %v2138
    %2843 = vmatpush1.msra.mxu0 %v2137
    %2844 = vmatprep.subr.mxu0 %v2142
    %2845 = vmatpush1.msra.mxu0 %v2141
    %2846 = vmatprep.subr.mxu0 %v2146
    %2847 = vmatpush1.msra.mxu0 %v2145
    %2848 = vmatprep.subr.mxu0 %v2150
    %2849 = vmatpush1.msra.mxu0 %v2149
    %2850 = vmatprep.subr.mxu0 %v2154
    %2851 = vmatpush1.msra.mxu0 %v2153
    %2852 = vmatprep.subr.mxu0 %v2158
    %2853 = vmatpush1.msra.mxu0 %v2157
    %2854 = vmatprep.subr.mxu0 %v2162
    %2855 = vmatpush1.msra.mxu0 %v2161
    %2856 = vmatprep.subr.mxu0 %v2166
    %2857 = vmatpush1.msra.mxu0 %v2165
    %2858 = vmatprep.subr.mxu0 %v2170
    %2859 = vmatpush1.msra.mxu0 %v2169
    %2860 = vmatprep.subr.mxu0 %v2174
    %2861 = vmatpush1.msra.mxu0 %v2173
    %2862 = vmatprep.subr.mxu0 %v2178
    %2863 = vmatpush1.msra.mxu0 %v2177
    %2864 = vmatprep.subr.mxu0 %v2182
    %2865 = vmatpush1.msra.mxu0 %v2181
    %2866 = vmatprep.subr.mxu0 %v2186
    %2867 = vmatpush1.msra.mxu0 %v2185
    %2868 = vmatprep.subr.mxu0 %v2190
    %2869 = vmatpush1.msra.mxu0 %v2189
    %2870 = vmatprep.subr.mxu0 %v2194
    %2871 = vmatpush1.msra.mxu0 %v2193
    %2872 = vmatprep.subr.mxu0 %v2198
    %2873 = vmatpush1.msra.mxu0 %v2197
    %2874 = vmatprep.subr.mxu0 %v2202
    %2875 = vmatpush1.msra.mxu0 %v2201
    %2876 = vmatprep.subr.mxu0 %v2206
    %2877 = vmatpush1.msra.mxu0 %v2205
    %2878 = vmatprep.subr.mxu0 %v2210
    %2879 = vmatpush1.msra.mxu0 %v2209
    %2880 = vmatprep.subr.mxu0 %v2214
    %2881 = vmatpush1.msra.mxu0 %v2213
    %2882 = vmatprep.subr.mxu0 %v2218
    %2883 = vmatpush1.msra.mxu0 %v2217
    %2884 = vmatprep.subr.mxu0 %v2222
    %2885 = vmatpush1.msra.mxu0 %v2221
    %2886 = vmatprep.subr.mxu0 %v2226
    %2887 = vmatpush1.msra.mxu0 %v2225
    %2888 = vmatprep.subr.mxu0 %v2230
    %2889 = vmatpush1.msra.mxu0 %v2229
    %2890 = vmatprep.subr.mxu0 %v2234
    %2891 = vmatpush1.msra.mxu0 %v2233
    %2892 = vmatprep.subr.mxu0 %v2238
    %2893 = vmatpush1.msra.mxu0 %v2237
    %2894 = vmatprep.subr.mxu0 %v2242
    %2895 = vmatpush1.msra.mxu0 %v2241
    %2896 = vmatprep.subr.mxu0 %v2246
    %2897 = vmatpush1.msra.mxu0 %v2245
    %2898 = vmatprep.mubr.f32.mxu0 %v2760
    %2899 = vmatmul.mubr.f32.gmra.mrb[0].mxu0 %v2758
    %v2900 = vpop.f32.mrb[0].mxu0
    %v2901 = vadd.f32 0.0, %v2900
    %v2902 = vpop.f32.mrb[0].mxu0
    %v2903 = vadd.f32 0.0, %v2902
    %2904 = vdwg.mxu0
    %v2905 = vadd.f32 %v2044, %v2830
    %v2906 = vadd.f32 %v2046, %v2832
    %v2907 = vadd.f32 %v2115, %v2901
    %v2908 = vadd.f32 %v2117, %v2903
    %v2909 = vxor.u32 %v2905, 2147483648
    %v2910 = vxor.u32 %v2906, 2147483648
    %v2911 = vxor.u32 %v2907, 2147483648
    %v2912 = vmul.f32 %v2909, 1.442695
    %v2913 = vpow.pop %v2912
    %v2914 = vmul.f32 %v2910, 1.442695
    %v2915 = vpow.pop %v2914
    %v2916 = vmul.f32 %v2911, 1.442695
    %v2917 = vpow.pop %v2916
    %v2918 = vadd.f32 %v2913, 1.0
    %v2919 = vadd.f32 %v2915, 1.0
    %v2920 = vadd.f32 %v2917, 1.0
    %v2921 = vrcp.pop %v2918
    %v2922 = vmul.f32 1.0, %v2921
    %v2923 = vrcp.pop %v2919
    %v2924 = vmul.f32 1.0, %v2923
    %v2925 = vrcp.pop %v2920
    %v2926 = vmul.f32 1.0, %v2925
    %v2927 = vtanh.pop %v2908
    %v2928 = vmul.f32 %v2924, %v2758
    %v2929 = vmul.f32 %v2922, %v2927
    %v2930 = vadd.f32 %v2928, %v2929
    %v2931 = vtanh.pop %v2930
    %v2932 = vmul.f32 %v2926, %v2931
    %s2933 = scalar_lea.vmem %s11, 8
    %2934 = vst [vmem:[%s2933] sm:$0x3] %v2930
    %2935 = vmatprep.subr.mxu0 %v2120
    %2936 = vmatpush1.msra.mxu0 %v2119
    %2937 = vmatprep.subr.mxu0 %v2124
    %2938 = vmatpush1.msra.mxu0 %v2123
    %2939 = vmatprep.subr.mxu0 %v2128
    %2940 = vmatpush1.msra.mxu0 %v2127
    %2941 = vmatprep.subr.mxu0 %v2132
    %2942 = vmatpush1.msra.mxu0 %v2131
    %2943 = vmatprep.subr.mxu0 %v2136
    %2944 = vmatpush1.msra.mxu0 %v2135
    %2945 = vmatprep.subr.mxu0 %v2140
    %2946 = vmatpush1.msra.mxu0 %v2139
    %2947 = vmatprep.subr.mxu0 %v2144
    %2948 = vmatpush1.msra.mxu0 %v2143
    %2949 = vmatprep.subr.mxu0 %v2148
    %2950 = vmatpush1.msra.mxu0 %v2147
    %2951 = vmatprep.subr.mxu0 %v2152
    %2952 = vmatpush1.msra.mxu0 %v2151
    %2953 = vmatprep.subr.mxu0 %v2156
    %2954 = vmatpush1.msra.mxu0 %v2155
    %2955 = vmatprep.subr.mxu0 %v2160
    %2956 = vmatpush1.msra.mxu0 %v2159
    %2957 = vmatprep.subr.mxu0 %v2164
    %2958 = vmatpush1.msra.mxu0 %v2163
    %2959 = vmatprep.subr.mxu0 %v2168
    %2960 = vmatpush1.msra.mxu0 %v2167
    %2961 = vmatprep.subr.mxu0 %v2172
    %2962 = vmatpush1.msra.mxu0 %v2171
    %2963 = vmatprep.subr.mxu0 %v2176
    %2964 = vmatpush1.msra.mxu0 %v2175
    %2965 = vmatprep.subr.mxu0 %v2180
    %2966 = vmatpush1.msra.mxu0 %v2179
    %2967 = vmatprep.subr.mxu0 %v2184
    %2968 = vmatpush1.msra.mxu0 %v2183
    %2969 = vmatprep.subr.mxu0 %v2188
    %2970 = vmatpush1.msra.mxu0 %v2187
    %2971 = vmatprep.subr.mxu0 %v2192
    %2972 = vmatpush1.msra.mxu0 %v2191
    %2973 = vmatprep.subr.mxu0 %v2196
    %2974 = vmatpush1.msra.mxu0 %v2195
    %2975 = vmatprep.subr.mxu0 %v2200
    %2976 = vmatpush1.msra.mxu0 %v2199
    %2977 = vmatprep.subr.mxu0 %v2204
    %2978 = vmatpush1.msra.mxu0 %v2203
    %2979 = vmatprep.subr.mxu0 %v2208
    %2980 = vmatpush1.msra.mxu0 %v2207
    %2981 = vmatprep.subr.mxu0 %v2212
    %2982 = vmatpush1.msra.mxu0 %v2211
    %2983 = vmatprep.subr.mxu0 %v2216
    %2984 = vmatpush1.msra.mxu0 %v2215
    %2985 = vmatprep.subr.mxu0 %v2220
    %2986 = vmatpush1.msra.mxu0 %v2219
    %2987 = vmatprep.subr.mxu0 %v2224
    %2988 = vmatpush1.msra.mxu0 %v2223
    %2989 = vmatprep.subr.mxu0 %v2228
    %2990 = vmatpush1.msra.mxu0 %v2227
    %2991 = vmatprep.subr.mxu0 %v2232
    %2992 = vmatpush1.msra.mxu0 %v2231
    %2993 = vmatprep.subr.mxu0 %v2236
    %2994 = vmatpush1.msra.mxu0 %v2235
    %2995 = vmatprep.subr.mxu0 %v2240
    %2996 = vmatpush1.msra.mxu0 %v2239
    %2997 = vmatprep.subr.mxu0 %v2244
    %2998 = vmatpush1.msra.mxu0 %v2243
    %2999 = vmatprep.mubr.f32.mxu0 %v2932
    %3000 = vmatmul.mubr.f32.gmra.mrb[0].mxu0 %v2930
    %v3001 = vpop.f32.mrb[0].mxu0
    %v3002 = vadd.f32 0.0, %v3001
    %v3003 = vpop.f32.mrb[0].mxu0
    %v3004 = vadd.f32 0.0, %v3003
    %3005 = vdwg.mxu0
    %3006 = vmatprep.subr.mxu0 %v2122
    %3007 = vmatpush1.msra.mxu0 %v2121
    %3008 = vmatprep.subr.mxu0 %v2126
    %3009 = vmatpush1.msra.mxu0 %v2125
    %3010 = vmatprep.subr.mxu0 %v2130
    %3011 = vmatpush1.msra.mxu0 %v2129
    %3012 = vmatprep.subr.mxu0 %v2134
    %3013 = vmatpush1.msra.mxu0 %v2133
    %3014 = vmatprep.subr.mxu0 %v2138
    %3015 = vmatpush1.msra.mxu0 %v2137
    %3016 = vmatprep.subr.mxu0 %v2142
    %3017 = vmatpush1.msra.mxu0 %v2141
    %3018 = vmatprep.subr.mxu0 %v2146
    %3019 = vmatpush1.msra.mxu0 %v2145
    %3020 = vmatprep.subr.mxu0 %v2150
    %3021 = vmatpush1.msra.mxu0 %v2149
    %3022 = vmatprep.subr.mxu0 %v2154
    %3023 = vmatpush1.msra.mxu0 %v2153
    %3024 = vmatprep.subr.mxu0 %v2158
    %3025 = vmatpush1.msra.mxu0 %v2157
    %3026 = vmatprep.subr.mxu0 %v2162
    %3027 = vmatpush1.msra.mxu0 %v2161
    %3028 = vmatprep.subr.mxu0 %v2166
    %3029 = vmatpush1.msra.mxu0 %v2165
    %3030 = vmatprep.subr.mxu0 %v2170
    %3031 = vmatpush1.msra.mxu0 %v2169
    %3032 = vmatprep.subr.mxu0 %v2174
    %3033 = vmatpush1.msra.mxu0 %v2173
    %3034 = vmatprep.subr.mxu0 %v2178
    %3035 = vmatpush1.msra.mxu0 %v2177
    %3036 = vmatprep.subr.mxu0 %v2182
    %3037 = vmatpush1.msra.mxu0 %v2181
    %3038 = vmatprep.subr.mxu0 %v2186
    %3039 = vmatpush1.msra.mxu0 %v2185
    %3040 = vmatprep.subr.mxu0 %v2190
    %3041 = vmatpush1.msra.mxu0 %v2189
    %3042 = vmatprep.subr.mxu0 %v2194
    %3043 = vmatpush1.msra.mxu0 %v2193
    %3044 = vmatprep.subr.mxu0 %v2198
    %3045 = vmatpush1.msra.mxu0 %v2197
    %3046 = vmatprep.subr.mxu0 %v2202
    %3047 = vmatpush1.msra.mxu0 %v2201
    %3048 = vmatprep.subr.mxu0 %v2206
    %3049 = vmatpush1.msra.mxu0 %v2205
    %3050 = vmatprep.subr.mxu0 %v2210
    %3051 = vmatpush1.msra.mxu0 %v2209
    %3052 = vmatprep.subr.mxu0 %v2214
    %3053 = vmatpush1.msra.mxu0 %v2213
    %3054 = vmatprep.subr.mxu0 %v2218
    %3055 = vmatpush1.msra.mxu0 %v2217
    %3056 = vmatprep.subr.mxu0 %v2222
    %3057 = vmatpush1.msra.mxu0 %v2221
    %3058 = vmatprep.subr.mxu0 %v2226
    %3059 = vmatpush1.msra.mxu0 %v2225
    %3060 = vmatprep.subr.mxu0 %v2230
    %3061 = vmatpush1.msra.mxu0 %v2229
    %3062 = vmatprep.subr.mxu0 %v2234
    %3063 = vmatpush1.msra.mxu0 %v2233
    %3064 = vmatprep.subr.mxu0 %v2238
    %3065 = vmatpush1.msra.mxu0 %v2237
    %3066 = vmatprep.subr.mxu0 %v2242
    %3067 = vmatpush1.msra.mxu0 %v2241
    %3068 = vmatprep.subr.mxu0 %v2246
    %3069 = vmatpush1.msra.mxu0 %v2245
    %3070 = vmatprep.mubr.f32.mxu0 %v2932
    %3071 = vmatmul.mubr.f32.gmra.mrb[0].mxu0 %v2930
    %v3072 = vpop.f32.mrb[0].mxu0
    %v3073 = vadd.f32 0.0, %v3072
    %v3074 = vpop.f32.mrb[0].mxu0
    %v3075 = vadd.f32 0.0, %v3074
    %3076 = vdwg.mxu0
    %v3077 = vadd.f32 %v2044, %v3002
    %v3078 = vadd.f32 %v2046, %v3004
    %v3079 = vadd.f32 %v2115, %v3073
    %v3080 = vadd.f32 %v2117, %v3075
    %v3081 = vxor.u32 %v3077, 2147483648
    %v3082 = vxor.u32 %v3078, 2147483648
    %v3083 = vxor.u32 %v3079, 2147483648
    %v3084 = vmul.f32 %v3081, 1.442695
    %v3085 = vpow.pop %v3084
    %v3086 = vmul.f32 %v3082, 1.442695
    %v3087 = vpow.pop %v3086
    %v3088 = vmul.f32 %v3083, 1.442695
    %v3089 = vpow.pop %v3088
    %v3090 = vadd.f32 %v3085, 1.0
    %v3091 = vadd.f32 %v3087, 1.0
    %v3092 = vadd.f32 %v3089, 1.0
    %v3093 = vrcp.pop %v3090
    %v3094 = vmul.f32 1.0, %v3093
    %v3095 = vrcp.pop %v3091
    %v3096 = vmul.f32 1.0, %v3095
    %v3097 = vrcp.pop %v3092
    %v3098 = vmul.f32 1.0, %v3097
    %v3099 = vtanh.pop %v3080
    %v3100 = vmul.f32 %v3096, %v2930
    %v3101 = vmul.f32 %v3094, %v3099
    %v3102 = vadd.f32 %v3100, %v3101
    %v3103 = vtanh.pop %v3102
    %v3104 = vmul.f32 %v3098, %v3103
    %s3105 = scalar_lea.vmem %s11, 6
    %3106 = vst [vmem:[%s3105] sm:$0x3] %v3102
    %3107 = vmatprep.subr.mxu0 %v2120
    %3108 = vmatpush1.msra.mxu0 %v2119
    %3109 = vmatprep.subr.mxu0 %v2124
    %3110 = vmatpush1.msra.mxu0 %v2123
    %3111 = vmatprep.subr.mxu0 %v2128
    %3112 = vmatpush1.msra.mxu0 %v2127
    %3113 = vmatprep.subr.mxu0 %v2132
    %3114 = vmatpush1.msra.mxu0 %v2131
    %3115 = vmatprep.subr.mxu0 %v2136
    %3116 = vmatpush1.msra.mxu0 %v2135
    %3117 = vmatprep.subr.mxu0 %v2140
    %3118 = vmatpush1.msra.mxu0 %v2139
    %3119 = vmatprep.subr.mxu0 %v2144
    %3120 = vmatpush1.msra.mxu0 %v2143
    %3121 = vmatprep.subr.mxu0 %v2148
    %3122 = vmatpush1.msra.mxu0 %v2147
    %3123 = vmatprep.subr.mxu0 %v2152
    %3124 = vmatpush1.msra.mxu0 %v2151
    %3125 = vmatprep.subr.mxu0 %v2156
    %3126 = vmatpush1.msra.mxu0 %v2155
    %3127 = vmatprep.subr.mxu0 %v2160
    %3128 = vmatpush1.msra.mxu0 %v2159
    %3129 = vmatprep.subr.mxu0 %v2164
    %3130 = vmatpush1.msra.mxu0 %v2163
    %3131 = vmatprep.subr.mxu0 %v2168
    %3132 = vmatpush1.msra.mxu0 %v2167
    %3133 = vmatprep.subr.mxu0 %v2172
    %3134 = vmatpush1.msra.mxu0 %v2171
    %3135 = vmatprep.subr.mxu0 %v2176
    %3136 = vmatpush1.msra.mxu0 %v2175
    %3137 = vmatprep.subr.mxu0 %v2180
    %3138 = vmatpush1.msra.mxu0 %v2179
    %3139 = vmatprep.subr.mxu0 %v2184
    %3140 = vmatpush1.msra.mxu0 %v2183
    %3141 = vmatprep.subr.mxu0 %v2188
    %3142 = vmatpush1.msra.mxu0 %v2187
    %3143 = vmatprep.subr.mxu0 %v2192
    %3144 = vmatpush1.msra.mxu0 %v2191
    %3145 = vmatprep.subr.mxu0 %v2196
    %3146 = vmatpush1.msra.mxu0 %v2195
    %3147 = vmatprep.subr.mxu0 %v2200
    %3148 = vmatpush1.msra.mxu0 %v2199
    %3149 = vmatprep.subr.mxu0 %v2204
    %3150 = vmatpush1.msra.mxu0 %v2203
    %3151 = vmatprep.subr.mxu0 %v2208
    %3152 = vmatpush1.msra.mxu0 %v2207
    %3153 = vmatprep.subr.mxu0 %v2212
    %3154 = vmatpush1.msra.mxu0 %v2211
    %3155 = vmatprep.subr.mxu0 %v2216
    %3156 = vmatpush1.msra.mxu0 %v2215
    %3157 = vmatprep.subr.mxu0 %v2220
    %3158 = vmatpush1.msra.mxu0 %v2219
    %3159 = vmatprep.subr.mxu0 %v2224
    %3160 = vmatpush1.msra.mxu0 %v2223
    %3161 = vmatprep.subr.mxu0 %v2228
    %3162 = vmatpush1.msra.mxu0 %v2227
    %3163 = vmatprep.subr.mxu0 %v2232
    %3164 = vmatpush1.msra.mxu0 %v2231
    %3165 = vmatprep.subr.mxu0 %v2236
    %3166 = vmatpush1.msra.mxu0 %v2235
    %3167 = vmatprep.subr.mxu0 %v2240
    %3168 = vmatpush1.msra.mxu0 %v2239
    %3169 = vmatprep.subr.mxu0 %v2244
    %3170 = vmatpush1.msra.mxu0 %v2243
    %3171 = vmatprep.mubr.f32.mxu0 %v3104
    %3172 = vmatmul.mubr.f32.gmra.mrb[0].mxu0 %v3102
    %v3173 = vpop.f32.mrb[0].mxu0
    %v3174 = vadd.f32 0.0, %v3173
    %v3175 = vpop.f32.mrb[0].mxu0
    %v3176 = vadd.f32 0.0, %v3175
    %3177 = vdwg.mxu0
    %3178 = vmatprep.subr.mxu0 %v2122
    %3179 = vmatpush1.msra.mxu0 %v2121
    %3180 = vmatprep.subr.mxu0 %v2126
    %3181 = vmatpush1.msra.mxu0 %v2125
    %3182 = vmatprep.subr.mxu0 %v2130
    %3183 = vmatpush1.msra.mxu0 %v2129
    %3184 = vmatprep.subr.mxu0 %v2134
    %3185 = vmatpush1.msra.mxu0 %v2133
    %3186 = vmatprep.subr.mxu0 %v2138
    %3187 = vmatpush1.msra.mxu0 %v2137
    %3188 = vmatprep.subr.mxu0 %v2142
    %3189 = vmatpush1.msra.mxu0 %v2141
    %3190 = vmatprep.subr.mxu0 %v2146
    %3191 = vmatpush1.msra.mxu0 %v2145
    %3192 = vmatprep.subr.mxu0 %v2150
    %3193 = vmatpush1.msra.mxu0 %v2149
    %3194 = vmatprep.subr.mxu0 %v2154
    %3195 = vmatpush1.msra.mxu0 %v2153
    %3196 = vmatprep.subr.mxu0 %v2158
    %3197 = vmatpush1.msra.mxu0 %v2157
    %3198 = vmatprep.subr.mxu0 %v2162
    %3199 = vmatpush1.msra.mxu0 %v2161
    %3200 = vmatprep.subr.mxu0 %v2166
    %3201 = vmatpush1.msra.mxu0 %v2165
    %3202 = vmatprep.subr.mxu0 %v2170
    %3203 = vmatpush1.msra.mxu0 %v2169
    %3204 = vmatprep.subr.mxu0 %v2174
    %3205 = vmatpush1.msra.mxu0 %v2173
    %3206 = vmatprep.subr.mxu0 %v2178
    %3207 = vmatpush1.msra.mxu0 %v2177
    %3208 = vmatprep.subr.mxu0 %v2182
    %3209 = vmatpush1.msra.mxu0 %v2181
    %3210 = vmatprep.subr.mxu0 %v2186
    %3211 = vmatpush1.msra.mxu0 %v2185
    %3212 = vmatprep.subr.mxu0 %v2190
    %3213 = vmatpush1.msra.mxu0 %v2189
    %3214 = vmatprep.subr.mxu0 %v2194
    %3215 = vmatpush1.msra.mxu0 %v2193
    %3216 = vmatprep.subr.mxu0 %v2198
    %3217 = vmatpush1.msra.mxu0 %v2197
    %3218 = vmatprep.subr.mxu0 %v2202
    %3219 = vmatpush1.msra.mxu0 %v2201
    %3220 = vmatprep.subr.mxu0 %v2206
    %3221 = vmatpush1.msra.mxu0 %v2205
    %3222 = vmatprep.subr.mxu0 %v2210
    %3223 = vmatpush1.msra.mxu0 %v2209
    %3224 = vmatprep.subr.mxu0 %v2214
    %3225 = vmatpush1.msra.mxu0 %v2213
    %3226 = vmatprep.subr.mxu0 %v2218
    %3227 = vmatpush1.msra.mxu0 %v2217
    %3228 = vmatprep.subr.mxu0 %v2222
    %3229 = vmatpush1.msra.mxu0 %v2221
    %3230 = vmatprep.subr.mxu0 %v2226
    %3231 = vmatpush1.msra.mxu0 %v2225
    %3232 = vmatprep.subr.mxu0 %v2230
    %3233 = vmatpush1.msra.mxu0 %v2229
    %3234 = vmatprep.subr.mxu0 %v2234
    %3235 = vmatpush1.msra.mxu0 %v2233
    %3236 = vmatprep.subr.mxu0 %v2238
    %3237 = vmatpush1.msra.mxu0 %v2237
    %3238 = vmatprep.subr.mxu0 %v2242
    %3239 = vmatpush1.msra.mxu0 %v2241
    %3240 = vmatprep.subr.mxu0 %v2246
    %3241 = vmatpush1.msra.mxu0 %v2245
    %3242 = vmatprep.mubr.f32.mxu0 %v3104
    %3243 = vmatmul.mubr.f32.gmra.mrb[0].mxu0 %v3102
    %v3244 = vpop.f32.mrb[0].mxu0
    %v3245 = vadd.f32 0.0, %v3244
    %v3246 = vpop.f32.mrb[0].mxu0
    %v3247 = vadd.f32 0.0, %v3246
    %3248 = vdwg.mxu0
    %v3249 = vadd.f32 %v2044, %v3174
    %v3250 = vadd.f32 %v2046, %v3176
    %v3251 = vadd.f32 %v2115, %v3245
    %v3252 = vadd.f32 %v2117, %v3247
    %v3253 = vxor.u32 %v3249, 2147483648
    %v3254 = vxor.u32 %v3250, 2147483648
    %v3255 = vxor.u32 %v3251, 2147483648
    %v3256 = vmul.f32 %v3253, 1.442695
    %v3257 = vpow.pop %v3256
    %v3258 = vmul.f32 %v3254, 1.442695
    %v3259 = vpow.pop %v3258
    %v3260 = vmul.f32 %v3255, 1.442695
    %v3261 = vpow.pop %v3260
    %v3262 = vadd.f32 %v3257, 1.0
    %v3263 = vadd.f32 %v3259, 1.0
    %v3264 = vadd.f32 %v3261, 1.0
    %v3265 = vrcp.pop %v3262
    %v3266 = vmul.f32 1.0, %v3265
    %v3267 = vrcp.pop %v3263
    %v3268 = vmul.f32 1.0, %v3267
    %v3269 = vrcp.pop %v3264
    %v3270 = vmul.f32 1.0, %v3269
    %v3271 = vtanh.pop %v3252
    %v3272 = vmul.f32 %v3268, %v3102
    %v3273 = vmul.f32 %v3266, %v3271
    %v3274 = vadd.f32 %v3272, %v3273
    %v3275 = vtanh.pop %v3274
    %v3276 = vmul.f32 %v3270, %v3275
    %s3277 = scalar_lea.vmem %s11, 4
    %3278 = vst [vmem:[%s3277] sm:$0x3] %v3274
    %3279 = vmatprep.subr.mxu0 %v2120
    %3280 = vmatpush1.msra.mxu0 %v2119
    %3281 = vmatprep.subr.mxu0 %v2124
    %3282 = vmatpush1.msra.mxu0 %v2123
    %3283 = vmatprep.subr.mxu0 %v2128
    %3284 = vmatpush1.msra.mxu0 %v2127
    %3285 = vmatprep.subr.mxu0 %v2132
    %3286 = vmatpush1.msra.mxu0 %v2131
    %3287 = vmatprep.subr.mxu0 %v2136
    %3288 = vmatpush1.msra.mxu0 %v2135
    %3289 = vmatprep.subr.mxu0 %v2140
    %3290 = vmatpush1.msra.mxu0 %v2139
    %3291 = vmatprep.subr.mxu0 %v2144
    %3292 = vmatpush1.msra.mxu0 %v2143
    %3293 = vmatprep.subr.mxu0 %v2148
    %3294 = vmatpush1.msra.mxu0 %v2147
    %3295 = vmatprep.subr.mxu0 %v2152
    %3296 = vmatpush1.msra.mxu0 %v2151
    %3297 = vmatprep.subr.mxu0 %v2156
    %3298 = vmatpush1.msra.mxu0 %v2155
    %3299 = vmatprep.subr.mxu0 %v2160
    %3300 = vmatpush1.msra.mxu0 %v2159
    %3301 = vmatprep.subr.mxu0 %v2164
    %3302 = vmatpush1.msra.mxu0 %v2163
    %3303 = vmatprep.subr.mxu0 %v2168
    %3304 = vmatpush1.msra.mxu0 %v2167
    %3305 = vmatprep.subr.mxu0 %v2172
    %3306 = vmatpush1.msra.mxu0 %v2171
    %3307 = vmatprep.subr.mxu0 %v2176
    %3308 = vmatpush1.msra.mxu0 %v2175
    %3309 = vmatprep.subr.mxu0 %v2180
    %3310 = vmatpush1.msra.mxu0 %v2179
    %3311 = vmatprep.subr.mxu0 %v2184
    %3312 = vmatpush1.msra.mxu0 %v2183
    %3313 = vmatprep.subr.mxu0 %v2188
    %3314 = vmatpush1.msra.mxu0 %v2187
    %3315 = vmatprep.subr.mxu0 %v2192
    %3316 = vmatpush1.msra.mxu0 %v2191
    %3317 = vmatprep.subr.mxu0 %v2196
    %3318 = vmatpush1.msra.mxu0 %v2195
    %3319 = vmatprep.subr.mxu0 %v2200
    %3320 = vmatpush1.msra.mxu0 %v2199
    %3321 = vmatprep.subr.mxu0 %v2204
    %3322 = vmatpush1.msra.mxu0 %v2203
    %3323 = vmatprep.subr.mxu0 %v2208
    %3324 = vmatpush1.msra.mxu0 %v2207
    %3325 = vmatprep.subr.mxu0 %v2212
    %3326 = vmatpush1.msra.mxu0 %v2211
    %3327 = vmatprep.subr.mxu0 %v2216
    %3328 = vmatpush1.msra.mxu0 %v2215
    %3329 = vmatprep.subr.mxu0 %v2220
    %3330 = vmatpush1.msra.mxu0 %v2219
    %3331 = vmatprep.subr.mxu0 %v2224
    %3332 = vmatpush1.msra.mxu0 %v2223
    %3333 = vmatprep.subr.mxu0 %v2228
    %3334 = vmatpush1.msra.mxu0 %v2227
    %3335 = vmatprep.subr.mxu0 %v2232
    %3336 = vmatpush1.msra.mxu0 %v2231
    %3337 = vmatprep.subr.mxu0 %v2236
    %3338 = vmatpush1.msra.mxu0 %v2235
    %3339 = vmatprep.subr.mxu0 %v2240
    %3340 = vmatpush1.msra.mxu0 %v2239
    %3341 = vmatprep.subr.mxu0 %v2244
    %3342 = vmatpush1.msra.mxu0 %v2243
    %3343 = vmatprep.mubr.f32.mxu0 %v3276
    %3344 = vmatmul.mubr.f32.gmra.mrb[0].mxu0 %v3274
    %v3345 = vpop.f32.mrb[0].mxu0
    %v3346 = vadd.f32 0.0, %v3345
    %v3347 = vpop.f32.mrb[0].mxu0
    %v3348 = vadd.f32 0.0, %v3347
    %3349 = vdwg.mxu0
    %3350 = vmatprep.subr.mxu0 %v2122
    %3351 = vmatpush1.msra.mxu0 %v2121
    %3352 = vmatprep.subr.mxu0 %v2126
    %3353 = vmatpush1.msra.mxu0 %v2125
    %3354 = vmatprep.subr.mxu0 %v2130
    %3355 = vmatpush1.msra.mxu0 %v2129
    %3356 = vmatprep.subr.mxu0 %v2134
    %3357 = vmatpush1.msra.mxu0 %v2133
    %3358 = vmatprep.subr.mxu0 %v2138
    %3359 = vmatpush1.msra.mxu0 %v2137
    %3360 = vmatprep.subr.mxu0 %v2142
    %3361 = vmatpush1.msra.mxu0 %v2141
    %3362 = vmatprep.subr.mxu0 %v2146
    %3363 = vmatpush1.msra.mxu0 %v2145
    %3364 = vmatprep.subr.mxu0 %v2150
    %3365 = vmatpush1.msra.mxu0 %v2149
    %3366 = vmatprep.subr.mxu0 %v2154
    %3367 = vmatpush1.msra.mxu0 %v2153
    %3368 = vmatprep.subr.mxu0 %v2158
    %3369 = vmatpush1.msra.mxu0 %v2157
    %3370 = vmatprep.subr.mxu0 %v2162
    %3371 = vmatpush1.msra.mxu0 %v2161
    %3372 = vmatprep.subr.mxu0 %v2166
    %3373 = vmatpush1.msra.mxu0 %v2165
    %3374 = vmatprep.subr.mxu0 %v2170
    %3375 = vmatpush1.msra.mxu0 %v2169
    %3376 = vmatprep.subr.mxu0 %v2174
    %3377 = vmatpush1.msra.mxu0 %v2173
    %3378 = vmatprep.subr.mxu0 %v2178
    %3379 = vmatpush1.msra.mxu0 %v2177
    %3380 = vmatprep.subr.mxu0 %v2182
    %3381 = vmatpush1.msra.mxu0 %v2181
    %3382 = vmatprep.subr.mxu0 %v2186
    %3383 = vmatpush1.msra.mxu0 %v2185
    %3384 = vmatprep.subr.mxu0 %v2190
    %3385 = vmatpush1.msra.mxu0 %v2189
    %3386 = vmatprep.subr.mxu0 %v2194
    %3387 = vmatpush1.msra.mxu0 %v2193
    %3388 = vmatprep.subr.mxu0 %v2198
    %3389 = vmatpush1.msra.mxu0 %v2197
    %3390 = vmatprep.subr.mxu0 %v2202
    %3391 = vmatpush1.msra.mxu0 %v2201
    %3392 = vmatprep.subr.mxu0 %v2206
    %3393 = vmatpush1.msra.mxu0 %v2205
    %3394 = vmatprep.subr.mxu0 %v2210
    %3395 = vmatpush1.msra.mxu0 %v2209
    %3396 = vmatprep.subr.mxu0 %v2214
    %3397 = vmatpush1.msra.mxu0 %v2213
    %3398 = vmatprep.subr.mxu0 %v2218
    %3399 = vmatpush1.msra.mxu0 %v2217
    %3400 = vmatprep.subr.mxu0 %v2222
    %3401 = vmatpush1.msra.mxu0 %v2221
    %3402 = vmatprep.subr.mxu0 %v2226
    %3403 = vmatpush1.msra.mxu0 %v2225
    %3404 = vmatprep.subr.mxu0 %v2230
    %3405 = vmatpush1.msra.mxu0 %v2229
    %3406 = vmatprep.subr.mxu0 %v2234
    %3407 = vmatpush1.msra.mxu0 %v2233
    %3408 = vmatprep.subr.mxu0 %v2238
    %3409 = vmatpush1.msra.mxu0 %v2237
    %3410 = vmatprep.subr.mxu0 %v2242
    %3411 = vmatpush1.msra.mxu0 %v2241
    %3412 = vmatprep.subr.mxu0 %v2246
    %3413 = vmatpush1.msra.mxu0 %v2245
    %3414 = vmatprep.mubr.f32.mxu0 %v3276
    %3415 = vmatmul.mubr.f32.gmra.mrb[0].mxu0 %v3274
    %v3416 = vpop.f32.mrb[0].mxu0
    %v3417 = vadd.f32 0.0, %v3416
    %v3418 = vpop.f32.mrb[0].mxu0
    %v3419 = vadd.f32 0.0, %v3418
    %3420 = vdwg.mxu0
    %v3421 = vadd.f32 %v2044, %v3346
    %v3422 = vadd.f32 %v2046, %v3348
    %v3423 = vadd.f32 %v2115, %v3417
    %v3424 = vadd.f32 %v2117, %v3419
    %v3425 = vxor.u32 %v3421, 2147483648
    %v3426 = vxor.u32 %v3422, 2147483648
    %v3427 = vxor.u32 %v3423, 2147483648
    %v3428 = vmul.f32 %v3425, 1.442695
    %v3429 = vpow.pop %v3428
    %v3430 = vmul.f32 %v3426, 1.442695
    %v3431 = vpow.pop %v3430
    %v3432 = vmul.f32 %v3427, 1.442695
    %v3433 = vpow.pop %v3432
    %v3434 = vadd.f32 %v3429, 1.0
    %v3435 = vadd.f32 %v3431, 1.0
    %v3436 = vadd.f32 %v3433, 1.0
    %v3437 = vrcp.pop %v3434
    %v3438 = vmul.f32 1.0, %v3437
    %v3439 = vrcp.pop %v3435
    %v3440 = vmul.f32 1.0, %v3439
    %v3441 = vrcp.pop %v3436
    %v3442 = vmul.f32 1.0, %v3441
    %v3443 = vtanh.pop %v3424
    %v3444 = vmul.f32 %v3440, %v3274
    %v3445 = vmul.f32 %v3438, %v3443
    %v3446 = vadd.f32 %v3444, %v3445
    %v3447 = vtanh.pop %v3446
    %v3448 = vmul.f32 %v3442, %v3447
    %s3449 = scalar_lea.vmem %s11, 2
    %3450 = vst [vmem:[%s3449] sm:$0x3] %v3446
    %3451 = vmatprep.subr.mxu0 %v2120
    %3452 = vmatpush1.msra.mxu0 %v2119
    %3453 = vmatprep.subr.mxu0 %v2124
    %3454 = vmatpush1.msra.mxu0 %v2123
    %3455 = vmatprep.subr.mxu0 %v2128
    %3456 = vmatpush1.msra.mxu0 %v2127
    %3457 = vmatprep.subr.mxu0 %v2132
    %3458 = vmatpush1.msra.mxu0 %v2131
    %3459 = vmatprep.subr.mxu0 %v2136
    %3460 = vmatpush1.msra.mxu0 %v2135
    %3461 = vmatprep.subr.mxu0 %v2140
    %3462 = vmatpush1.msra.mxu0 %v2139
    %3463 = vmatprep.subr.mxu0 %v2144
    %3464 = vmatpush1.msra.mxu0 %v2143
    %3465 = vmatprep.subr.mxu0 %v2148
    %3466 = vmatpush1.msra.mxu0 %v2147
    %3467 = vmatprep.subr.mxu0 %v2152
    %3468 = vmatpush1.msra.mxu0 %v2151
    %3469 = vmatprep.subr.mxu0 %v2156
    %3470 = vmatpush1.msra.mxu0 %v2155
    %3471 = vmatprep.subr.mxu0 %v2160
    %3472 = vmatpush1.msra.mxu0 %v2159
    %3473 = vmatprep.subr.mxu0 %v2164
    %3474 = vmatpush1.msra.mxu0 %v2163
    %3475 = vmatprep.subr.mxu0 %v2168
    %3476 = vmatpush1.msra.mxu0 %v2167
    %3477 = vmatprep.subr.mxu0 %v2172
    %3478 = vmatpush1.msra.mxu0 %v2171
    %3479 = vmatprep.subr.mxu0 %v2176
    %3480 = vmatpush1.msra.mxu0 %v2175
    %3481 = vmatprep.subr.mxu0 %v2180
    %3482 = vmatpush1.msra.mxu0 %v2179
    %3483 = vmatprep.subr.mxu0 %v2184
    %3484 = vmatpush1.msra.mxu0 %v2183
    %3485 = vmatprep.subr.mxu0 %v2188
    %3486 = vmatpush1.msra.mxu0 %v2187
    %3487 = vmatprep.subr.mxu0 %v2192
    %3488 = vmatpush1.msra.mxu0 %v2191
    %3489 = vmatprep.subr.mxu0 %v2196
    %3490 = vmatpush1.msra.mxu0 %v2195
    %3491 = vmatprep.subr.mxu0 %v2200
    %3492 = vmatpush1.msra.mxu0 %v2199
    %3493 = vmatprep.subr.mxu0 %v2204
    %3494 = vmatpush1.msra.mxu0 %v2203
    %3495 = vmatprep.subr.mxu0 %v2208
    %3496 = vmatpush1.msra.mxu0 %v2207
    %3497 = vmatprep.subr.mxu0 %v2212
    %3498 = vmatpush1.msra.mxu0 %v2211
    %3499 = vmatprep.subr.mxu0 %v2216
    %3500 = vmatpush1.msra.mxu0 %v2215
    %3501 = vmatprep.subr.mxu0 %v2220
    %3502 = vmatpush1.msra.mxu0 %v2219
    %3503 = vmatprep.subr.mxu0 %v2224
    %3504 = vmatpush1.msra.mxu0 %v2223
    %3505 = vmatprep.subr.mxu0 %v2228
    %3506 = vmatpush1.msra.mxu0 %v2227
    %3507 = vmatprep.subr.mxu0 %v2232
    %3508 = vmatpush1.msra.mxu0 %v2231
    %3509 = vmatprep.subr.mxu0 %v2236
    %3510 = vmatpush1.msra.mxu0 %v2235
    %3511 = vmatprep.subr.mxu0 %v2240
    %3512 = vmatpush1.msra.mxu0 %v2239
    %3513 = vmatprep.subr.mxu0 %v2244
    %3514 = vmatpush1.msra.mxu0 %v2243
    %3515 = vmatprep.mubr.f32.mxu0 %v3448
    %3516 = vmatmul.mubr.f32.gmra.mrb[0].mxu0 %v3446
    %v3517 = vpop.f32.mrb[0].mxu0
    %v3518 = vadd.f32 0.0, %v3517
    %v3519 = vpop.f32.mrb[0].mxu0
    %v3520 = vadd.f32 0.0, %v3519
    %3521 = vdwg.mxu0
    %3522 = vmatprep.subr.mxu0 %v2122
    %3523 = vmatpush1.msra.mxu0 %v2121
    %3524 = vmatprep.subr.mxu0 %v2126
    %3525 = vmatpush1.msra.mxu0 %v2125
    %3526 = vmatprep.subr.mxu0 %v2130
    %3527 = vmatpush1.msra.mxu0 %v2129
    %3528 = vmatprep.subr.mxu0 %v2134
    %3529 = vmatpush1.msra.mxu0 %v2133
    %3530 = vmatprep.subr.mxu0 %v2138
    %3531 = vmatpush1.msra.mxu0 %v2137
    %3532 = vmatprep.subr.mxu0 %v2142
    %3533 = vmatpush1.msra.mxu0 %v2141
    %3534 = vmatprep.subr.mxu0 %v2146
    %3535 = vmatpush1.msra.mxu0 %v2145
    %3536 = vmatprep.subr.mxu0 %v2150
    %3537 = vmatpush1.msra.mxu0 %v2149
    %3538 = vmatprep.subr.mxu0 %v2154
    %3539 = vmatpush1.msra.mxu0 %v2153
    %3540 = vmatprep.subr.mxu0 %v2158
    %3541 = vmatpush1.msra.mxu0 %v2157
    %3542 = vmatprep.subr.mxu0 %v2162
    %3543 = vmatpush1.msra.mxu0 %v2161
    %3544 = vmatprep.subr.mxu0 %v2166
    %3545 = vmatpush1.msra.mxu0 %v2165
    %3546 = vmatprep.subr.mxu0 %v2170
    %3547 = vmatpush1.msra.mxu0 %v2169
    %3548 = vmatprep.subr.mxu0 %v2174
    %3549 = vmatpush1.msra.mxu0 %v2173
    %3550 = vmatprep.subr.mxu0 %v2178
    %3551 = vmatpush1.msra.mxu0 %v2177
    %3552 = vmatprep.subr.mxu0 %v2182
    %3553 = vmatpush1.msra.mxu0 %v2181
    %3554 = vmatprep.subr.mxu0 %v2186
    %3555 = vmatpush1.msra.mxu0 %v2185
    %3556 = vmatprep.subr.mxu0 %v2190
    %3557 = vmatpush1.msra.mxu0 %v2189
    %3558 = vmatprep.subr.mxu0 %v2194
    %3559 = vmatpush1.msra.mxu0 %v2193
    %3560 = vmatprep.subr.mxu0 %v2198
    %3561 = vmatpush1.msra.mxu0 %v2197
    %3562 = vmatprep.subr.mxu0 %v2202
    %3563 = vmatpush1.msra.mxu0 %v2201
    %3564 = vmatprep.subr.mxu0 %v2206
    %3565 = vmatpush1.msra.mxu0 %v2205
    %3566 = vmatprep.subr.mxu0 %v2210
    %3567 = vmatpush1.msra.mxu0 %v2209
    %3568 = vmatprep.subr.mxu0 %v2214
    %3569 = vmatpush1.msra.mxu0 %v2213
    %3570 = vmatprep.subr.mxu0 %v2218
    %3571 = vmatpush1.msra.mxu0 %v2217
    %3572 = vmatprep.subr.mxu0 %v2222
    %3573 = vmatpush1.msra.mxu0 %v2221
    %3574 = vmatprep.subr.mxu0 %v2226
    %3575 = vmatpush1.msra.mxu0 %v2225
    %3576 = vmatprep.subr.mxu0 %v2230
    %3577 = vmatpush1.msra.mxu0 %v2229
    %3578 = vmatprep.subr.mxu0 %v2234
    %3579 = vmatpush1.msra.mxu0 %v2233
    %3580 = vmatprep.subr.mxu0 %v2238
    %3581 = vmatpush1.msra.mxu0 %v2237
    %3582 = vmatprep.subr.mxu0 %v2242
    %3583 = vmatpush1.msra.mxu0 %v2241
    %3584 = vmatprep.subr.mxu0 %v2246
    %3585 = vmatpush1.msra.mxu0 %v2245
    %3586 = vmatprep.mubr.f32.mxu0 %v3448
    %3587 = vmatmul.mubr.f32.gmra.mrb[0].mxu0 %v3446
    %v3588 = vpop.f32.mrb[0].mxu0
    %v3589 = vpop.f32.mrb[0].mxu0
    %v3590 = vadd.f32 0.0, %v3589
    %3591 = vdwg.mxu0
    %v3592 = vadd.f32 %v2044, %v3518
    %v3593 = vadd.f32 %v2046, %v3520
    %v3594 = vadd.f32 %v2117, %v3590
    %v3595 = vxor.u32 %v3592, 2147483648
    %v3596 = vxor.u32 %v3593, 2147483648
    %v3597 = vmul.f32 %v3595, 1.442695
    %v3598 = vpow.pop %v3597
    %v3599 = vmul.f32 %v3596, 1.442695
    %v3600 = vpow.pop %v3599
    %v3601 = vadd.f32 %v3598, 1.0
    %v3602 = vadd.f32 %v3600, 1.0
    %v3603 = vrcp.pop %v3601
    %v3604 = vmul.f32 1.0, %v3603
    %v3605 = vrcp.pop %v3602
    %v3606 = vmul.f32 1.0, %v3605
    %v3607 = vtanh.pop %v3594
    %v3608 = vmul.f32 %v3606, %v3446
    %v3609 = vmul.f32 %v3604, %v3607
    %v3610 = vadd.f32 %v3608, %v3609
    %3611 = vst [vmem:[%s11] sm:$0x3] %v3610
    // Predicated region
    $region46: #{lstm_autoencoder_forward.1} parent=1 // pred_check
      _
    $region47: #{lstm_autoencoder_forward.1} parent=1 // pred_check_branch
      %3613 = sbr.rel (0) target = $region49
    $region48: #{lstm_autoencoder_forward.1} parent=1 // pred_region
      _
    $region49: #{lstm_autoencoder_forward.1} parent=1 // pred_fallthru
      _
    // Predicated region
    $region50: #{lstm_autoencoder_forward.1} parent=1 // pred_check
      _
    $region51: #{lstm_autoencoder_forward.1} parent=1 // pred_check_branch
      %3615 = sbr.rel (0) target = $region53
    $region52: #{lstm_autoencoder_forward.1} parent=1 // pred_region
      %s3617 = ssub.s32 32, 32
      %3618 = vsyncadd [#allocation3], %s3617
      %s3620 = sshll.u32 [#allocation2], 4
      %s3621 = int_to_ptr.vmem [resolvable:$true] %s3620
      %3623 = dma.vmem_to_hbm [thread:$0]  %s3621, 32, %s12, [#allocation3]
    $region53: #{lstm_autoencoder_forward.1} parent=1 // pred_fallthru
      _
    // Predicated region
    $region54: #{lstm_autoencoder_forward.1} parent=1 // pred_check
      _
    $region55: #{lstm_autoencoder_forward.1} parent=1 // pred_check_branch
      %3625 = sbr.rel (0) target = $region57
    $region56: #{lstm_autoencoder_forward.1} parent=1 // pred_region
      _
    $region57: #{lstm_autoencoder_forward.1} parent=1 // pred_fallthru
      _
    // Predicated region
    $region58: #{lstm_autoencoder_forward.1} parent=1 // pred_check
      _
    $region59: #{lstm_autoencoder_forward.1} parent=1 // pred_check_branch
      %3627 = sbr.rel (0) target = $region61
    $region60: #{lstm_autoencoder_forward.1} parent=1 // pred_region
      %3628 = dma.done [#allocation3], 32
    $region61: #{lstm_autoencoder_forward.1} parent=1 // pred_fallthru
      _
    %3629 = vsyncpa [#allocation3], 1

</llo_original>
